<compile_context>
chip_gen: v7x
topology: tpu7x:2x2x1
jax: 0.10.0
libtpu: 0.0.40
codegen_flags: <defaults>
</compile_context>

<pallas_src>
import numpy as np

import jax
import jax.numpy as jnp
from jax import lax
from jax.experimental import pallas as pl
from jax.experimental.pallas import tpu as pltpu

# ------------------------- config (mirrors get_config()) -------------------------
NODE_IN_DIM, NODE_OUT_DIM = 3, 8
PLANE_IN_DIM, PLANE_OUT_DIM = 9, 32
CARGO_IN_DIM, CARGO_OUT_DIM = 11, 32

GAT_HIDDEN, GAT_LAYERS, EDGE_FEATS = 16, 3, 5
GAT_DIMS = [(NODE_IN_DIM, GAT_HIDDEN), (GAT_HIDDEN, GAT_HIDDEN), (GAT_HIDDEN, NODE_OUT_DIM)]

EMBED_DIM, NUM_HEADS, FF_DIM, MHA_LAYERS = 32, 4, 128, 2
HEAD_DIM = EMBED_DIM // NUM_HEADS
MHA_NAMES = ("mhap0", "mhap1", "mhac0", "mhac1")

NEG_SLOPE = 0.2
LN_EPS = 1e-5
_LANE = 128
_ROW_ALIGN = 16          # bf16 native sublane tile is (16, 128)


# ------------------------- parameter init (same shapes/layout as PyTorch) -------------------------
def init_params(key):
    """Random parameters with the same shapes as the PyTorch module
    (Linear weights stored (in, out) so the kernel does plain row-major x @ W)."""
    keys = iter(jax.random.split(key, 96))

    def u(shape, s=0.2):
        return jax.random.uniform(next(keys), shape, jnp.float32, -1.0, 1.0) * s

    params = {}
    for l, (din, dout) in enumerate(GAT_DIMS):
        params[f"gat{l}"] = dict(
            lin_w=u((din, dout), 0.4),
            att_src=u((dout,), 0.3),
            att_dst=u((dout,), 0.3),
            lin_edge_w=u((EDGE_FEATS, dout), 0.3),
            att_edge=u((dout,), 0.3),
            bias=u((dout,), 0.1),
            ln_g=1.0 + u((dout,), 0.1),
            ln_b=u((dout,), 0.1),
        )
    params["up_p_w"] = u((PLANE_IN_DIM, PLANE_OUT_DIM), 0.3)
    params["up_p_b"] = u((PLANE_OUT_DIM,), 0.1)
    params["up_c_w"] = u((CARGO_IN_DIM, CARGO_OUT_DIM), 0.3)
    params["up_c_b"] = u((CARGO_OUT_DIM,), 0.1)
    for nm in MHA_NAMES:
        params[nm] = dict(
            wq=u((EMBED_DIM, EMBED_DIM), 0.2),
            wk=u((EMBED_DIM, EMBED_DIM), 0.2),
            wv=u((EMBED_DIM, EMBED_DIM), 0.2),
            wo=u((EMBED_DIM, EMBED_DIM), 0.2),
            ff1_w=u((EMBED_DIM, FF_DIM), 0.15),
            ff1_b=u((FF_DIM,), 0.1),
            ff2_w=u((FF_DIM, EMBED_DIM), 0.15),
            ff2_b=u((EMBED_DIM,), 0.1),
            ln1_g=1.0 + u((EMBED_DIM,), 0.1),
            ln1_b=u((EMBED_DIM,), 0.1),
            ln2_g=1.0 + u((EMBED_DIM,), 0.1),
            ln2_b=u((EMBED_DIM,), 0.1),
        )
    return params


# ------------------------- packing (done ONCE at init time) -------------------------
class _VecPacker:
    """One 1-D parameter per row of a lane-padded (rows, 128) f32 slab (VPU math stays f32)."""

    def __init__(self):
        self._rows, self._off = [], {}

    def add(self, name, v):
        v = np.asarray(v, np.float32).reshape(-1)
        assert v.shape[0] <= _LANE
        row = np.zeros((_LANE,), np.float32)
        row[: v.shape[0]] = v
        self._off[name] = (len(self._rows), v.shape[0])
        self._rows.append(row)

    def finish(self):
        n = len(self._rows)
        npad = ((n + 7) // 8) * 8
        slab = np.zeros((npad, _LANE), np.float32)
        slab[:n] = np.stack(self._rows)
        return jnp.asarray(slab), self._off


def pack_params(params):
    """Pack all parameters into a lane-packed bf16 matrix slab + f32 vector slab.
    Folds the attention scale into Wq and the GAT edge-attention vector
    (lin_edge_w @ att_edge) at pack time."""
    w_entries, w_blocks = {}, []
    row = [0]

    def new_block(nrows):
        rp = -(-nrows // _ROW_ALIGN) * _ROW_ALIGN
        blk = np.zeros((rp, _LANE), np.float32)
        w_blocks.append(blk)
        r0 = row[0]
        row[0] += rp
        return blk, r0

    def place(blk, r0, name, w, c0):
        w = np.asarray(w, np.float32)
        blk[: w.shape[0], c0: c0 + w.shape[1]] = w
        w_entries[name] = (r0, c0, w.shape[0], w.shape[1])

    # 3 GAT linear matrices side by side in one 16-row block.
    blk, r0 = new_block(GAT_HIDDEN)
    c = 0
    for l, (_, dout) in enumerate(GAT_DIMS):
        place(blk, r0, f"gat{l}_lin", params[f"gat{l}"]["lin_w"], c)
        c += dout

    # Both up-projections side by side in one 16-row block.
    blk, r0 = new_block(max(PLANE_IN_DIM, CARGO_IN_DIM))
    place(blk, r0, "up_p", params["up_p_w"], 0)
    place(blk, r0, "up_c", params["up_c_w"], PLANE_OUT_DIM)

    scale = 1.0 / np.sqrt(HEAD_DIM)
    for nm in MHA_NAMES:
        m = params[nm]
        blk, r0 = new_block(EMBED_DIM)                          # wq|wk|wv|wo -> (32,128)
        place(blk, r0, nm + "_wq", np.asarray(m["wq"], np.float32) * scale, 0)
        place(blk, r0, nm + "_wk", m["wk"], EMBED_DIM)
        place(blk, r0, nm + "_wv", m["wv"], 2 * EMBED_DIM)
        place(blk, r0, nm + "_wo", m["wo"], 3 * EMBED_DIM)
        w_entries[nm + "_qkv"] = (r0, 0, EMBED_DIM, 3 * EMBED_DIM)   # fused Q|K|V view
        blk, r0 = new_block(EMBED_DIM)                          # ff1 (32,128)
        place(blk, r0, nm + "_ff1", m["ff1_w"], 0)

    # the four (128,32) ff2 matrices share ONE (128,128) block.
    blk, r0 = new_block(FF_DIM)
    for i, nm in enumerate(MHA_NAMES):
        place(blk, r0, nm + "_ff2", params[nm]["ff2_w"], i * EMBED_DIM)

    w_slab = jnp.asarray(np.concatenate(w_blocks, axis=0)).astype(jnp.bfloat16)

    bp = _VecPacker()
    for l in range(GAT_LAYERS):
        g = params[f"gat{l}"]
        for nm in ("att_src", "att_dst", "bias", "ln_g", "ln_b"):
            bp.add(f"gat{l}_{nm}", g[nm])
    bp.add("up_p_b", params["up_p_b"])
    bp.add("up_c_b", params["up_c_b"])
    for nm in MHA_NAMES:
        m = params[nm]
        for p in ("ff1_b", "ff2_b", "ln1_g", "ln1_b", "ln2_g", "ln2_b"):
            bp.add(f"{nm}_{p}", m[p])
    b_slab, b_off = bp.finish()

    # per-layer folded edge-attention vectors; contracted against the dense edge maps in the wrapper.
    evec = np.stack([np.asarray(params[f"gat{l}"]["lin_edge_w"], np.float32)
                     @ np.asarray(params[f"gat{l}"]["att_edge"], np.float32)
                     for l in range(GAT_LAYERS)])               # (3, 5)
    return w_slab, b_slab, w_entries, b_off, jnp.asarray(evec)


# ------------------------- dense graph glue (plain JAX, per call) -------------------------
def _dense_graph(edge_index, edge_attr, n):
    """edge_index (2,E), edge_attr (E,5) -> dense edge-attr (n,n,5) [row i = target] and an
    additive adjacency mask (n,n). Self-loops are added with the GATConv 'mean' fill."""
    src, dst = edge_index[0], edge_index[1]
    dense = jnp.zeros((n, n, EDGE_FEATS), jnp.float32).at[dst, src].set(edge_attr)
    sums = jnp.zeros((n, EDGE_FEATS), jnp.float32).at[dst].add(edge_attr)
    cnt = jnp.zeros((n,), jnp.float32).at[dst].add(1.0)
    self_attr = sums / jnp.maximum(cnt, 1.0)[:, None]
    diag = jnp.arange(n)
    dense = dense.at[diag, diag].set(self_attr)
    adj = jnp.full((n, n), -1e9, jnp.float32).at[dst, src].set(0.0)
    adj = adj.at[diag, diag].set(0.0)
    return dense, adj


# ------------------------- the Pallas kernel -------------------------
def _make_kernel(w_off, b_off):
    f32, bf16 = jnp.float32, jnp.bfloat16

    def kernel(x_ref, ealpha_ref, planes_ref, cargo_ref, w_ref, b_ref,
               node_out_ref, pc_out_ref):

        def W(name):                                   # bf16 (rows, cols) view into weight slab
            r0, c0, nr, nc = w_off[name]
            return w_ref[pl.ds(r0, nr), pl.ds(c0, nc)]

        def V(name):                                   # f32 (1, d) view into vector slab
            r, d = b_off[name]
            return b_ref[pl.ds(r, 1), pl.ds(0, d)]

        bf = lambda t: t.astype(bf16)                  # MXU operands only; VPU/EUP math stays f32
        leaky = lambda t: jnp.where(t > 0, t, NEG_SLOPE * t)

        def rcp(t):
            # EUP approximate reciprocal + one Newton step -> ~f32 accuracy, no VALU divide.
            r = pl.reciprocal(t, approx=True)
            return r * (2.0 - t * r)

        def softmax(logits):
            m = jnp.max(logits, axis=-1, keepdims=True)
            e = jnp.exp(logits - m)
            return e * rcp(jnp.sum(e, axis=-1, keepdims=True))

        def layer_norm(t, gname, bname):
            mu = jnp.mean(t, axis=-1, keepdims=True)
            c = t - mu
            var = jnp.mean(c * c, axis=-1, keepdims=True)
            return c * lax.rsqrt(var + LN_EPS) * V(gname) + V(bname)

        # ---------------- GATBlock (dense-adjacency GATConv, heads=1) ----------------
        x = x_ref[...]                                              # (N, 3) f32
        for l in range(GAT_LAYERS):
            pre = f"gat{l}"
            xl = jnp.dot(bf(x), W(pre + "_lin"), preferred_element_type=f32)        # (N, C)
            a_dst = jnp.sum(xl * V(pre + "_att_dst"), axis=-1, keepdims=True)        # (N, 1)
            # (1,C) x (N,C) contracting last dims -> (1,N); no explicit transpose.
            a_src = lax.dot_general(bf(V(pre + "_att_src")), bf(xl),
                                    (((1,), (1,)), ((), ())),
                                    preferred_element_type=f32)                      # (1, N)
            # edge-alpha map (+ -1e9 mask folded in) was precomputed in the wrapper.
            logits = leaky(a_dst + a_src + ealpha_ref[l])
            attn = softmax(logits)                                                   # (N, N)
            x = jnp.dot(bf(attn), bf(xl), preferred_element_type=f32) + V(pre + "_bias")
            x = layer_norm(leaky(x), pre + "_ln_g", pre + "_ln_b")
        node_out_ref[...] = x.astype(node_out_ref.dtype)

        # ---------------- up-projections ----------------
        pe = jnp.dot(bf(planes_ref[...]), W("up_p"), preferred_element_type=f32) + V("up_p_b")
        ce = jnp.dot(bf(cargo_ref[...]), W("up_c"), preferred_element_type=f32) + V("up_c_b")

        # ---------------- MHA blocks (self-attention, 2 layers each) ----------------
        def mha_layer(v, pre):
            # single fused Q|K|V projection (scale folded into Wq at pack time): (M,32)@(32,96)
            qkv = jnp.dot(bf(v), W(pre + "_qkv"), preferred_element_type=f32)        # (M, 96)
            heads = []
            for h in range(NUM_HEADS):
                c0 = h * HEAD_DIM
                qh = qkv[:, c0: c0 + HEAD_DIM]
                kh = qkv[:, EMBED_DIM + c0: EMBED_DIM + c0 + HEAD_DIM]
                vh = qkv[:, 2 * EMBED_DIM + c0: 2 * EMBED_DIM + c0 + HEAD_DIM]
                sc = lax.dot_general(bf(qh), bf(kh), (((1,), (1,)), ((), ())),
                                     preferred_element_type=f32)                     # (M, M)
                heads.append(jnp.dot(bf(softmax(sc)), bf(vh), preferred_element_type=f32))
            # lane-concat the 4 (M,8) head outputs, one matmul against the full Wo.
            attn_out = jnp.dot(bf(jnp.concatenate(heads, axis=1)), W(pre + "_wo"),
                               preferred_element_type=f32)                           # (M, 32)
            v1 = layer_norm(attn_out + v, pre + "_ln1_g", pre + "_ln1_b")
            h1 = leaky(jnp.dot(bf(v1), W(pre + "_ff1"), preferred_element_type=f32)
                       + V(pre + "_ff1_b"))
            ff = jnp.dot(bf(h1), W(pre + "_ff2"), preferred_element_type=f32) + V(pre + "_ff2_b")
            return layer_norm(v1 + ff, pre + "_ln2_g", pre + "_ln2_b")

        for lyr in range(MHA_LAYERS):
            pe = mha_layer(pe, f"mhap{lyr}")
        for lyr in range(MHA_LAYERS):
            ce = mha_layer(ce, f"mhac{lyr}")

        # plane + cargo rows share one lane-dense output slab (2 output DMAs total).
        P = pe.shape[0]
        pc_out_ref[pl.ds(0, P), :] = pe.astype(pc_out_ref.dtype)
        pc_out_ref[pl.ds(P, ce.shape[0]), :] = ce.astype(pc_out_ref.dtype)

    return kernel


# ------------------------- wrapper -------------------------
def make_encoder(packed):
    w_slab, b_slab, w_off, b_off, evec = packed
    kernel = _make_kernel(w_off, b_off)
    vmem = pl.BlockSpec(memory_space=pltpu.MemorySpace.VMEM)

    @jax.jit
    def forward(x_nodes, edge_index, edge_attr, planes, cargo):
        n = x_nodes.shape[0]
        p = planes.shape[0]
        dense, adj = _dense_graph(edge_index, edge_attr, n)
        # per-layer edge-attention maps + adjacency mask, hoisted out of the kernel.
        # (masking before the LeakyReLU is numerically equivalent post-softmax.)
        ealpha = jnp.einsum("nmf,lf->lnm", dense, evec) + adj[None]    # (3, N, N)

        node_e, pc = pl.pallas_call(
            kernel,
            out_shape=(
                jax.ShapeDtypeStruct((n, NODE_OUT_DIM), jnp.float32),
                jax.ShapeDtypeStruct((p + cargo.shape[0], EMBED_DIM), jnp.float32),
            ),
            in_specs=[vmem] * 6,
            out_specs=(vmem, vmem),
        )(x_nodes, ealpha, planes, cargo, w_slab, b_slab)

        return {"cargo_embeddings": pc[p:],
                "plane_embeddings": pc[:p],
                "node_embeddings": node_e}

    return forward


# ------------------------- pure-JAX f32 reference (same math as PyTorch module) -------------------------
def encoder_ref(x_nodes, edge_index, edge_attr, planes, cargo, params):
    leaky = lambda t: jnp.where(t > 0, t, NEG_SLOPE * t)

    def ln(t, g, b):
        mu = jnp.mean(t, -1, keepdims=True)
        c = t - mu
        var = jnp.mean(c * c, -1, keepdims=True)
        return c / jnp.sqrt(var + LN_EPS) * g + b

    n = x_nodes.shape[0]
    eattr, adj = _dense_graph(edge_index, edge_attr, n)
    x = x_nodes
    for l in range(GAT_LAYERS):
        g = params[f"gat{l}"]
        xl = x @ g["lin_w"]
        a_dst = jnp.sum(xl * g["att_dst"], -1, keepdims=True)
        a_src = jnp.sum(xl * g["att_src"], -1)[None, :]
        e_alpha = eattr @ (g["lin_edge_w"] @ g["att_edge"])
        logits = leaky(a_dst + a_src + e_alpha) + adj
        attn = jax.nn.softmax(logits, axis=-1)
        x = ln(leaky(attn @ xl + g["bias"]), g["ln_g"], g["ln_b"])

    def mha_block(v, names):
        for nm in names:
            m = params[nm]
            q, k, vv = v @ m["wq"], v @ m["wk"], v @ m["wv"]
            heads = []
            for h in range(NUM_HEADS):
                s = slice(h * HEAD_DIM, (h + 1) * HEAD_DIM)
                sc = (q[:, s] * HEAD_DIM ** -0.5) @ k[:, s].T
                heads.append(jax.nn.softmax(sc, -1) @ vv[:, s])
            attn_out = jnp.concatenate(heads, 1) @ m["wo"]
            v1 = ln(attn_out + v, m["ln1_g"], m["ln1_b"])
            ff = leaky(v1 @ m["ff1_w"] + m["ff1_b"]) @ m["ff2_w"] + m["ff2_b"]
            v = ln(v1 + ff, m["ln2_g"], m["ln2_b"])
        return v

    pe = mha_block(planes @ params["up_p_w"] + params["up_p_b"], ["mhap0", "mhap1"])
    ce = mha_block(cargo @ params["up_c_w"] + params["up_c_b"], ["mhac0", "mhac1"])
    return {"cargo_embeddings": ce, "plane_embeddings": pe, "node_embeddings": x}


# ------------------------- test -------------------------
if __name__ == "__main__":
    key = jax.random.PRNGKey(0)
    kx, ke, kp_, kc, kpar = jax.random.split(key, 5)

    N_NODES, N_PLANES, N_CARGO, N_EDGES = 16, 8, 12, 40

    x_nodes = jax.random.normal(kx, (N_NODES, NODE_IN_DIM), jnp.float32)
    e = jnp.arange(N_EDGES, dtype=jnp.int32)
    src = (e % N_NODES).astype(jnp.int32)
    dst = ((src + 1 + (e * 7) % (N_NODES - 1)) % N_NODES).astype(jnp.int32)  # no self-loops
    edge_index = jnp.stack([src, dst])
    edge_attr = jax.random.normal(ke, (N_EDGES, EDGE_FEATS), jnp.float32)
    planes = jax.random.normal(kp_, (N_PLANES, PLANE_IN_DIM), jnp.float32)
    cargo = jax.random.normal(kc, (N_CARGO, CARGO_IN_DIM), jnp.float32)

    params = init_params(kpar)
    packed = pack_params(params)          # done once, hoisted out of the hot path
    encoder = make_encoder(packed)

    out = encoder(x_nodes, edge_index, edge_attr, planes, cargo)
    out = jax.block_until_ready(out)

    ref = encoder_ref(x_nodes, edge_index, edge_attr, planes, cargo, params)

    assert out["node_embeddings"].shape == (N_NODES, NODE_OUT_DIM)
    assert out["plane_embeddings"].shape == (N_PLANES, PLANE_OUT_DIM)
    assert out["cargo_embeddings"].shape == (N_CARGO, CARGO_OUT_DIM)
    # Kernel uses bf16 MXU operands (f32 accumulation) per the perf review; compare against
    # the full-f32 reference with tolerances sized for bf16 operand rounding.
    for name in ("node_embeddings", "plane_embeddings", "cargo_embeddings"):
        diff = out[name] - ref[name]
        max_err = float(jnp.max(jnp.abs(diff)))
        rel_err = float(jnp.linalg.norm(diff) / (jnp.linalg.norm(ref[name]) + 1e-9))
        assert max_err < 1e-1, (name, max_err)
        assert rel_err < 3e-2, (name, rel_err)

    print("KERNEL_OK")
</pallas_src>

<mosaic_0001>
module attributes {stable_mosaic.version = 11 : i64} {
  func.func @kernel(%arg0: memref<16x3xf32, #tpu.memory_space<vmem>>, %arg1: memref<3x16x16xf32, #tpu.memory_space<vmem>>, %arg2: memref<8x9xf32, #tpu.memory_space<vmem>>, %arg3: memref<12x11xf32, #tpu.memory_space<vmem>>, %arg4: memref<416x128xbf16, #tpu.memory_space<vmem>>, %arg5: memref<48x128xf32, #tpu.memory_space<vmem>>, %arg6: memref<16x8xf32, #tpu.memory_space<vmem>>, %arg7: memref<20x32xf32, #tpu.memory_space<vmem>>) attributes {dimension_semantics = [], scalar_prefetch = 0 : i64, scratch_operands = 0 : i64, tpu.core_type = #tpu.core_type<tc>} {
    %c0 = arith.constant 0 : index
    %c0_0 = arith.constant 0 : index
    %0 = vector.load %arg0[%c0, %c0_0] : memref<16x3xf32, #tpu.memory_space<vmem>>, vector<16x3xf32>
    %1 = arith.truncf %0 : vector<16x3xf32> to vector<16x3xbf16>
    %c0_1 = arith.constant 0 : index
    %c0_2 = arith.constant 0 : index
    %2 = vector.load %arg4[%c0_1, %c0_2] : memref<416x128xbf16, #tpu.memory_space<vmem>>, vector<3x16xbf16>
    %cst = arith.constant dense<0.000000e+00> : vector<16x16xf32>
    %3 = tpu.matmul %1, %2, %cst {dimension_numbers = #tpu.dot_dimension_numbers<[1], [0], [0], [1], [0, 0, 1, 1], [], []>} : vector<16x3xbf16>, vector<3x16xbf16>, vector<16x16xf32> -> vector<16x16xf32>
    %c1 = arith.constant 1 : index
    %c0_3 = arith.constant 0 : index
    %4 = vector.load %arg5[%c1, %c0_3] : memref<48x128xf32, #tpu.memory_space<vmem>>, vector<1x16xf32>
    %5 = vector.broadcast %4 : vector<1x16xf32> to vector<16x16xf32>
    %6 = arith.mulf %3, %5 : vector<16x16xf32>
    %cst_4 = arith.constant dense<0.000000e+00> : vector<16xf32>
    %7 = vector.multi_reduction <add>, %6, %cst_4 [1] : vector<16x16xf32> to vector<16xf32>
    %8 = vector.shape_cast %7 : vector<16xf32> to vector<16x1xf32>
    %c0_5 = arith.constant 0 : index
    %c0_6 = arith.constant 0 : index
    %9 = vector.load %arg5[%c0_5, %c0_6] : memref<48x128xf32, #tpu.memory_space<vmem>>, vector<1x16xf32>
    %10 = arith.truncf %9 : vector<1x16xf32> to vector<1x16xbf16>
    %11 = arith.truncf %3 : vector<16x16xf32> to vector<16x16xbf16>
    %cst_7 = arith.constant dense<0.000000e+00> : vector<1x16xf32>
    %12 = tpu.matmul %10, %11, %cst_7 {dimension_numbers = #tpu.dot_dimension_numbers<[1], [1], [0], [0], [0, 0, 1, 0], [], []>} : vector<1x16xbf16>, vector<16x16xbf16>, vector<1x16xf32> -> vector<1x16xf32>
    %13 = vector.broadcast %8 : vector<16x1xf32> to vector<16x16xf32>
    %14 = vector.broadcast %12 : vector<1x16xf32> to vector<16x16xf32>
    %15 = arith.addf %13, %14 : vector<16x16xf32>
    %c0_8 = arith.constant 0 : index
    %c0_9 = arith.constant 0 : index
    %c0_10 = arith.constant 0 : index
    %16 = vector.load %arg1[%c0_8, %c0_9, %c0_10] : memref<3x16x16xf32, #tpu.memory_space<vmem>>, vector<1x16x16xf32>
    %17 = vector.shape_cast %16 : vector<1x16x16xf32> to vector<16x16xf32>
    %18 = arith.addf %15, %17 : vector<16x16xf32>
    %cst_11 = arith.constant 0.000000e+00 : f32
    %19 = vector.broadcast %cst_11 : f32 to vector<16x16xf32>
    %20 = arith.cmpf ogt, %18, %19 : vector<16x16xf32>
    %cst_12 = arith.constant 2.000000e-01 : f32
    %21 = vector.broadcast %cst_12 : f32 to vector<16x16xf32>
    %22 = arith.mulf %21, %18 : vector<16x16xf32>
    %23 = arith.select %20, %18, %22 : vector<16x16xi1>, vector<16x16xf32>
    %cst_13 = arith.constant dense<0xFF800000> : vector<16xf32>
    %24 = vector.multi_reduction <maximumf>, %23, %cst_13 [1] : vector<16x16xf32> to vector<16xf32>
    %25 = vector.shape_cast %24 : vector<16xf32> to vector<16x1xf32>
    %26 = vector.broadcast %25 : vector<16x1xf32> to vector<16x16xf32>
    %27 = arith.subf %23, %26 : vector<16x16xf32>
    %28 = math.exp %27 : vector<16x16xf32>
    %cst_14 = arith.constant dense<0.000000e+00> : vector<16xf32>
    %29 = vector.multi_reduction <add>, %28, %cst_14 [1] : vector<16x16xf32> to vector<16xf32>
    %30 = vector.shape_cast %29 : vector<16xf32> to vector<16x1xf32>
    %31 = tpu.reciprocal %30 {approx = true} : vector<16x1xf32> -> vector<16x1xf32>
    %32 = arith.mulf %30, %31 : vector<16x1xf32>
    %cst_15 = arith.constant 2.000000e+00 : f32
    %33 = vector.broadcast %cst_15 : f32 to vector<16x1xf32>
    %34 = arith.subf %33, %32 : vector<16x1xf32>
    %35 = arith.mulf %31, %34 : vector<16x1xf32>
    %36 = vector.broadcast %35 : vector<16x1xf32> to vector<16x16xf32>
    %37 = arith.mulf %28, %36 : vector<16x16xf32>
    %38 = arith.truncf %37 : vector<16x16xf32> to vector<16x16xbf16>
    %39 = arith.truncf %3 : vector<16x16xf32> to vector<16x16xbf16>
    %cst_16 = arith.constant dense<0.000000e+00> : vector<16x16xf32>
    %40 = tpu.matmul %38, %39, %cst_16 {dimension_numbers = #tpu.dot_dimension_numbers<[1], [0], [0], [1], [0, 0, 1, 1], [], []>} : vector<16x16xbf16>, vector<16x16xbf16>, vector<16x16xf32> -> vector<16x16xf32>
    %c2 = arith.constant 2 : index
    %c0_17 = arith.constant 0 : index
    %41 = vector.load %arg5[%c2, %c0_17] : memref<48x128xf32, #tpu.memory_space<vmem>>, vector<1x16xf32>
    %42 = vector.broadcast %41 : vector<1x16xf32> to vector<16x16xf32>
    %43 = arith.addf %40, %42 : vector<16x16xf32>
    %cst_18 = arith.constant 0.000000e+00 : f32
    %44 = vector.broadcast %cst_18 : f32 to vector<16x16xf32>
    %45 = arith.cmpf ogt, %43, %44 : vector<16x16xf32>
    %cst_19 = arith.constant 2.000000e-01 : f32
    %46 = vector.broadcast %cst_19 : f32 to vector<16x16xf32>
    %47 = arith.mulf %46, %43 : vector<16x16xf32>
    %48 = arith.select %45, %43, %47 : vector<16x16xi1>, vector<16x16xf32>
    %cst_20 = arith.constant dense<0.000000e+00> : vector<16xf32>
    %49 = vector.multi_reduction <add>, %48, %cst_20 [1] : vector<16x16xf32> to vector<16xf32>
    %50 = vector.shape_cast %49 : vector<16xf32> to vector<16x1xf32>
    %cst_21 = arith.constant 1.600000e+01 : f32
    %51 = vector.broadcast %cst_21 : f32 to vector<16x1xf32>
    %52 = arith.divf %50, %51 : vector<16x1xf32>
    %53 = vector.broadcast %52 : vector<16x1xf32> to vector<16x16xf32>
    %54 = arith.subf %48, %53 : vector<16x16xf32>
    %55 = arith.mulf %54, %54 : vector<16x16xf32>
    %cst_22 = arith.constant dense<0.000000e+00> : vector<16xf32>
    %56 = vector.multi_reduction <add>, %55, %cst_22 [1] : vector<16x16xf32> to vector<16xf32>
    %57 = vector.shape_cast %56 : vector<16xf32> to vector<16x1xf32>
    %cst_23 = arith.constant 1.600000e+01 : f32
    %58 = vector.broadcast %cst_23 : f32 to vector<16x1xf32>
    %59 = arith.divf %57, %58 : vector<16x1xf32>
    %cst_24 = arith.constant 9.99999974E-6 : f32
    %60 = vector.broadcast %cst_24 : f32 to vector<16x1xf32>
    %61 = arith.addf %59, %60 : vector<16x1xf32>
    %62 = math.rsqrt %61 : vector<16x1xf32>
    %63 = vector.broadcast %62 : vector<16x1xf32> to vector<16x16xf32>
    %64 = arith.mulf %54, %63 : vector<16x16xf32>
    %c3 = arith.constant 3 : index
    %c0_25 = arith.constant 0 : index
    %65 = vector.load %arg5[%c3, %c0_25] : memref<48x128xf32, #tpu.memory_space<vmem>>, vector<1x16xf32>
    %66 = vector.broadcast %65 : vector<1x16xf32> to vector<16x16xf32>
    %67 = arith.mulf %64, %66 : vector<16x16xf32>
    %c4 = arith.constant 4 : index
    %c0_26 = arith.constant 0 : index
    %68 = vector.load %arg5[%c4, %c0_26] : memref<48x128xf32, #tpu.memory_space<vmem>>, vector<1x16xf32>
    %69 = vector.broadcast %68 : vector<1x16xf32> to vector<16x16xf32>
    %70 = arith.addf %67, %69 : vector<16x16xf32>
    %71 = arith.truncf %70 : vector<16x16xf32> to vector<16x16xbf16>
    %c0_27 = arith.constant 0 : index
    %c16 = arith.constant 16 : index
    %72 = vector.load %arg4[%c0_27, %c16] : memref<416x128xbf16, #tpu.memory_space<vmem>>, vector<16x16xbf16>
    %cst_28 = arith.constant dense<0.000000e+00> : vector<16x16xf32>
    %73 = tpu.matmul %71, %72, %cst_28 {dimension_numbers = #tpu.dot_dimension_numbers<[1], [0], [0], [1], [0, 0, 1, 1], [], []>} : vector<16x16xbf16>, vector<16x16xbf16>, vector<16x16xf32> -> vector<16x16xf32>
    %c6 = arith.constant 6 : index
    %c0_29 = arith.constant 0 : index
    %74 = vector.load %arg5[%c6, %c0_29] : memref<48x128xf32, #tpu.memory_space<vmem>>, vector<1x16xf32>
    %75 = vector.broadcast %74 : vector<1x16xf32> to vector<16x16xf32>
    %76 = arith.mulf %73, %75 : vector<16x16xf32>
    %cst_30 = arith.constant dense<0.000000e+00> : vector<16xf32>
    %77 = vector.multi_reduction <add>, %76, %cst_30 [1] : vector<16x16xf32> to vector<16xf32>
    %78 = vector.shape_cast %77 : vector<16xf32> to vector<16x1xf32>
    %c5 = arith.constant 5 : index
    %c0_31 = arith.constant 0 : index
    %79 = vector.load %arg5[%c5, %c0_31] : memref<48x128xf32, #tpu.memory_space<vmem>>, vector<1x16xf32>
    %80 = arith.truncf %79 : vector<1x16xf32> to vector<1x16xbf16>
    %81 = arith.truncf %73 : vector<16x16xf32> to vector<16x16xbf16>
    %cst_32 = arith.constant dense<0.000000e+00> : vector<1x16xf32>
    %82 = tpu.matmul %80, %81, %cst_32 {dimension_numbers = #tpu.dot_dimension_numbers<[1], [1], [0], [0], [0, 0, 1, 0], [], []>} : vector<1x16xbf16>, vector<16x16xbf16>, vector<1x16xf32> -> vector<1x16xf32>
    %83 = vector.broadcast %78 : vector<16x1xf32> to vector<16x16xf32>
    %84 = vector.broadcast %82 : vector<1x16xf32> to vector<16x16xf32>
    %85 = arith.addf %83, %84 : vector<16x16xf32>
    %c1_33 = arith.constant 1 : index
    %c0_34 = arith.constant 0 : index
    %c0_35 = arith.constant 0 : index
    %86 = vector.load %arg1[%c1_33, %c0_34, %c0_35] : memref<3x16x16xf32, #tpu.memory_space<vmem>>, vector<1x16x16xf32>
    %87 = vector.shape_cast %86 : vector<1x16x16xf32> to vector<16x16xf32>
    %88 = arith.addf %85, %87 : vector<16x16xf32>
    %cst_36 = arith.constant 0.000000e+00 : f32
    %89 = vector.broadcast %cst_36 : f32 to vector<16x16xf32>
    %90 = arith.cmpf ogt, %88, %89 : vector<16x16xf32>
    %cst_37 = arith.constant 2.000000e-01 : f32
    %91 = vector.broadcast %cst_37 : f32 to vector<16x16xf32>
    %92 = arith.mulf %91, %88 : vector<16x16xf32>
    %93 = arith.select %90, %88, %92 : vector<16x16xi1>, vector<16x16xf32>
    %cst_38 = arith.constant dense<0xFF800000> : vector<16xf32>
    %94 = vector.multi_reduction <maximumf>, %93, %cst_38 [1] : vector<16x16xf32> to vector<16xf32>
    %95 = vector.shape_cast %94 : vector<16xf32> to vector<16x1xf32>
    %96 = vector.broadcast %95 : vector<16x1xf32> to vector<16x16xf32>
    %97 = arith.subf %93, %96 : vector<16x16xf32>
    %98 = math.exp %97 : vector<16x16xf32>
    %cst_39 = arith.constant dense<0.000000e+00> : vector<16xf32>
    %99 = vector.multi_reduction <add>, %98, %cst_39 [1] : vector<16x16xf32> to vector<16xf32>
    %100 = vector.shape_cast %99 : vector<16xf32> to vector<16x1xf32>
    %101 = tpu.reciprocal %100 {approx = true} : vector<16x1xf32> -> vector<16x1xf32>
    %102 = arith.mulf %100, %101 : vector<16x1xf32>
    %cst_40 = arith.constant 2.000000e+00 : f32
    %103 = vector.broadcast %cst_40 : f32 to vector<16x1xf32>
    %104 = arith.subf %103, %102 : vector<16x1xf32>
    %105 = arith.mulf %101, %104 : vector<16x1xf32>
    %106 = vector.broadcast %105 : vector<16x1xf32> to vector<16x16xf32>
    %107 = arith.mulf %98, %106 : vector<16x16xf32>
    %108 = arith.truncf %107 : vector<16x16xf32> to vector<16x16xbf16>
    %109 = arith.truncf %73 : vector<16x16xf32> to vector<16x16xbf16>
    %cst_41 = arith.constant dense<0.000000e+00> : vector<16x16xf32>
    %110 = tpu.matmul %108, %109, %cst_41 {dimension_numbers = #tpu.dot_dimension_numbers<[1], [0], [0], [1], [0, 0, 1, 1], [], []>} : vector<16x16xbf16>, vector<16x16xbf16>, vector<16x16xf32> -> vector<16x16xf32>
    %c7 = arith.constant 7 : index
    %c0_42 = arith.constant 0 : index
    %111 = vector.load %arg5[%c7, %c0_42] : memref<48x128xf32, #tpu.memory_space<vmem>>, vector<1x16xf32>
    %112 = vector.broadcast %111 : vector<1x16xf32> to vector<16x16xf32>
    %113 = arith.addf %110, %112 : vector<16x16xf32>
    %cst_43 = arith.constant 0.000000e+00 : f32
    %114 = vector.broadcast %cst_43 : f32 to vector<16x16xf32>
    %115 = arith.cmpf ogt, %113, %114 : vector<16x16xf32>
    %cst_44 = arith.constant 2.000000e-01 : f32
    %116 = vector.broadcast %cst_44 : f32 to vector<16x16xf32>
    %117 = arith.mulf %116, %113 : vector<16x16xf32>
    %118 = arith.select %115, %113, %117 : vector<16x16xi1>, vector<16x16xf32>
    %cst_45 = arith.constant dense<0.000000e+00> : vector<16xf32>
    %119 = vector.multi_reduction <add>, %118, %cst_45 [1] : vector<16x16xf32> to vector<16xf32>
    %120 = vector.shape_cast %119 : vector<16xf32> to vector<16x1xf32>
    %cst_46 = arith.constant 1.600000e+01 : f32
    %121 = vector.broadcast %cst_46 : f32 to vector<16x1xf32>
    %122 = arith.divf %120, %121 : vector<16x1xf32>
    %123 = vector.broadcast %122 : vector<16x1xf32> to vector<16x16xf32>
    %124 = arith.subf %118, %123 : vector<16x16xf32>
    %125 = arith.mulf %124, %124 : vector<16x16xf32>
    %cst_47 = arith.constant dense<0.000000e+00> : vector<16xf32>
    %126 = vector.multi_reduction <add>, %125, %cst_47 [1] : vector<16x16xf32> to vector<16xf32>
    %127 = vector.shape_cast %126 : vector<16xf32> to vector<16x1xf32>
    %cst_48 = arith.constant 1.600000e+01 : f32
    %128 = vector.broadcast %cst_48 : f32 to vector<16x1xf32>
    %129 = arith.divf %127, %128 : vector<16x1xf32>
    %cst_49 = arith.constant 9.99999974E-6 : f32
    %130 = vector.broadcast %cst_49 : f32 to vector<16x1xf32>
    %131 = arith.addf %129, %130 : vector<16x1xf32>
    %132 = math.rsqrt %131 : vector<16x1xf32>
    %133 = vector.broadcast %132 : vector<16x1xf32> to vector<16x16xf32>
    %134 = arith.mulf %124, %133 : vector<16x16xf32>
    %c8 = arith.constant 8 : index
    %c0_50 = arith.constant 0 : index
    %135 = vector.load %arg5[%c8, %c0_50] : memref<48x128xf32, #tpu.memory_space<vmem>>, vector<1x16xf32>
    %136 = vector.broadcast %135 : vector<1x16xf32> to vector<16x16xf32>
    %137 = arith.mulf %134, %136 : vector<16x16xf32>
    %c9 = arith.constant 9 : index
    %c0_51 = arith.constant 0 : index
    %138 = vector.load %arg5[%c9, %c0_51] : memref<48x128xf32, #tpu.memory_space<vmem>>, vector<1x16xf32>
    %139 = vector.broadcast %138 : vector<1x16xf32> to vector<16x16xf32>
    %140 = arith.addf %137, %139 : vector<16x16xf32>
    %141 = arith.truncf %140 : vector<16x16xf32> to vector<16x16xbf16>
    %c0_52 = arith.constant 0 : index
    %c32 = arith.constant 32 : index
    %142 = vector.load %arg4[%c0_52, %c32] : memref<416x128xbf16, #tpu.memory_space<vmem>>, vector<16x8xbf16>
    %cst_53 = arith.constant dense<0.000000e+00> : vector<16x8xf32>
    %143 = tpu.matmul %141, %142, %cst_53 {dimension_numbers = #tpu.dot_dimension_numbers<[1], [0], [0], [1], [0, 0, 1, 1], [], []>} : vector<16x16xbf16>, vector<16x8xbf16>, vector<16x8xf32> -> vector<16x8xf32>
    %c11 = arith.constant 11 : index
    %c0_54 = arith.constant 0 : index
    %144 = vector.load %arg5[%c11, %c0_54] : memref<48x128xf32, #tpu.memory_space<vmem>>, vector<1x8xf32>
    %145 = vector.broadcast %144 : vector<1x8xf32> to vector<16x8xf32>
    %146 = arith.mulf %143, %145 : vector<16x8xf32>
    %cst_55 = arith.constant dense<0.000000e+00> : vector<16xf32>
    %147 = vector.multi_reduction <add>, %146, %cst_55 [1] : vector<16x8xf32> to vector<16xf32>
    %148 = vector.shape_cast %147 : vector<16xf32> to vector<16x1xf32>
    %c10 = arith.constant 10 : index
    %c0_56 = arith.constant 0 : index
    %149 = vector.load %arg5[%c10, %c0_56] : memref<48x128xf32, #tpu.memory_space<vmem>>, vector<1x8xf32>
    %150 = arith.truncf %149 : vector<1x8xf32> to vector<1x8xbf16>
    %151 = arith.truncf %143 : vector<16x8xf32> to vector<16x8xbf16>
    %cst_57 = arith.constant dense<0.000000e+00> : vector<1x16xf32>
    %152 = tpu.matmul %150, %151, %cst_57 {dimension_numbers = #tpu.dot_dimension_numbers<[1], [1], [0], [0], [0, 0, 1, 0], [], []>} : vector<1x8xbf16>, vector<16x8xbf16>, vector<1x16xf32> -> vector<1x16xf32>
    %153 = vector.broadcast %148 : vector<16x1xf32> to vector<16x16xf32>
    %154 = vector.broadcast %152 : vector<1x16xf32> to vector<16x16xf32>
    %155 = arith.addf %153, %154 : vector<16x16xf32>
    %c2_58 = arith.constant 2 : index
    %c0_59 = arith.constant 0 : index
    %c0_60 = arith.constant 0 : index
    %156 = vector.load %arg1[%c2_58, %c0_59, %c0_60] : memref<3x16x16xf32, #tpu.memory_space<vmem>>, vector<1x16x16xf32>
    %157 = vector.shape_cast %156 : vector<1x16x16xf32> to vector<16x16xf32>
    %158 = arith.addf %155, %157 : vector<16x16xf32>
    %cst_61 = arith.constant 0.000000e+00 : f32
    %159 = vector.broadcast %cst_61 : f32 to vector<16x16xf32>
    %160 = arith.cmpf ogt, %158, %159 : vector<16x16xf32>
    %cst_62 = arith.constant 2.000000e-01 : f32
    %161 = vector.broadcast %cst_62 : f32 to vector<16x16xf32>
    %162 = arith.mulf %161, %158 : vector<16x16xf32>
    %163 = arith.select %160, %158, %162 : vector<16x16xi1>, vector<16x16xf32>
    %cst_63 = arith.constant dense<0xFF800000> : vector<16xf32>
    %164 = vector.multi_reduction <maximumf>, %163, %cst_63 [1] : vector<16x16xf32> to vector<16xf32>
    %165 = vector.shape_cast %164 : vector<16xf32> to vector<16x1xf32>
    %166 = vector.broadcast %165 : vector<16x1xf32> to vector<16x16xf32>
    %167 = arith.subf %163, %166 : vector<16x16xf32>
    %168 = math.exp %167 : vector<16x16xf32>
    %cst_64 = arith.constant dense<0.000000e+00> : vector<16xf32>
    %169 = vector.multi_reduction <add>, %168, %cst_64 [1] : vector<16x16xf32> to vector<16xf32>
    %170 = vector.shape_cast %169 : vector<16xf32> to vector<16x1xf32>
    %171 = tpu.reciprocal %170 {approx = true} : vector<16x1xf32> -> vector<16x1xf32>
    %172 = arith.mulf %170, %171 : vector<16x1xf32>
    %cst_65 = arith.constant 2.000000e+00 : f32
    %173 = vector.broadcast %cst_65 : f32 to vector<16x1xf32>
    %174 = arith.subf %173, %172 : vector<16x1xf32>
    %175 = arith.mulf %171, %174 : vector<16x1xf32>
    %176 = vector.broadcast %175 : vector<16x1xf32> to vector<16x16xf32>
    %177 = arith.mulf %168, %176 : vector<16x16xf32>
    %178 = arith.truncf %177 : vector<16x16xf32> to vector<16x16xbf16>
    %179 = arith.truncf %143 : vector<16x8xf32> to vector<16x8xbf16>
    %cst_66 = arith.constant dense<0.000000e+00> : vector<16x8xf32>
    %180 = tpu.matmul %178, %179, %cst_66 {dimension_numbers = #tpu.dot_dimension_numbers<[1], [0], [0], [1], [0, 0, 1, 1], [], []>} : vector<16x16xbf16>, vector<16x8xbf16>, vector<16x8xf32> -> vector<16x8xf32>
    %c12 = arith.constant 12 : index
    %c0_67 = arith.constant 0 : index
    %181 = vector.load %arg5[%c12, %c0_67] : memref<48x128xf32, #tpu.memory_space<vmem>>, vector<1x8xf32>
    %182 = vector.broadcast %181 : vector<1x8xf32> to vector<16x8xf32>
    %183 = arith.addf %180, %182 : vector<16x8xf32>
    %cst_68 = arith.constant 0.000000e+00 : f32
    %184 = vector.broadcast %cst_68 : f32 to vector<16x8xf32>
    %185 = arith.cmpf ogt, %183, %184 : vector<16x8xf32>
    %cst_69 = arith.constant 2.000000e-01 : f32
    %186 = vector.broadcast %cst_69 : f32 to vector<16x8xf32>
    %187 = arith.mulf %186, %183 : vector<16x8xf32>
    %188 = arith.select %185, %183, %187 : vector<16x8xi1>, vector<16x8xf32>
    %cst_70 = arith.constant dense<0.000000e+00> : vector<16xf32>
    %189 = vector.multi_reduction <add>, %188, %cst_70 [1] : vector<16x8xf32> to vector<16xf32>
    %190 = vector.shape_cast %189 : vector<16xf32> to vector<16x1xf32>
    %cst_71 = arith.constant 8.000000e+00 : f32
    %191 = vector.broadcast %cst_71 : f32 to vector<16x1xf32>
    %192 = arith.divf %190, %191 : vector<16x1xf32>
    %193 = vector.broadcast %192 : vector<16x1xf32> to vector<16x8xf32>
    %194 = arith.subf %188, %193 : vector<16x8xf32>
    %195 = arith.mulf %194, %194 : vector<16x8xf32>
    %cst_72 = arith.constant dense<0.000000e+00> : vector<16xf32>
    %196 = vector.multi_reduction <add>, %195, %cst_72 [1] : vector<16x8xf32> to vector<16xf32>
    %197 = vector.shape_cast %196 : vector<16xf32> to vector<16x1xf32>
    %cst_73 = arith.constant 8.000000e+00 : f32
    %198 = vector.broadcast %cst_73 : f32 to vector<16x1xf32>
    %199 = arith.divf %197, %198 : vector<16x1xf32>
    %cst_74 = arith.constant 9.99999974E-6 : f32
    %200 = vector.broadcast %cst_74 : f32 to vector<16x1xf32>
    %201 = arith.addf %199, %200 : vector<16x1xf32>
    %202 = math.rsqrt %201 : vector<16x1xf32>
    %203 = vector.broadcast %202 : vector<16x1xf32> to vector<16x8xf32>
    %204 = arith.mulf %194, %203 : vector<16x8xf32>
    %c13 = arith.constant 13 : index
    %c0_75 = arith.constant 0 : index
    %205 = vector.load %arg5[%c13, %c0_75] : memref<48x128xf32, #tpu.memory_space<vmem>>, vector<1x8xf32>
    %206 = vector.broadcast %205 : vector<1x8xf32> to vector<16x8xf32>
    %207 = arith.mulf %204, %206 : vector<16x8xf32>
    %c14 = arith.constant 14 : index
    %c0_76 = arith.constant 0 : index
    %208 = vector.load %arg5[%c14, %c0_76] : memref<48x128xf32, #tpu.memory_space<vmem>>, vector<1x8xf32>
    %209 = vector.broadcast %208 : vector<1x8xf32> to vector<16x8xf32>
    %210 = arith.addf %207, %209 : vector<16x8xf32>
    %c0_77 = arith.constant 0 : index
    %c0_78 = arith.constant 0 : index
    %211 = vector.load %arg6[%c0_77, %c0_78] : memref<16x8xf32, #tpu.memory_space<vmem>>, vector<16x8xf32>
    tpu.vector_store %arg6[%c0_77, %c0_78], %210 {strides = array<i32>} : memref<16x8xf32, #tpu.memory_space<vmem>>, vector<16x8xf32>,
    %c0_79 = arith.constant 0 : index
    %c0_80 = arith.constant 0 : index
    %212 = vector.load %arg2[%c0_79, %c0_80] : memref<8x9xf32, #tpu.memory_space<vmem>>, vector<8x9xf32>
    %213 = arith.truncf %212 : vector<8x9xf32> to vector<8x9xbf16>
    %c16_81 = arith.constant 16 : index
    %c0_82 = arith.constant 0 : index
    %214 = vector.load %arg4[%c16_81, %c0_82] : memref<416x128xbf16, #tpu.memory_space<vmem>>, vector<9x32xbf16>
    %cst_83 = arith.constant dense<0.000000e+00> : vector<8x32xf32>
    %215 = tpu.matmul %213, %214, %cst_83 {dimension_numbers = #tpu.dot_dimension_numbers<[1], [0], [0], [1], [0, 0, 1, 1], [], []>} : vector<8x9xbf16>, vector<9x32xbf16>, vector<8x32xf32> -> vector<8x32xf32>
    %c15 = arith.constant 15 : index
    %c0_84 = arith.constant 0 : index
    %216 = vector.load %arg5[%c15, %c0_84] : memref<48x128xf32, #tpu.memory_space<vmem>>, vector<1x32xf32>
    %217 = vector.broadcast %216 : vector<1x32xf32> to vector<8x32xf32>
    %218 = arith.addf %215, %217 : vector<8x32xf32>
    %c0_85 = arith.constant 0 : index
    %c0_86 = arith.constant 0 : index
    %219 = vector.load %arg3[%c0_85, %c0_86] : memref<12x11xf32, #tpu.memory_space<vmem>>, vector<12x11xf32>
    %220 = arith.truncf %219 : vector<12x11xf32> to vector<12x11xbf16>
    %c16_87 = arith.constant 16 : index
    %c32_88 = arith.constant 32 : index
    %221 = vector.load %arg4[%c16_87, %c32_88] : memref<416x128xbf16, #tpu.memory_space<vmem>>, vector<11x32xbf16>
    %cst_89 = arith.constant dense<0.000000e+00> : vector<12x32xf32>
    %222 = tpu.matmul %220, %221, %cst_89 {dimension_numbers = #tpu.dot_dimension_numbers<[1], [0], [0], [1], [0, 0, 1, 1], [], []>} : vector<12x11xbf16>, vector<11x32xbf16>, vector<12x32xf32> -> vector<12x32xf32>
    %c16_90 = arith.constant 16 : index
    %c0_91 = arith.constant 0 : index
    %223 = vector.load %arg5[%c16_90, %c0_91] : memref<48x128xf32, #tpu.memory_space<vmem>>, vector<1x32xf32>
    %224 = vector.broadcast %223 : vector<1x32xf32> to vector<12x32xf32>
    %225 = arith.addf %222, %224 : vector<12x32xf32>
    %226 = arith.truncf %218 : vector<8x32xf32> to vector<8x32xbf16>
    %c32_92 = arith.constant 32 : index
    %c0_93 = arith.constant 0 : index
    %227 = vector.load %arg4[%c32_92, %c0_93] : memref<416x128xbf16, #tpu.memory_space<vmem>>, vector<32x96xbf16>
    %cst_94 = arith.constant dense<0.000000e+00> : vector<8x96xf32>
    %228 = tpu.matmul %226, %227, %cst_94 {dimension_numbers = #tpu.dot_dimension_numbers<[1], [0], [0], [1], [0, 0, 1, 1], [], []>} : vector<8x32xbf16>, vector<32x96xbf16>, vector<8x96xf32> -> vector<8x96xf32>
    %229 = vector.extract_strided_slice %228 {offsets = [0, 0], sizes = [8, 8], strides = [1, 1]} : vector<8x96xf32> to vector<8x8xf32>
    %230 = vector.extract_strided_slice %228 {offsets = [0, 32], sizes = [8, 8], strides = [1, 1]} : vector<8x96xf32> to vector<8x8xf32>
    %231 = vector.extract_strided_slice %228 {offsets = [0, 64], sizes = [8, 8], strides = [1, 1]} : vector<8x96xf32> to vector<8x8xf32>
    %232 = arith.truncf %229 : vector<8x8xf32> to vector<8x8xbf16>
    %233 = arith.truncf %230 : vector<8x8xf32> to vector<8x8xbf16>
    %cst_95 = arith.constant dense<0.000000e+00> : vector<8x8xf32>
    %234 = tpu.matmul %232, %233, %cst_95 {dimension_numbers = #tpu.dot_dimension_numbers<[1], [1], [0], [0], [0, 0, 1, 0], [], []>} : vector<8x8xbf16>, vector<8x8xbf16>, vector<8x8xf32> -> vector<8x8xf32>
    %cst_96 = arith.constant dense<0xFF800000> : vector<8xf32>
    %235 = vector.multi_reduction <maximumf>, %234, %cst_96 [1] : vector<8x8xf32> to vector<8xf32>
    %236 = vector.shape_cast %235 : vector<8xf32> to vector<8x1xf32>
    %237 = vector.broadcast %236 : vector<8x1xf32> to vector<8x8xf32>
    %238 = arith.subf %234, %237 : vector<8x8xf32>
    %239 = math.exp %238 : vector<8x8xf32>
    %cst_97 = arith.constant dense<0.000000e+00> : vector<8xf32>
    %240 = vector.multi_reduction <add>, %239, %cst_97 [1] : vector<8x8xf32> to vector<8xf32>
    %241 = vector.shape_cast %240 : vector<8xf32> to vector<8x1xf32>
    %242 = tpu.reciprocal %241 {approx = true} : vector<8x1xf32> -> vector<8x1xf32>
    %243 = arith.mulf %241, %242 : vector<8x1xf32>
    %cst_98 = arith.constant 2.000000e+00 : f32
    %244 = vector.broadcast %cst_98 : f32 to vector<8x1xf32>
    %245 = arith.subf %244, %243 : vector<8x1xf32>
    %246 = arith.mulf %242, %245 : vector<8x1xf32>
    %247 = vector.broadcast %246 : vector<8x1xf32> to vector<8x8xf32>
    %248 = arith.mulf %239, %247 : vector<8x8xf32>
    %249 = arith.truncf %248 : vector<8x8xf32> to vector<8x8xbf16>
    %250 = arith.truncf %231 : vector<8x8xf32> to vector<8x8xbf16>
    %cst_99 = arith.constant dense<0.000000e+00> : vector<8x8xf32>
    %251 = tpu.matmul %249, %250, %cst_99 {dimension_numbers = #tpu.dot_dimension_numbers<[1], [0], [0], [1], [0, 0, 1, 1], [], []>} : vector<8x8xbf16>, vector<8x8xbf16>, vector<8x8xf32> -> vector<8x8xf32>
    %252 = vector.extract_strided_slice %228 {offsets = [0, 8], sizes = [8, 8], strides = [1, 1]} : vector<8x96xf32> to vector<8x8xf32>
    %253 = vector.extract_strided_slice %228 {offsets = [0, 40], sizes = [8, 8], strides = [1, 1]} : vector<8x96xf32> to vector<8x8xf32>
    %254 = vector.extract_strided_slice %228 {offsets = [0, 72], sizes = [8, 8], strides = [1, 1]} : vector<8x96xf32> to vector<8x8xf32>
    %255 = arith.truncf %252 : vector<8x8xf32> to vector<8x8xbf16>
    %256 = arith.truncf %253 : vector<8x8xf32> to vector<8x8xbf16>
    %cst_100 = arith.constant dense<0.000000e+00> : vector<8x8xf32>
    %257 = tpu.matmul %255, %256, %cst_100 {dimension_numbers = #tpu.dot_dimension_numbers<[1], [1], [0], [0], [0, 0, 1, 0], [], []>} : vector<8x8xbf16>, vector<8x8xbf16>, vector<8x8xf32> -> vector<8x8xf32>
    %cst_101 = arith.constant dense<0xFF800000> : vector<8xf32>
    %258 = vector.multi_reduction <maximumf>, %257, %cst_101 [1] : vector<8x8xf32> to vector<8xf32>
    %259 = vector.shape_cast %258 : vector<8xf32> to vector<8x1xf32>
    %260 = vector.broadcast %259 : vector<8x1xf32> to vector<8x8xf32>
    %261 = arith.subf %257, %260 : vector<8x8xf32>
    %262 = math.exp %261 : vector<8x8xf32>
    %cst_102 = arith.constant dense<0.000000e+00> : vector<8xf32>
    %263 = vector.multi_reduction <add>, %262, %cst_102 [1] : vector<8x8xf32> to vector<8xf32>
    %264 = vector.shape_cast %263 : vector<8xf32> to vector<8x1xf32>
    %265 = tpu.reciprocal %264 {approx = true} : vector<8x1xf32> -> vector<8x1xf32>
    %266 = arith.mulf %264, %265 : vector<8x1xf32>
    %cst_103 = arith.constant 2.000000e+00 : f32
    %267 = vector.broadcast %cst_103 : f32 to vector<8x1xf32>
    %268 = arith.subf %267, %266 : vector<8x1xf32>
    %269 = arith.mulf %265, %268 : vector<8x1xf32>
    %270 = vector.broadcast %269 : vector<8x1xf32> to vector<8x8xf32>
    %271 = arith.mulf %262, %270 : vector<8x8xf32>
    %272 = arith.truncf %271 : vector<8x8xf32> to vector<8x8xbf16>
    %273 = arith.truncf %254 : vector<8x8xf32> to vector<8x8xbf16>
    %cst_104 = arith.constant dense<0.000000e+00> : vector<8x8xf32>
    %274 = tpu.matmul %272, %273, %cst_104 {dimension_numbers = #tpu.dot_dimension_numbers<[1], [0], [0], [1], [0, 0, 1, 1], [], []>} : vector<8x8xbf16>, vector<8x8xbf16>, vector<8x8xf32> -> vector<8x8xf32>
    %275 = vector.extract_strided_slice %228 {offsets = [0, 16], sizes = [8, 8], strides = [1, 1]} : vector<8x96xf32> to vector<8x8xf32>
    %276 = vector.extract_strided_slice %228 {offsets = [0, 48], sizes = [8, 8], strides = [1, 1]} : vector<8x96xf32> to vector<8x8xf32>
    %277 = vector.extract_strided_slice %228 {offsets = [0, 80], sizes = [8, 8], strides = [1, 1]} : vector<8x96xf32> to vector<8x8xf32>
    %278 = arith.truncf %275 : vector<8x8xf32> to vector<8x8xbf16>
    %279 = arith.truncf %276 : vector<8x8xf32> to vector<8x8xbf16>
    %cst_105 = arith.constant dense<0.000000e+00> : vector<8x8xf32>
    %280 = tpu.matmul %278, %279, %cst_105 {dimension_numbers = #tpu.dot_dimension_numbers<[1], [1], [0], [0], [0, 0, 1, 0], [], []>} : vector<8x8xbf16>, vector<8x8xbf16>, vector<8x8xf32> -> vector<8x8xf32>
    %cst_106 = arith.constant dense<0xFF800000> : vector<8xf32>
    %281 = vector.multi_reduction <maximumf>, %280, %cst_106 [1] : vector<8x8xf32> to vector<8xf32>
    %282 = vector.shape_cast %281 : vector<8xf32> to vector<8x1xf32>
    %283 = vector.broadcast %282 : vector<8x1xf32> to vector<8x8xf32>
    %284 = arith.subf %280, %283 : vector<8x8xf32>
    %285 = math.exp %284 : vector<8x8xf32>
    %cst_107 = arith.constant dense<0.000000e+00> : vector<8xf32>
    %286 = vector.multi_reduction <add>, %285, %cst_107 [1] : vector<8x8xf32> to vector<8xf32>
    %287 = vector.shape_cast %286 : vector<8xf32> to vector<8x1xf32>
    %288 = tpu.reciprocal %287 {approx = true} : vector<8x1xf32> -> vector<8x1xf32>
    %289 = arith.mulf %287, %288 : vector<8x1xf32>
    %cst_108 = arith.constant 2.000000e+00 : f32
    %290 = vector.broadcast %cst_108 : f32 to vector<8x1xf32>
    %291 = arith.subf %290, %289 : vector<8x1xf32>
    %292 = arith.mulf %288, %291 : vector<8x1xf32>
    %293 = vector.broadcast %292 : vector<8x1xf32> to vector<8x8xf32>
    %294 = arith.mulf %285, %293 : vector<8x8xf32>
    %295 = arith.truncf %294 : vector<8x8xf32> to vector<8x8xbf16>
    %296 = arith.truncf %277 : vector<8x8xf32> to vector<8x8xbf16>
    %cst_109 = arith.constant dense<0.000000e+00> : vector<8x8xf32>
    %297 = tpu.matmul %295, %296, %cst_109 {dimension_numbers = #tpu.dot_dimension_numbers<[1], [0], [0], [1], [0, 0, 1, 1], [], []>} : vector<8x8xbf16>, vector<8x8xbf16>, vector<8x8xf32> -> vector<8x8xf32>
    %298 = vector.extract_strided_slice %228 {offsets = [0, 24], sizes = [8, 8], strides = [1, 1]} : vector<8x96xf32> to vector<8x8xf32>
    %299 = vector.extract_strided_slice %228 {offsets = [0, 56], sizes = [8, 8], strides = [1, 1]} : vector<8x96xf32> to vector<8x8xf32>
    %300 = vector.extract_strided_slice %228 {offsets = [0, 88], sizes = [8, 8], strides = [1, 1]} : vector<8x96xf32> to vector<8x8xf32>
    %301 = arith.truncf %298 : vector<8x8xf32> to vector<8x8xbf16>
    %302 = arith.truncf %299 : vector<8x8xf32> to vector<8x8xbf16>
    %cst_110 = arith.constant dense<0.000000e+00> : vector<8x8xf32>
    %303 = tpu.matmul %301, %302, %cst_110 {dimension_numbers = #tpu.dot_dimension_numbers<[1], [1], [0], [0], [0, 0, 1, 0], [], []>} : vector<8x8xbf16>, vector<8x8xbf16>, vector<8x8xf32> -> vector<8x8xf32>
    %cst_111 = arith.constant dense<0xFF800000> : vector<8xf32>
    %304 = vector.multi_reduction <maximumf>, %303, %cst_111 [1] : vector<8x8xf32> to vector<8xf32>
    %305 = vector.shape_cast %304 : vector<8xf32> to vector<8x1xf32>
    %306 = vector.broadcast %305 : vector<8x1xf32> to vector<8x8xf32>
    %307 = arith.subf %303, %306 : vector<8x8xf32>
    %308 = math.exp %307 : vector<8x8xf32>
    %cst_112 = arith.constant dense<0.000000e+00> : vector<8xf32>
    %309 = vector.multi_reduction <add>, %308, %cst_112 [1] : vector<8x8xf32> to vector<8xf32>
    %310 = vector.shape_cast %309 : vector<8xf32> to vector<8x1xf32>
    %311 = tpu.reciprocal %310 {approx = true} : vector<8x1xf32> -> vector<8x1xf32>
    %312 = arith.mulf %310, %311 : vector<8x1xf32>
    %cst_113 = arith.constant 2.000000e+00 : f32
    %313 = vector.broadcast %cst_113 : f32 to vector<8x1xf32>
    %314 = arith.subf %313, %312 : vector<8x1xf32>
    %315 = arith.mulf %311, %314 : vector<8x1xf32>
    %316 = vector.broadcast %315 : vector<8x1xf32> to vector<8x8xf32>
    %317 = arith.mulf %308, %316 : vector<8x8xf32>
    %318 = arith.truncf %317 : vector<8x8xf32> to vector<8x8xbf16>
    %319 = arith.truncf %300 : vector<8x8xf32> to vector<8x8xbf16>
    %cst_114 = arith.constant dense<0.000000e+00> : vector<8x8xf32>
    %320 = tpu.matmul %318, %319, %cst_114 {dimension_numbers = #tpu.dot_dimension_numbers<[1], [0], [0], [1], [0, 0, 1, 1], [], []>} : vector<8x8xbf16>, vector<8x8xbf16>, vector<8x8xf32> -> vector<8x8xf32>
    %321 = tpu.concatenate %251, %274, %297, %320 in 1 : vector<8x8xf32>, vector<8x8xf32>, vector<8x8xf32>, vector<8x8xf32> -> vector<8x32xf32>
    %322 = arith.truncf %321 : vector<8x32xf32> to vector<8x32xbf16>
    %c32_115 = arith.constant 32 : index
    %c96 = arith.constant 96 : index
    %323 = vector.load %arg4[%c32_115, %c96] : memref<416x128xbf16, #tpu.memory_space<vmem>>, vector<32x32xbf16>
    %cst_116 = arith.constant dense<0.000000e+00> : vector<8x32xf32>
    %324 = tpu.matmul %322, %323, %cst_116 {dimension_numbers = #tpu.dot_dimension_numbers<[1], [0], [0], [1], [0, 0, 1, 1], [], []>} : vector<8x32xbf16>, vector<32x32xbf16>, vector<8x32xf32> -> vector<8x32xf32>
    %325 = arith.addf %324, %218 : vector<8x32xf32>
    %cst_117 = arith.constant dense<0.000000e+00> : vector<8xf32>
    %326 = vector.multi_reduction <add>, %325, %cst_117 [1] : vector<8x32xf32> to vector<8xf32>
    %327 = vector.shape_cast %326 : vector<8xf32> to vector<8x1xf32>
    %cst_118 = arith.constant 3.200000e+01 : f32
    %328 = vector.broadcast %cst_118 : f32 to vector<8x1xf32>
    %329 = arith.divf %327, %328 : vector<8x1xf32>
    %330 = vector.broadcast %329 : vector<8x1xf32> to vector<8x32xf32>
    %331 = arith.subf %325, %330 : vector<8x32xf32>
    %332 = arith.mulf %331, %331 : vector<8x32xf32>
    %cst_119 = arith.constant dense<0.000000e+00> : vector<8xf32>
    %333 = vector.multi_reduction <add>, %332, %cst_119 [1] : vector<8x32xf32> to vector<8xf32>
    %334 = vector.shape_cast %333 : vector<8xf32> to vector<8x1xf32>
    %cst_120 = arith.constant 3.200000e+01 : f32
    %335 = vector.broadcast %cst_120 : f32 to vector<8x1xf32>
    %336 = arith.divf %334, %335 : vector<8x1xf32>
    %cst_121 = arith.constant 9.99999974E-6 : f32
    %337 = vector.broadcast %cst_121 : f32 to vector<8x1xf32>
    %338 = arith.addf %336, %337 : vector<8x1xf32>
    %339 = math.rsqrt %338 : vector<8x1xf32>
    %340 = vector.broadcast %339 : vector<8x1xf32> to vector<8x32xf32>
    %341 = arith.mulf %331, %340 : vector<8x32xf32>
    %c19 = arith.constant 19 : index
    %c0_122 = arith.constant 0 : index
    %342 = vector.load %arg5[%c19, %c0_122] : memref<48x128xf32, #tpu.memory_space<vmem>>, vector<1x32xf32>
    %343 = vector.broadcast %342 : vector<1x32xf32> to vector<8x32xf32>
    %344 = arith.mulf %341, %343 : vector<8x32xf32>
    %c20 = arith.constant 20 : index
    %c0_123 = arith.constant 0 : index
    %345 = vector.load %arg5[%c20, %c0_123] : memref<48x128xf32, #tpu.memory_space<vmem>>, vector<1x32xf32>
    %346 = vector.broadcast %345 : vector<1x32xf32> to vector<8x32xf32>
    %347 = arith.addf %344, %346 : vector<8x32xf32>
    %348 = arith.truncf %347 : vector<8x32xf32> to vector<8x32xbf16>
    %c64 = arith.constant 64 : index
    %c0_124 = arith.constant 0 : index
    %349 = vector.load %arg4[%c64, %c0_124] : memref<416x128xbf16, #tpu.memory_space<vmem>>, vector<32x128xbf16>
    %cst_125 = arith.constant dense<0.000000e+00> : vector<8x128xf32>
    %350 = tpu.matmul %348, %349, %cst_125 {dimension_numbers = #tpu.dot_dimension_numbers<[1], [0], [0], [1], [0, 0, 1, 1], [], []>} : vector<8x32xbf16>, vector<32x128xbf16>, vector<8x128xf32> -> vector<8x128xf32>
    %c17 = arith.constant 17 : index
    %c0_126 = arith.constant 0 : index
    %351 = vector.load %arg5[%c17, %c0_126] : memref<48x128xf32, #tpu.memory_space<vmem>>, vector<1x128xf32>
    %352 = vector.broadcast %351 : vector<1x128xf32> to vector<8x128xf32>
    %353 = arith.addf %350, %352 : vector<8x128xf32>
    %cst_127 = arith.constant 0.000000e+00 : f32
    %354 = vector.broadcast %cst_127 : f32 to vector<8x128xf32>
    %355 = arith.cmpf ogt, %353, %354 : vector<8x128xf32>
    %cst_128 = arith.constant 2.000000e-01 : f32
    %356 = vector.broadcast %cst_128 : f32 to vector<8x128xf32>
    %357 = arith.mulf %356, %353 : vector<8x128xf32>
    %358 = arith.select %355, %353, %357 : vector<8x128xi1>, vector<8x128xf32>
    %359 = arith.truncf %358 : vector<8x128xf32> to vector<8x128xbf16>
    %c288 = arith.constant 288 : index
    %c0_129 = arith.constant 0 : index
    %360 = vector.load %arg4[%c288, %c0_129] : memref<416x128xbf16, #tpu.memory_space<vmem>>, vector<128x32xbf16>
    %cst_130 = arith.constant dense<0.000000e+00> : vector<8x32xf32>
    %361 = tpu.matmul %359, %360, %cst_130 {dimension_numbers = #tpu.dot_dimension_numbers<[1], [0], [0], [1], [0, 0, 1, 1], [], []>} : vector<8x128xbf16>, vector<128x32xbf16>, vector<8x32xf32> -> vector<8x32xf32>
    %c18 = arith.constant 18 : index
    %c0_131 = arith.constant 0 : index
    %362 = vector.load %arg5[%c18, %c0_131] : memref<48x128xf32, #tpu.memory_space<vmem>>, vector<1x32xf32>
    %363 = vector.broadcast %362 : vector<1x32xf32> to vector<8x32xf32>
    %364 = arith.addf %361, %363 : vector<8x32xf32>
    %365 = arith.addf %347, %364 : vector<8x32xf32>
    %cst_132 = arith.constant dense<0.000000e+00> : vector<8xf32>
    %366 = vector.multi_reduction <add>, %365, %cst_132 [1] : vector<8x32xf32> to vector<8xf32>
    %367 = vector.shape_cast %366 : vector<8xf32> to vector<8x1xf32>
    %cst_133 = arith.constant 3.200000e+01 : f32
    %368 = vector.broadcast %cst_133 : f32 to vector<8x1xf32>
    %369 = arith.divf %367, %368 : vector<8x1xf32>
    %370 = vector.broadcast %369 : vector<8x1xf32> to vector<8x32xf32>
    %371 = arith.subf %365, %370 : vector<8x32xf32>
    %372 = arith.mulf %371, %371 : vector<8x32xf32>
    %cst_134 = arith.constant dense<0.000000e+00> : vector<8xf32>
    %373 = vector.multi_reduction <add>, %372, %cst_134 [1] : vector<8x32xf32> to vector<8xf32>
    %374 = vector.shape_cast %373 : vector<8xf32> to vector<8x1xf32>
    %cst_135 = arith.constant 3.200000e+01 : f32
    %375 = vector.broadcast %cst_135 : f32 to vector<8x1xf32>
    %376 = arith.divf %374, %375 : vector<8x1xf32>
    %cst_136 = arith.constant 9.99999974E-6 : f32
    %377 = vector.broadcast %cst_136 : f32 to vector<8x1xf32>
    %378 = arith.addf %376, %377 : vector<8x1xf32>
    %379 = math.rsqrt %378 : vector<8x1xf32>
    %380 = vector.broadcast %379 : vector<8x1xf32> to vector<8x32xf32>
    %381 = arith.mulf %371, %380 : vector<8x32xf32>
    %c21 = arith.constant 21 : index
    %c0_137 = arith.constant 0 : index
    %382 = vector.load %arg5[%c21, %c0_137] : memref<48x128xf32, #tpu.memory_space<vmem>>, vector<1x32xf32>
    %383 = vector.broadcast %382 : vector<1x32xf32> to vector<8x32xf32>
    %384 = arith.mulf %381, %383 : vector<8x32xf32>
    %c22 = arith.constant 22 : index
    %c0_138 = arith.constant 0 : index
    %385 = vector.load %arg5[%c22, %c0_138] : memref<48x128xf32, #tpu.memory_space<vmem>>, vector<1x32xf32>
    %386 = vector.broadcast %385 : vector<1x32xf32> to vector<8x32xf32>
    %387 = arith.addf %384, %386 : vector<8x32xf32>
    %388 = arith.truncf %387 : vector<8x32xf32> to vector<8x32xbf16>
    %c96_139 = arith.constant 96 : index
    %c0_140 = arith.constant 0 : index
    %389 = vector.load %arg4[%c96_139, %c0_140] : memref<416x128xbf16, #tpu.memory_space<vmem>>, vector<32x96xbf16>
    %cst_141 = arith.constant dense<0.000000e+00> : vector<8x96xf32>
    %390 = tpu.matmul %388, %389, %cst_141 {dimension_numbers = #tpu.dot_dimension_numbers<[1], [0], [0], [1], [0, 0, 1, 1], [], []>} : vector<8x32xbf16>, vector<32x96xbf16>, vector<8x96xf32> -> vector<8x96xf32>
    %391 = vector.extract_strided_slice %390 {offsets = [0, 0], sizes = [8, 8], strides = [1, 1]} : vector<8x96xf32> to vector<8x8xf32>
    %392 = vector.extract_strided_slice %390 {offsets = [0, 32], sizes = [8, 8], strides = [1, 1]} : vector<8x96xf32> to vector<8x8xf32>
    %393 = vector.extract_strided_slice %390 {offsets = [0, 64], sizes = [8, 8], strides = [1, 1]} : vector<8x96xf32> to vector<8x8xf32>
    %394 = arith.truncf %391 : vector<8x8xf32> to vector<8x8xbf16>
    %395 = arith.truncf %392 : vector<8x8xf32> to vector<8x8xbf16>
    %cst_142 = arith.constant dense<0.000000e+00> : vector<8x8xf32>
    %396 = tpu.matmul %394, %395, %cst_142 {dimension_numbers = #tpu.dot_dimension_numbers<[1], [1], [0], [0], [0, 0, 1, 0], [], []>} : vector<8x8xbf16>, vector<8x8xbf16>, vector<8x8xf32> -> vector<8x8xf32>
    %cst_143 = arith.constant dense<0xFF800000> : vector<8xf32>
    %397 = vector.multi_reduction <maximumf>, %396, %cst_143 [1] : vector<8x8xf32> to vector<8xf32>
    %398 = vector.shape_cast %397 : vector<8xf32> to vector<8x1xf32>
    %399 = vector.broadcast %398 : vector<8x1xf32> to vector<8x8xf32>
    %400 = arith.subf %396, %399 : vector<8x8xf32>
    %401 = math.exp %400 : vector<8x8xf32>
    %cst_144 = arith.constant dense<0.000000e+00> : vector<8xf32>
    %402 = vector.multi_reduction <add>, %401, %cst_144 [1] : vector<8x8xf32> to vector<8xf32>
    %403 = vector.shape_cast %402 : vector<8xf32> to vector<8x1xf32>
    %404 = tpu.reciprocal %403 {approx = true} : vector<8x1xf32> -> vector<8x1xf32>
    %405 = arith.mulf %403, %404 : vector<8x1xf32>
    %cst_145 = arith.constant 2.000000e+00 : f32
    %406 = vector.broadcast %cst_145 : f32 to vector<8x1xf32>
    %407 = arith.subf %406, %405 : vector<8x1xf32>
    %408 = arith.mulf %404, %407 : vector<8x1xf32>
    %409 = vector.broadcast %408 : vector<8x1xf32> to vector<8x8xf32>
    %410 = arith.mulf %401, %409 : vector<8x8xf32>
    %411 = arith.truncf %410 : vector<8x8xf32> to vector<8x8xbf16>
    %412 = arith.truncf %393 : vector<8x8xf32> to vector<8x8xbf16>
    %cst_146 = arith.constant dense<0.000000e+00> : vector<8x8xf32>
    %413 = tpu.matmul %411, %412, %cst_146 {dimension_numbers = #tpu.dot_dimension_numbers<[1], [0], [0], [1], [0, 0, 1, 1], [], []>} : vector<8x8xbf16>, vector<8x8xbf16>, vector<8x8xf32> -> vector<8x8xf32>
    %414 = vector.extract_strided_slice %390 {offsets = [0, 8], sizes = [8, 8], strides = [1, 1]} : vector<8x96xf32> to vector<8x8xf32>
    %415 = vector.extract_strided_slice %390 {offsets = [0, 40], sizes = [8, 8], strides = [1, 1]} : vector<8x96xf32> to vector<8x8xf32>
    %416 = vector.extract_strided_slice %390 {offsets = [0, 72], sizes = [8, 8], strides = [1, 1]} : vector<8x96xf32> to vector<8x8xf32>
    %417 = arith.truncf %414 : vector<8x8xf32> to vector<8x8xbf16>
    %418 = arith.truncf %415 : vector<8x8xf32> to vector<8x8xbf16>
    %cst_147 = arith.constant dense<0.000000e+00> : vector<8x8xf32>
    %419 = tpu.matmul %417, %418, %cst_147 {dimension_numbers = #tpu.dot_dimension_numbers<[1], [1], [0], [0], [0, 0, 1, 0], [], []>} : vector<8x8xbf16>, vector<8x8xbf16>, vector<8x8xf32> -> vector<8x8xf32>
    %cst_148 = arith.constant dense<0xFF800000> : vector<8xf32>
    %420 = vector.multi_reduction <maximumf>, %419, %cst_148 [1] : vector<8x8xf32> to vector<8xf32>
    %421 = vector.shape_cast %420 : vector<8xf32> to vector<8x1xf32>
    %422 = vector.broadcast %421 : vector<8x1xf32> to vector<8x8xf32>
    %423 = arith.subf %419, %422 : vector<8x8xf32>
    %424 = math.exp %423 : vector<8x8xf32>
    %cst_149 = arith.constant dense<0.000000e+00> : vector<8xf32>
    %425 = vector.multi_reduction <add>, %424, %cst_149 [1] : vector<8x8xf32> to vector<8xf32>
    %426 = vector.shape_cast %425 : vector<8xf32> to vector<8x1xf32>
    %427 = tpu.reciprocal %426 {approx = true} : vector<8x1xf32> -> vector<8x1xf32>
    %428 = arith.mulf %426, %427 : vector<8x1xf32>
    %cst_150 = arith.constant 2.000000e+00 : f32
    %429 = vector.broadcast %cst_150 : f32 to vector<8x1xf32>
    %430 = arith.subf %429, %428 : vector<8x1xf32>
    %431 = arith.mulf %427, %430 : vector<8x1xf32>
    %432 = vector.broadcast %431 : vector<8x1xf32> to vector<8x8xf32>
    %433 = arith.mulf %424, %432 : vector<8x8xf32>
    %434 = arith.truncf %433 : vector<8x8xf32> to vector<8x8xbf16>
    %435 = arith.truncf %416 : vector<8x8xf32> to vector<8x8xbf16>
    %cst_151 = arith.constant dense<0.000000e+00> : vector<8x8xf32>
    %436 = tpu.matmul %434, %435, %cst_151 {dimension_numbers = #tpu.dot_dimension_numbers<[1], [0], [0], [1], [0, 0, 1, 1], [], []>} : vector<8x8xbf16>, vector<8x8xbf16>, vector<8x8xf32> -> vector<8x8xf32>
    %437 = vector.extract_strided_slice %390 {offsets = [0, 16], sizes = [8, 8], strides = [1, 1]} : vector<8x96xf32> to vector<8x8xf32>
    %438 = vector.extract_strided_slice %390 {offsets = [0, 48], sizes = [8, 8], strides = [1, 1]} : vector<8x96xf32> to vector<8x8xf32>
    %439 = vector.extract_strided_slice %390 {offsets = [0, 80], sizes = [8, 8], strides = [1, 1]} : vector<8x96xf32> to vector<8x8xf32>
    %440 = arith.truncf %437 : vector<8x8xf32> to vector<8x8xbf16>
    %441 = arith.truncf %438 : vector<8x8xf32> to vector<8x8xbf16>
    %cst_152 = arith.constant dense<0.000000e+00> : vector<8x8xf32>
    %442 = tpu.matmul %440, %441, %cst_152 {dimension_numbers = #tpu.dot_dimension_numbers<[1], [1], [0], [0], [0, 0, 1, 0], [], []>} : vector<8x8xbf16>, vector<8x8xbf16>, vector<8x8xf32> -> vector<8x8xf32>
    %cst_153 = arith.constant dense<0xFF800000> : vector<8xf32>
    %443 = vector.multi_reduction <maximumf>, %442, %cst_153 [1] : vector<8x8xf32> to vector<8xf32>
    %444 = vector.shape_cast %443 : vector<8xf32> to vector<8x1xf32>
    %445 = vector.broadcast %444 : vector<8x1xf32> to vector<8x8xf32>
    %446 = arith.subf %442, %445 : vector<8x8xf32>
    %447 = math.exp %446 : vector<8x8xf32>
    %cst_154 = arith.constant dense<0.000000e+00> : vector<8xf32>
    %448 = vector.multi_reduction <add>, %447, %cst_154 [1] : vector<8x8xf32> to vector<8xf32>
    %449 = vector.shape_cast %448 : vector<8xf32> to vector<8x1xf32>
    %450 = tpu.reciprocal %449 {approx = true} : vector<8x1xf32> -> vector<8x1xf32>
    %451 = arith.mulf %449, %450 : vector<8x1xf32>
    %cst_155 = arith.constant 2.000000e+00 : f32
    %452 = vector.broadcast %cst_155 : f32 to vector<8x1xf32>
    %453 = arith.subf %452, %451 : vector<8x1xf32>
    %454 = arith.mulf %450, %453 : vector<8x1xf32>
    %455 = vector.broadcast %454 : vector<8x1xf32> to vector<8x8xf32>
    %456 = arith.mulf %447, %455 : vector<8x8xf32>
    %457 = arith.truncf %456 : vector<8x8xf32> to vector<8x8xbf16>
    %458 = arith.truncf %439 : vector<8x8xf32> to vector<8x8xbf16>
    %cst_156 = arith.constant dense<0.000000e+00> : vector<8x8xf32>
    %459 = tpu.matmul %457, %458, %cst_156 {dimension_numbers = #tpu.dot_dimension_numbers<[1], [0], [0], [1], [0, 0, 1, 1], [], []>} : vector<8x8xbf16>, vector<8x8xbf16>, vector<8x8xf32> -> vector<8x8xf32>
    %460 = vector.extract_strided_slice %390 {offsets = [0, 24], sizes = [8, 8], strides = [1, 1]} : vector<8x96xf32> to vector<8x8xf32>
    %461 = vector.extract_strided_slice %390 {offsets = [0, 56], sizes = [8, 8], strides = [1, 1]} : vector<8x96xf32> to vector<8x8xf32>
    %462 = vector.extract_strided_slice %390 {offsets = [0, 88], sizes = [8, 8], strides = [1, 1]} : vector<8x96xf32> to vector<8x8xf32>
    %463 = arith.truncf %460 : vector<8x8xf32> to vector<8x8xbf16>
    %464 = arith.truncf %461 : vector<8x8xf32> to vector<8x8xbf16>
    %cst_157 = arith.constant dense<0.000000e+00> : vector<8x8xf32>
    %465 = tpu.matmul %463, %464, %cst_157 {dimension_numbers = #tpu.dot_dimension_numbers<[1], [1], [0], [0], [0, 0, 1, 0], [], []>} : vector<8x8xbf16>, vector<8x8xbf16>, vector<8x8xf32> -> vector<8x8xf32>
    %cst_158 = arith.constant dense<0xFF800000> : vector<8xf32>
    %466 = vector.multi_reduction <maximumf>, %465, %cst_158 [1] : vector<8x8xf32> to vector<8xf32>
    %467 = vector.shape_cast %466 : vector<8xf32> to vector<8x1xf32>
    %468 = vector.broadcast %467 : vector<8x1xf32> to vector<8x8xf32>
    %469 = arith.subf %465, %468 : vector<8x8xf32>
    %470 = math.exp %469 : vector<8x8xf32>
    %cst_159 = arith.constant dense<0.000000e+00> : vector<8xf32>
    %471 = vector.multi_reduction <add>, %470, %cst_159 [1] : vector<8x8xf32> to vector<8xf32>
    %472 = vector.shape_cast %471 : vector<8xf32> to vector<8x1xf32>
    %473 = tpu.reciprocal %472 {approx = true} : vector<8x1xf32> -> vector<8x1xf32>
    %474 = arith.mulf %472, %473 : vector<8x1xf32>
    %cst_160 = arith.constant 2.000000e+00 : f32
    %475 = vector.broadcast %cst_160 : f32 to vector<8x1xf32>
    %476 = arith.subf %475, %474 : vector<8x1xf32>
    %477 = arith.mulf %473, %476 : vector<8x1xf32>
    %478 = vector.broadcast %477 : vector<8x1xf32> to vector<8x8xf32>
    %479 = arith.mulf %470, %478 : vector<8x8xf32>
    %480 = arith.truncf %479 : vector<8x8xf32> to vector<8x8xbf16>
    %481 = arith.truncf %462 : vector<8x8xf32> to vector<8x8xbf16>
    %cst_161 = arith.constant dense<0.000000e+00> : vector<8x8xf32>
    %482 = tpu.matmul %480, %481, %cst_161 {dimension_numbers = #tpu.dot_dimension_numbers<[1], [0], [0], [1], [0, 0, 1, 1], [], []>} : vector<8x8xbf16>, vector<8x8xbf16>, vector<8x8xf32> -> vector<8x8xf32>
    %483 = tpu.concatenate %413, %436, %459, %482 in 1 : vector<8x8xf32>, vector<8x8xf32>, vector<8x8xf32>, vector<8x8xf32> -> vector<8x32xf32>
    %484 = arith.truncf %483 : vector<8x32xf32> to vector<8x32xbf16>
    %c96_162 = arith.constant 96 : index
    %c96_163 = arith.constant 96 : index
    %485 = vector.load %arg4[%c96_162, %c96_163] : memref<416x128xbf16, #tpu.memory_space<vmem>>, vector<32x32xbf16>
    %cst_164 = arith.constant dense<0.000000e+00> : vector<8x32xf32>
    %486 = tpu.matmul %484, %485, %cst_164 {dimension_numbers = #tpu.dot_dimension_numbers<[1], [0], [0], [1], [0, 0, 1, 1], [], []>} : vector<8x32xbf16>, vector<32x32xbf16>, vector<8x32xf32> -> vector<8x32xf32>
    %487 = arith.addf %486, %387 : vector<8x32xf32>
    %cst_165 = arith.constant dense<0.000000e+00> : vector<8xf32>
    %488 = vector.multi_reduction <add>, %487, %cst_165 [1] : vector<8x32xf32> to vector<8xf32>
    %489 = vector.shape_cast %488 : vector<8xf32> to vector<8x1xf32>
    %cst_166 = arith.constant 3.200000e+01 : f32
    %490 = vector.broadcast %cst_166 : f32 to vector<8x1xf32>
    %491 = arith.divf %489, %490 : vector<8x1xf32>
    %492 = vector.broadcast %491 : vector<8x1xf32> to vector<8x32xf32>
    %493 = arith.subf %487, %492 : vector<8x32xf32>
    %494 = arith.mulf %493, %493 : vector<8x32xf32>
    %cst_167 = arith.constant dense<0.000000e+00> : vector<8xf32>
    %495 = vector.multi_reduction <add>, %494, %cst_167 [1] : vector<8x32xf32> to vector<8xf32>
    %496 = vector.shape_cast %495 : vector<8xf32> to vector<8x1xf32>
    %cst_168 = arith.constant 3.200000e+01 : f32
    %497 = vector.broadcast %cst_168 : f32 to vector<8x1xf32>
    %498 = arith.divf %496, %497 : vector<8x1xf32>
    %cst_169 = arith.constant 9.99999974E-6 : f32
    %499 = vector.broadcast %cst_169 : f32 to vector<8x1xf32>
    %500 = arith.addf %498, %499 : vector<8x1xf32>
    %501 = math.rsqrt %500 : vector<8x1xf32>
    %502 = vector.broadcast %501 : vector<8x1xf32> to vector<8x32xf32>
    %503 = arith.mulf %493, %502 : vector<8x32xf32>
    %c25 = arith.constant 25 : index
    %c0_170 = arith.constant 0 : index
    %504 = vector.load %arg5[%c25, %c0_170] : memref<48x128xf32, #tpu.memory_space<vmem>>, vector<1x32xf32>
    %505 = vector.broadcast %504 : vector<1x32xf32> to vector<8x32xf32>
    %506 = arith.mulf %503, %505 : vector<8x32xf32>
    %c26 = arith.constant 26 : index
    %c0_171 = arith.constant 0 : index
    %507 = vector.load %arg5[%c26, %c0_171] : memref<48x128xf32, #tpu.memory_space<vmem>>, vector<1x32xf32>
    %508 = vector.broadcast %507 : vector<1x32xf32> to vector<8x32xf32>
    %509 = arith.addf %506, %508 : vector<8x32xf32>
    %510 = arith.truncf %509 : vector<8x32xf32> to vector<8x32xbf16>
    %c128 = arith.constant 128 : index
    %c0_172 = arith.constant 0 : index
    %511 = vector.load %arg4[%c128, %c0_172] : memref<416x128xbf16, #tpu.memory_space<vmem>>, vector<32x128xbf16>
    %cst_173 = arith.constant dense<0.000000e+00> : vector<8x128xf32>
    %512 = tpu.matmul %510, %511, %cst_173 {dimension_numbers = #tpu.dot_dimension_numbers<[1], [0], [0], [1], [0, 0, 1, 1], [], []>} : vector<8x32xbf16>, vector<32x128xbf16>, vector<8x128xf32> -> vector<8x128xf32>
    %c23 = arith.constant 23 : index
    %c0_174 = arith.constant 0 : index
    %513 = vector.load %arg5[%c23, %c0_174] : memref<48x128xf32, #tpu.memory_space<vmem>>, vector<1x128xf32>
    %514 = vector.broadcast %513 : vector<1x128xf32> to vector<8x128xf32>
    %515 = arith.addf %512, %514 : vector<8x128xf32>
    %cst_175 = arith.constant 0.000000e+00 : f32
    %516 = vector.broadcast %cst_175 : f32 to vector<8x128xf32>
    %517 = arith.cmpf ogt, %515, %516 : vector<8x128xf32>
    %cst_176 = arith.constant 2.000000e-01 : f32
    %518 = vector.broadcast %cst_176 : f32 to vector<8x128xf32>
    %519 = arith.mulf %518, %515 : vector<8x128xf32>
    %520 = arith.select %517, %515, %519 : vector<8x128xi1>, vector<8x128xf32>
    %521 = arith.truncf %520 : vector<8x128xf32> to vector<8x128xbf16>
    %c288_177 = arith.constant 288 : index
    %c32_178 = arith.constant 32 : index
    %522 = vector.load %arg4[%c288_177, %c32_178] : memref<416x128xbf16, #tpu.memory_space<vmem>>, vector<128x32xbf16>
    %cst_179 = arith.constant dense<0.000000e+00> : vector<8x32xf32>
    %523 = tpu.matmul %521, %522, %cst_179 {dimension_numbers = #tpu.dot_dimension_numbers<[1], [0], [0], [1], [0, 0, 1, 1], [], []>} : vector<8x128xbf16>, vector<128x32xbf16>, vector<8x32xf32> -> vector<8x32xf32>
    %c24 = arith.constant 24 : index
    %c0_180 = arith.constant 0 : index
    %524 = vector.load %arg5[%c24, %c0_180] : memref<48x128xf32, #tpu.memory_space<vmem>>, vector<1x32xf32>
    %525 = vector.broadcast %524 : vector<1x32xf32> to vector<8x32xf32>
    %526 = arith.addf %523, %525 : vector<8x32xf32>
    %527 = arith.addf %509, %526 : vector<8x32xf32>
    %cst_181 = arith.constant dense<0.000000e+00> : vector<8xf32>
    %528 = vector.multi_reduction <add>, %527, %cst_181 [1] : vector<8x32xf32> to vector<8xf32>
    %529 = vector.shape_cast %528 : vector<8xf32> to vector<8x1xf32>
    %cst_182 = arith.constant 3.200000e+01 : f32
    %530 = vector.broadcast %cst_182 : f32 to vector<8x1xf32>
    %531 = arith.divf %529, %530 : vector<8x1xf32>
    %532 = vector.broadcast %531 : vector<8x1xf32> to vector<8x32xf32>
    %533 = arith.subf %527, %532 : vector<8x32xf32>
    %534 = arith.mulf %533, %533 : vector<8x32xf32>
    %cst_183 = arith.constant dense<0.000000e+00> : vector<8xf32>
    %535 = vector.multi_reduction <add>, %534, %cst_183 [1] : vector<8x32xf32> to vector<8xf32>
    %536 = vector.shape_cast %535 : vector<8xf32> to vector<8x1xf32>
    %cst_184 = arith.constant 3.200000e+01 : f32
    %537 = vector.broadcast %cst_184 : f32 to vector<8x1xf32>
    %538 = arith.divf %536, %537 : vector<8x1xf32>
    %cst_185 = arith.constant 9.99999974E-6 : f32
    %539 = vector.broadcast %cst_185 : f32 to vector<8x1xf32>
    %540 = arith.addf %538, %539 : vector<8x1xf32>
    %541 = math.rsqrt %540 : vector<8x1xf32>
    %542 = vector.broadcast %541 : vector<8x1xf32> to vector<8x32xf32>
    %543 = arith.mulf %533, %542 : vector<8x32xf32>
    %c27 = arith.constant 27 : index
    %c0_186 = arith.constant 0 : index
    %544 = vector.load %arg5[%c27, %c0_186] : memref<48x128xf32, #tpu.memory_space<vmem>>, vector<1x32xf32>
    %545 = vector.broadcast %544 : vector<1x32xf32> to vector<8x32xf32>
    %546 = arith.mulf %543, %545 : vector<8x32xf32>
    %c28 = arith.constant 28 : index
    %c0_187 = arith.constant 0 : index
    %547 = vector.load %arg5[%c28, %c0_187] : memref<48x128xf32, #tpu.memory_space<vmem>>, vector<1x32xf32>
    %548 = vector.broadcast %547 : vector<1x32xf32> to vector<8x32xf32>
    %549 = arith.addf %546, %548 : vector<8x32xf32>
    %550 = arith.truncf %225 : vector<12x32xf32> to vector<12x32xbf16>
    %c160 = arith.constant 160 : index
    %c0_188 = arith.constant 0 : index
    %551 = vector.load %arg4[%c160, %c0_188] : memref<416x128xbf16, #tpu.memory_space<vmem>>, vector<32x96xbf16>
    %cst_189 = arith.constant dense<0.000000e+00> : vector<12x96xf32>
    %552 = tpu.matmul %550, %551, %cst_189 {dimension_numbers = #tpu.dot_dimension_numbers<[1], [0], [0], [1], [0, 0, 1, 1], [], []>} : vector<12x32xbf16>, vector<32x96xbf16>, vector<12x96xf32> -> vector<12x96xf32>
    %553 = vector.extract_strided_slice %552 {offsets = [0, 0], sizes = [12, 8], strides = [1, 1]} : vector<12x96xf32> to vector<12x8xf32>
    %554 = vector.extract_strided_slice %552 {offsets = [0, 32], sizes = [12, 8], strides = [1, 1]} : vector<12x96xf32> to vector<12x8xf32>
    %555 = vector.extract_strided_slice %552 {offsets = [0, 64], sizes = [12, 8], strides = [1, 1]} : vector<12x96xf32> to vector<12x8xf32>
    %556 = arith.truncf %553 : vector<12x8xf32> to vector<12x8xbf16>
    %557 = arith.truncf %554 : vector<12x8xf32> to vector<12x8xbf16>
    %cst_190 = arith.constant dense<0.000000e+00> : vector<12x12xf32>
    %558 = tpu.matmul %556, %557, %cst_190 {dimension_numbers = #tpu.dot_dimension_numbers<[1], [1], [0], [0], [0, 0, 1, 0], [], []>} : vector<12x8xbf16>, vector<12x8xbf16>, vector<12x12xf32> -> vector<12x12xf32>
    %cst_191 = arith.constant dense<0xFF800000> : vector<12xf32>
    %559 = vector.multi_reduction <maximumf>, %558, %cst_191 [1] : vector<12x12xf32> to vector<12xf32>
    %560 = vector.shape_cast %559 : vector<12xf32> to vector<12x1xf32>
    %561 = vector.broadcast %560 : vector<12x1xf32> to vector<12x12xf32>
    %562 = arith.subf %558, %561 : vector<12x12xf32>
    %563 = math.exp %562 : vector<12x12xf32>
    %cst_192 = arith.constant dense<0.000000e+00> : vector<12xf32>
    %564 = vector.multi_reduction <add>, %563, %cst_192 [1] : vector<12x12xf32> to vector<12xf32>
    %565 = vector.shape_cast %564 : vector<12xf32> to vector<12x1xf32>
    %566 = tpu.reciprocal %565 {approx = true} : vector<12x1xf32> -> vector<12x1xf32>
    %567 = arith.mulf %565, %566 : vector<12x1xf32>
    %cst_193 = arith.constant 2.000000e+00 : f32
    %568 = vector.broadcast %cst_193 : f32 to vector<12x1xf32>
    %569 = arith.subf %568, %567 : vector<12x1xf32>
    %570 = arith.mulf %566, %569 : vector<12x1xf32>
    %571 = vector.broadcast %570 : vector<12x1xf32> to vector<12x12xf32>
    %572 = arith.mulf %563, %571 : vector<12x12xf32>
    %573 = arith.truncf %572 : vector<12x12xf32> to vector<12x12xbf16>
    %574 = arith.truncf %555 : vector<12x8xf32> to vector<12x8xbf16>
    %cst_194 = arith.constant dense<0.000000e+00> : vector<12x8xf32>
    %575 = tpu.matmul %573, %574, %cst_194 {dimension_numbers = #tpu.dot_dimension_numbers<[1], [0], [0], [1], [0, 0, 1, 1], [], []>} : vector<12x12xbf16>, vector<12x8xbf16>, vector<12x8xf32> -> vector<12x8xf32>
    %576 = vector.extract_strided_slice %552 {offsets = [0, 8], sizes = [12, 8], strides = [1, 1]} : vector<12x96xf32> to vector<12x8xf32>
    %577 = vector.extract_strided_slice %552 {offsets = [0, 40], sizes = [12, 8], strides = [1, 1]} : vector<12x96xf32> to vector<12x8xf32>
    %578 = vector.extract_strided_slice %552 {offsets = [0, 72], sizes = [12, 8], strides = [1, 1]} : vector<12x96xf32> to vector<12x8xf32>
    %579 = arith.truncf %576 : vector<12x8xf32> to vector<12x8xbf16>
    %580 = arith.truncf %577 : vector<12x8xf32> to vector<12x8xbf16>
    %cst_195 = arith.constant dense<0.000000e+00> : vector<12x12xf32>
    %581 = tpu.matmul %579, %580, %cst_195 {dimension_numbers = #tpu.dot_dimension_numbers<[1], [1], [0], [0], [0, 0, 1, 0], [], []>} : vector<12x8xbf16>, vector<12x8xbf16>, vector<12x12xf32> -> vector<12x12xf32>
    %cst_196 = arith.constant dense<0xFF800000> : vector<12xf32>
    %582 = vector.multi_reduction <maximumf>, %581, %cst_196 [1] : vector<12x12xf32> to vector<12xf32>
    %583 = vector.shape_cast %582 : vector<12xf32> to vector<12x1xf32>
    %584 = vector.broadcast %583 : vector<12x1xf32> to vector<12x12xf32>
    %585 = arith.subf %581, %584 : vector<12x12xf32>
    %586 = math.exp %585 : vector<12x12xf32>
    %cst_197 = arith.constant dense<0.000000e+00> : vector<12xf32>
    %587 = vector.multi_reduction <add>, %586, %cst_197 [1] : vector<12x12xf32> to vector<12xf32>
    %588 = vector.shape_cast %587 : vector<12xf32> to vector<12x1xf32>
    %589 = tpu.reciprocal %588 {approx = true} : vector<12x1xf32> -> vector<12x1xf32>
    %590 = arith.mulf %588, %589 : vector<12x1xf32>
    %cst_198 = arith.constant 2.000000e+00 : f32
    %591 = vector.broadcast %cst_198 : f32 to vector<12x1xf32>
    %592 = arith.subf %591, %590 : vector<12x1xf32>
    %593 = arith.mulf %589, %592 : vector<12x1xf32>
    %594 = vector.broadcast %593 : vector<12x1xf32> to vector<12x12xf32>
    %595 = arith.mulf %586, %594 : vector<12x12xf32>
    %596 = arith.truncf %595 : vector<12x12xf32> to vector<12x12xbf16>
    %597 = arith.truncf %578 : vector<12x8xf32> to vector<12x8xbf16>
    %cst_199 = arith.constant dense<0.000000e+00> : vector<12x8xf32>
    %598 = tpu.matmul %596, %597, %cst_199 {dimension_numbers = #tpu.dot_dimension_numbers<[1], [0], [0], [1], [0, 0, 1, 1], [], []>} : vector<12x12xbf16>, vector<12x8xbf16>, vector<12x8xf32> -> vector<12x8xf32>
    %599 = vector.extract_strided_slice %552 {offsets = [0, 16], sizes = [12, 8], strides = [1, 1]} : vector<12x96xf32> to vector<12x8xf32>
    %600 = vector.extract_strided_slice %552 {offsets = [0, 48], sizes = [12, 8], strides = [1, 1]} : vector<12x96xf32> to vector<12x8xf32>
    %601 = vector.extract_strided_slice %552 {offsets = [0, 80], sizes = [12, 8], strides = [1, 1]} : vector<12x96xf32> to vector<12x8xf32>
    %602 = arith.truncf %599 : vector<12x8xf32> to vector<12x8xbf16>
    %603 = arith.truncf %600 : vector<12x8xf32> to vector<12x8xbf16>
    %cst_200 = arith.constant dense<0.000000e+00> : vector<12x12xf32>
    %604 = tpu.matmul %602, %603, %cst_200 {dimension_numbers = #tpu.dot_dimension_numbers<[1], [1], [0], [0], [0, 0, 1, 0], [], []>} : vector<12x8xbf16>, vector<12x8xbf16>, vector<12x12xf32> -> vector<12x12xf32>
    %cst_201 = arith.constant dense<0xFF800000> : vector<12xf32>
    %605 = vector.multi_reduction <maximumf>, %604, %cst_201 [1] : vector<12x12xf32> to vector<12xf32>
    %606 = vector.shape_cast %605 : vector<12xf32> to vector<12x1xf32>
    %607 = vector.broadcast %606 : vector<12x1xf32> to vector<12x12xf32>
    %608 = arith.subf %604, %607 : vector<12x12xf32>
    %609 = math.exp %608 : vector<12x12xf32>
    %cst_202 = arith.constant dense<0.000000e+00> : vector<12xf32>
    %610 = vector.multi_reduction <add>, %609, %cst_202 [1] : vector<12x12xf32> to vector<12xf32>
    %611 = vector.shape_cast %610 : vector<12xf32> to vector<12x1xf32>
    %612 = tpu.reciprocal %611 {approx = true} : vector<12x1xf32> -> vector<12x1xf32>
    %613 = arith.mulf %611, %612 : vector<12x1xf32>
    %cst_203 = arith.constant 2.000000e+00 : f32
    %614 = vector.broadcast %cst_203 : f32 to vector<12x1xf32>
    %615 = arith.subf %614, %613 : vector<12x1xf32>
    %616 = arith.mulf %612, %615 : vector<12x1xf32>
    %617 = vector.broadcast %616 : vector<12x1xf32> to vector<12x12xf32>
    %618 = arith.mulf %609, %617 : vector<12x12xf32>
    %619 = arith.truncf %618 : vector<12x12xf32> to vector<12x12xbf16>
    %620 = arith.truncf %601 : vector<12x8xf32> to vector<12x8xbf16>
    %cst_204 = arith.constant dense<0.000000e+00> : vector<12x8xf32>
    %621 = tpu.matmul %619, %620, %cst_204 {dimension_numbers = #tpu.dot_dimension_numbers<[1], [0], [0], [1], [0, 0, 1, 1], [], []>} : vector<12x12xbf16>, vector<12x8xbf16>, vector<12x8xf32> -> vector<12x8xf32>
    %622 = vector.extract_strided_slice %552 {offsets = [0, 24], sizes = [12, 8], strides = [1, 1]} : vector<12x96xf32> to vector<12x8xf32>
    %623 = vector.extract_strided_slice %552 {offsets = [0, 56], sizes = [12, 8], strides = [1, 1]} : vector<12x96xf32> to vector<12x8xf32>
    %624 = vector.extract_strided_slice %552 {offsets = [0, 88], sizes = [12, 8], strides = [1, 1]} : vector<12x96xf32> to vector<12x8xf32>
    %625 = arith.truncf %622 : vector<12x8xf32> to vector<12x8xbf16>
    %626 = arith.truncf %623 : vector<12x8xf32> to vector<12x8xbf16>
    %cst_205 = arith.constant dense<0.000000e+00> : vector<12x12xf32>
    %627 = tpu.matmul %625, %626, %cst_205 {dimension_numbers = #tpu.dot_dimension_numbers<[1], [1], [0], [0], [0, 0, 1, 0], [], []>} : vector<12x8xbf16>, vector<12x8xbf16>, vector<12x12xf32> -> vector<12x12xf32>
    %cst_206 = arith.constant dense<0xFF800000> : vector<12xf32>
    %628 = vector.multi_reduction <maximumf>, %627, %cst_206 [1] : vector<12x12xf32> to vector<12xf32>
    %629 = vector.shape_cast %628 : vector<12xf32> to vector<12x1xf32>
    %630 = vector.broadcast %629 : vector<12x1xf32> to vector<12x12xf32>
    %631 = arith.subf %627, %630 : vector<12x12xf32>
    %632 = math.exp %631 : vector<12x12xf32>
    %cst_207 = arith.constant dense<0.000000e+00> : vector<12xf32>
    %633 = vector.multi_reduction <add>, %632, %cst_207 [1] : vector<12x12xf32> to vector<12xf32>
    %634 = vector.shape_cast %633 : vector<12xf32> to vector<12x1xf32>
    %635 = tpu.reciprocal %634 {approx = true} : vector<12x1xf32> -> vector<12x1xf32>
    %636 = arith.mulf %634, %635 : vector<12x1xf32>
    %cst_208 = arith.constant 2.000000e+00 : f32
    %637 = vector.broadcast %cst_208 : f32 to vector<12x1xf32>
    %638 = arith.subf %637, %636 : vector<12x1xf32>
    %639 = arith.mulf %635, %638 : vector<12x1xf32>
    %640 = vector.broadcast %639 : vector<12x1xf32> to vector<12x12xf32>
    %641 = arith.mulf %632, %640 : vector<12x12xf32>
    %642 = arith.truncf %641 : vector<12x12xf32> to vector<12x12xbf16>
    %643 = arith.truncf %624 : vector<12x8xf32> to vector<12x8xbf16>
    %cst_209 = arith.constant dense<0.000000e+00> : vector<12x8xf32>
    %644 = tpu.matmul %642, %643, %cst_209 {dimension_numbers = #tpu.dot_dimension_numbers<[1], [0], [0], [1], [0, 0, 1, 1], [], []>} : vector<12x12xbf16>, vector<12x8xbf16>, vector<12x8xf32> -> vector<12x8xf32>
    %645 = tpu.concatenate %575, %598, %621, %644 in 1 : vector<12x8xf32>, vector<12x8xf32>, vector<12x8xf32>, vector<12x8xf32> -> vector<12x32xf32>
    %646 = arith.truncf %645 : vector<12x32xf32> to vector<12x32xbf16>
    %c160_210 = arith.constant 160 : index
    %c96_211 = arith.constant 96 : index
    %647 = vector.load %arg4[%c160_210, %c96_211] : memref<416x128xbf16, #tpu.memory_space<vmem>>, vector<32x32xbf16>
    %cst_212 = arith.constant dense<0.000000e+00> : vector<12x32xf32>
    %648 = tpu.matmul %646, %647, %cst_212 {dimension_numbers = #tpu.dot_dimension_numbers<[1], [0], [0], [1], [0, 0, 1, 1], [], []>} : vector<12x32xbf16>, vector<32x32xbf16>, vector<12x32xf32> -> vector<12x32xf32>
    %649 = arith.addf %648, %225 : vector<12x32xf32>
    %cst_213 = arith.constant dense<0.000000e+00> : vector<12xf32>
    %650 = vector.multi_reduction <add>, %649, %cst_213 [1] : vector<12x32xf32> to vector<12xf32>
    %651 = vector.shape_cast %650 : vector<12xf32> to vector<12x1xf32>
    %cst_214 = arith.constant 3.200000e+01 : f32
    %652 = vector.broadcast %cst_214 : f32 to vector<12x1xf32>
    %653 = arith.divf %651, %652 : vector<12x1xf32>
    %654 = vector.broadcast %653 : vector<12x1xf32> to vector<12x32xf32>
    %655 = arith.subf %649, %654 : vector<12x32xf32>
    %656 = arith.mulf %655, %655 : vector<12x32xf32>
    %cst_215 = arith.constant dense<0.000000e+00> : vector<12xf32>
    %657 = vector.multi_reduction <add>, %656, %cst_215 [1] : vector<12x32xf32> to vector<12xf32>
    %658 = vector.shape_cast %657 : vector<12xf32> to vector<12x1xf32>
    %cst_216 = arith.constant 3.200000e+01 : f32
    %659 = vector.broadcast %cst_216 : f32 to vector<12x1xf32>
    %660 = arith.divf %658, %659 : vector<12x1xf32>
    %cst_217 = arith.constant 9.99999974E-6 : f32
    %661 = vector.broadcast %cst_217 : f32 to vector<12x1xf32>
    %662 = arith.addf %660, %661 : vector<12x1xf32>
    %663 = math.rsqrt %662 : vector<12x1xf32>
    %664 = vector.broadcast %663 : vector<12x1xf32> to vector<12x32xf32>
    %665 = arith.mulf %655, %664 : vector<12x32xf32>
    %c31 = arith.constant 31 : index
    %c0_218 = arith.constant 0 : index
    %666 = vector.load %arg5[%c31, %c0_218] : memref<48x128xf32, #tpu.memory_space<vmem>>, vector<1x32xf32>
    %667 = vector.broadcast %666 : vector<1x32xf32> to vector<12x32xf32>
    %668 = arith.mulf %665, %667 : vector<12x32xf32>
    %c32_219 = arith.constant 32 : index
    %c0_220 = arith.constant 0 : index
    %669 = vector.load %arg5[%c32_219, %c0_220] : memref<48x128xf32, #tpu.memory_space<vmem>>, vector<1x32xf32>
    %670 = vector.broadcast %669 : vector<1x32xf32> to vector<12x32xf32>
    %671 = arith.addf %668, %670 : vector<12x32xf32>
    %672 = arith.truncf %671 : vector<12x32xf32> to vector<12x32xbf16>
    %c192 = arith.constant 192 : index
    %c0_221 = arith.constant 0 : index
    %673 = vector.load %arg4[%c192, %c0_221] : memref<416x128xbf16, #tpu.memory_space<vmem>>, vector<32x128xbf16>
    %cst_222 = arith.constant dense<0.000000e+00> : vector<12x128xf32>
    %674 = tpu.matmul %672, %673, %cst_222 {dimension_numbers = #tpu.dot_dimension_numbers<[1], [0], [0], [1], [0, 0, 1, 1], [], []>} : vector<12x32xbf16>, vector<32x128xbf16>, vector<12x128xf32> -> vector<12x128xf32>
    %c29 = arith.constant 29 : index
    %c0_223 = arith.constant 0 : index
    %675 = vector.load %arg5[%c29, %c0_223] : memref<48x128xf32, #tpu.memory_space<vmem>>, vector<1x128xf32>
    %676 = vector.broadcast %675 : vector<1x128xf32> to vector<12x128xf32>
    %677 = arith.addf %674, %676 : vector<12x128xf32>
    %cst_224 = arith.constant 0.000000e+00 : f32
    %678 = vector.broadcast %cst_224 : f32 to vector<12x128xf32>
    %679 = arith.cmpf ogt, %677, %678 : vector<12x128xf32>
    %cst_225 = arith.constant 2.000000e-01 : f32
    %680 = vector.broadcast %cst_225 : f32 to vector<12x128xf32>
    %681 = arith.mulf %680, %677 : vector<12x128xf32>
    %682 = arith.select %679, %677, %681 : vector<12x128xi1>, vector<12x128xf32>
    %683 = arith.truncf %682 : vector<12x128xf32> to vector<12x128xbf16>
    %c288_226 = arith.constant 288 : index
    %c64_227 = arith.constant 64 : index
    %684 = vector.load %arg4[%c288_226, %c64_227] : memref<416x128xbf16, #tpu.memory_space<vmem>>, vector<128x32xbf16>
    %cst_228 = arith.constant dense<0.000000e+00> : vector<12x32xf32>
    %685 = tpu.matmul %683, %684, %cst_228 {dimension_numbers = #tpu.dot_dimension_numbers<[1], [0], [0], [1], [0, 0, 1, 1], [], []>} : vector<12x128xbf16>, vector<128x32xbf16>, vector<12x32xf32> -> vector<12x32xf32>
    %c30 = arith.constant 30 : index
    %c0_229 = arith.constant 0 : index
    %686 = vector.load %arg5[%c30, %c0_229] : memref<48x128xf32, #tpu.memory_space<vmem>>, vector<1x32xf32>
    %687 = vector.broadcast %686 : vector<1x32xf32> to vector<12x32xf32>
    %688 = arith.addf %685, %687 : vector<12x32xf32>
    %689 = arith.addf %671, %688 : vector<12x32xf32>
    %cst_230 = arith.constant dense<0.000000e+00> : vector<12xf32>
    %690 = vector.multi_reduction <add>, %689, %cst_230 [1] : vector<12x32xf32> to vector<12xf32>
    %691 = vector.shape_cast %690 : vector<12xf32> to vector<12x1xf32>
    %cst_231 = arith.constant 3.200000e+01 : f32
    %692 = vector.broadcast %cst_231 : f32 to vector<12x1xf32>
    %693 = arith.divf %691, %692 : vector<12x1xf32>
    %694 = vector.broadcast %693 : vector<12x1xf32> to vector<12x32xf32>
    %695 = arith.subf %689, %694 : vector<12x32xf32>
    %696 = arith.mulf %695, %695 : vector<12x32xf32>
    %cst_232 = arith.constant dense<0.000000e+00> : vector<12xf32>
    %697 = vector.multi_reduction <add>, %696, %cst_232 [1] : vector<12x32xf32> to vector<12xf32>
    %698 = vector.shape_cast %697 : vector<12xf32> to vector<12x1xf32>
    %cst_233 = arith.constant 3.200000e+01 : f32
    %699 = vector.broadcast %cst_233 : f32 to vector<12x1xf32>
    %700 = arith.divf %698, %699 : vector<12x1xf32>
    %cst_234 = arith.constant 9.99999974E-6 : f32
    %701 = vector.broadcast %cst_234 : f32 to vector<12x1xf32>
    %702 = arith.addf %700, %701 : vector<12x1xf32>
    %703 = math.rsqrt %702 : vector<12x1xf32>
    %704 = vector.broadcast %703 : vector<12x1xf32> to vector<12x32xf32>
    %705 = arith.mulf %695, %704 : vector<12x32xf32>
    %c33 = arith.constant 33 : index
    %c0_235 = arith.constant 0 : index
    %706 = vector.load %arg5[%c33, %c0_235] : memref<48x128xf32, #tpu.memory_space<vmem>>, vector<1x32xf32>
    %707 = vector.broadcast %706 : vector<1x32xf32> to vector<12x32xf32>
    %708 = arith.mulf %705, %707 : vector<12x32xf32>
    %c34 = arith.constant 34 : index
    %c0_236 = arith.constant 0 : index
    %709 = vector.load %arg5[%c34, %c0_236] : memref<48x128xf32, #tpu.memory_space<vmem>>, vector<1x32xf32>
    %710 = vector.broadcast %709 : vector<1x32xf32> to vector<12x32xf32>
    %711 = arith.addf %708, %710 : vector<12x32xf32>
    %712 = arith.truncf %711 : vector<12x32xf32> to vector<12x32xbf16>
    %c224 = arith.constant 224 : index
    %c0_237 = arith.constant 0 : index
    %713 = vector.load %arg4[%c224, %c0_237] : memref<416x128xbf16, #tpu.memory_space<vmem>>, vector<32x96xbf16>
    %cst_238 = arith.constant dense<0.000000e+00> : vector<12x96xf32>
    %714 = tpu.matmul %712, %713, %cst_238 {dimension_numbers = #tpu.dot_dimension_numbers<[1], [0], [0], [1], [0, 0, 1, 1], [], []>} : vector<12x32xbf16>, vector<32x96xbf16>, vector<12x96xf32> -> vector<12x96xf32>
    %715 = vector.extract_strided_slice %714 {offsets = [0, 0], sizes = [12, 8], strides = [1, 1]} : vector<12x96xf32> to vector<12x8xf32>
    %716 = vector.extract_strided_slice %714 {offsets = [0, 32], sizes = [12, 8], strides = [1, 1]} : vector<12x96xf32> to vector<12x8xf32>
    %717 = vector.extract_strided_slice %714 {offsets = [0, 64], sizes = [12, 8], strides = [1, 1]} : vector<12x96xf32> to vector<12x8xf32>
    %718 = arith.truncf %715 : vector<12x8xf32> to vector<12x8xbf16>
    %719 = arith.truncf %716 : vector<12x8xf32> to vector<12x8xbf16>
    %cst_239 = arith.constant dense<0.000000e+00> : vector<12x12xf32>
    %720 = tpu.matmul %718, %719, %cst_239 {dimension_numbers = #tpu.dot_dimension_numbers<[1], [1], [0], [0], [0, 0, 1, 0], [], []>} : vector<12x8xbf16>, vector<12x8xbf16>, vector<12x12xf32> -> vector<12x12xf32>
    %cst_240 = arith.constant dense<0xFF800000> : vector<12xf32>
    %721 = vector.multi_reduction <maximumf>, %720, %cst_240 [1] : vector<12x12xf32> to vector<12xf32>
    %722 = vector.shape_cast %721 : vector<12xf32> to vector<12x1xf32>
    %723 = vector.broadcast %722 : vector<12x1xf32> to vector<12x12xf32>
    %724 = arith.subf %720, %723 : vector<12x12xf32>
    %725 = math.exp %724 : vector<12x12xf32>
    %cst_241 = arith.constant dense<0.000000e+00> : vector<12xf32>
    %726 = vector.multi_reduction <add>, %725, %cst_241 [1] : vector<12x12xf32> to vector<12xf32>
    %727 = vector.shape_cast %726 : vector<12xf32> to vector<12x1xf32>
    %728 = tpu.reciprocal %727 {approx = true} : vector<12x1xf32> -> vector<12x1xf32>
    %729 = arith.mulf %727, %728 : vector<12x1xf32>
    %cst_242 = arith.constant 2.000000e+00 : f32
    %730 = vector.broadcast %cst_242 : f32 to vector<12x1xf32>
    %731 = arith.subf %730, %729 : vector<12x1xf32>
    %732 = arith.mulf %728, %731 : vector<12x1xf32>
    %733 = vector.broadcast %732 : vector<12x1xf32> to vector<12x12xf32>
    %734 = arith.mulf %725, %733 : vector<12x12xf32>
    %735 = arith.truncf %734 : vector<12x12xf32> to vector<12x12xbf16>
    %736 = arith.truncf %717 : vector<12x8xf32> to vector<12x8xbf16>
    %cst_243 = arith.constant dense<0.000000e+00> : vector<12x8xf32>
    %737 = tpu.matmul %735, %736, %cst_243 {dimension_numbers = #tpu.dot_dimension_numbers<[1], [0], [0], [1], [0, 0, 1, 1], [], []>} : vector<12x12xbf16>, vector<12x8xbf16>, vector<12x8xf32> -> vector<12x8xf32>
    %738 = vector.extract_strided_slice %714 {offsets = [0, 8], sizes = [12, 8], strides = [1, 1]} : vector<12x96xf32> to vector<12x8xf32>
    %739 = vector.extract_strided_slice %714 {offsets = [0, 40], sizes = [12, 8], strides = [1, 1]} : vector<12x96xf32> to vector<12x8xf32>
    %740 = vector.extract_strided_slice %714 {offsets = [0, 72], sizes = [12, 8], strides = [1, 1]} : vector<12x96xf32> to vector<12x8xf32>
    %741 = arith.truncf %738 : vector<12x8xf32> to vector<12x8xbf16>
    %742 = arith.truncf %739 : vector<12x8xf32> to vector<12x8xbf16>
    %cst_244 = arith.constant dense<0.000000e+00> : vector<12x12xf32>
    %743 = tpu.matmul %741, %742, %cst_244 {dimension_numbers = #tpu.dot_dimension_numbers<[1], [1], [0], [0], [0, 0, 1, 0], [], []>} : vector<12x8xbf16>, vector<12x8xbf16>, vector<12x12xf32> -> vector<12x12xf32>
    %cst_245 = arith.constant dense<0xFF800000> : vector<12xf32>
    %744 = vector.multi_reduction <maximumf>, %743, %cst_245 [1] : vector<12x12xf32> to vector<12xf32>
    %745 = vector.shape_cast %744 : vector<12xf32> to vector<12x1xf32>
    %746 = vector.broadcast %745 : vector<12x1xf32> to vector<12x12xf32>
    %747 = arith.subf %743, %746 : vector<12x12xf32>
    %748 = math.exp %747 : vector<12x12xf32>
    %cst_246 = arith.constant dense<0.000000e+00> : vector<12xf32>
    %749 = vector.multi_reduction <add>, %748, %cst_246 [1] : vector<12x12xf32> to vector<12xf32>
    %750 = vector.shape_cast %749 : vector<12xf32> to vector<12x1xf32>
    %751 = tpu.reciprocal %750 {approx = true} : vector<12x1xf32> -> vector<12x1xf32>
    %752 = arith.mulf %750, %751 : vector<12x1xf32>
    %cst_247 = arith.constant 2.000000e+00 : f32
    %753 = vector.broadcast %cst_247 : f32 to vector<12x1xf32>
    %754 = arith.subf %753, %752 : vector<12x1xf32>
    %755 = arith.mulf %751, %754 : vector<12x1xf32>
    %756 = vector.broadcast %755 : vector<12x1xf32> to vector<12x12xf32>
    %757 = arith.mulf %748, %756 : vector<12x12xf32>
    %758 = arith.truncf %757 : vector<12x12xf32> to vector<12x12xbf16>
    %759 = arith.truncf %740 : vector<12x8xf32> to vector<12x8xbf16>
    %cst_248 = arith.constant dense<0.000000e+00> : vector<12x8xf32>
    %760 = tpu.matmul %758, %759, %cst_248 {dimension_numbers = #tpu.dot_dimension_numbers<[1], [0], [0], [1], [0, 0, 1, 1], [], []>} : vector<12x12xbf16>, vector<12x8xbf16>, vector<12x8xf32> -> vector<12x8xf32>
    %761 = vector.extract_strided_slice %714 {offsets = [0, 16], sizes = [12, 8], strides = [1, 1]} : vector<12x96xf32> to vector<12x8xf32>
    %762 = vector.extract_strided_slice %714 {offsets = [0, 48], sizes = [12, 8], strides = [1, 1]} : vector<12x96xf32> to vector<12x8xf32>
    %763 = vector.extract_strided_slice %714 {offsets = [0, 80], sizes = [12, 8], strides = [1, 1]} : vector<12x96xf32> to vector<12x8xf32>
    %764 = arith.truncf %761 : vector<12x8xf32> to vector<12x8xbf16>
    %765 = arith.truncf %762 : vector<12x8xf32> to vector<12x8xbf16>
    %cst_249 = arith.constant dense<0.000000e+00> : vector<12x12xf32>
    %766 = tpu.matmul %764, %765, %cst_249 {dimension_numbers = #tpu.dot_dimension_numbers<[1], [1], [0], [0], [0, 0, 1, 0], [], []>} : vector<12x8xbf16>, vector<12x8xbf16>, vector<12x12xf32> -> vector<12x12xf32>
    %cst_250 = arith.constant dense<0xFF800000> : vector<12xf32>
    %767 = vector.multi_reduction <maximumf>, %766, %cst_250 [1] : vector<12x12xf32> to vector<12xf32>
    %768 = vector.shape_cast %767 : vector<12xf32> to vector<12x1xf32>
    %769 = vector.broadcast %768 : vector<12x1xf32> to vector<12x12xf32>
    %770 = arith.subf %766, %769 : vector<12x12xf32>
    %771 = math.exp %770 : vector<12x12xf32>
    %cst_251 = arith.constant dense<0.000000e+00> : vector<12xf32>
    %772 = vector.multi_reduction <add>, %771, %cst_251 [1] : vector<12x12xf32> to vector<12xf32>
    %773 = vector.shape_cast %772 : vector<12xf32> to vector<12x1xf32>
    %774 = tpu.reciprocal %773 {approx = true} : vector<12x1xf32> -> vector<12x1xf32>
    %775 = arith.mulf %773, %774 : vector<12x1xf32>
    %cst_252 = arith.constant 2.000000e+00 : f32
    %776 = vector.broadcast %cst_252 : f32 to vector<12x1xf32>
    %777 = arith.subf %776, %775 : vector<12x1xf32>
    %778 = arith.mulf %774, %777 : vector<12x1xf32>
    %779 = vector.broadcast %778 : vector<12x1xf32> to vector<12x12xf32>
    %780 = arith.mulf %771, %779 : vector<12x12xf32>
    %781 = arith.truncf %780 : vector<12x12xf32> to vector<12x12xbf16>
    %782 = arith.truncf %763 : vector<12x8xf32> to vector<12x8xbf16>
    %cst_253 = arith.constant dense<0.000000e+00> : vector<12x8xf32>
    %783 = tpu.matmul %781, %782, %cst_253 {dimension_numbers = #tpu.dot_dimension_numbers<[1], [0], [0], [1], [0, 0, 1, 1], [], []>} : vector<12x12xbf16>, vector<12x8xbf16>, vector<12x8xf32> -> vector<12x8xf32>
    %784 = vector.extract_strided_slice %714 {offsets = [0, 24], sizes = [12, 8], strides = [1, 1]} : vector<12x96xf32> to vector<12x8xf32>
    %785 = vector.extract_strided_slice %714 {offsets = [0, 56], sizes = [12, 8], strides = [1, 1]} : vector<12x96xf32> to vector<12x8xf32>
    %786 = vector.extract_strided_slice %714 {offsets = [0, 88], sizes = [12, 8], strides = [1, 1]} : vector<12x96xf32> to vector<12x8xf32>
    %787 = arith.truncf %784 : vector<12x8xf32> to vector<12x8xbf16>
    %788 = arith.truncf %785 : vector<12x8xf32> to vector<12x8xbf16>
    %cst_254 = arith.constant dense<0.000000e+00> : vector<12x12xf32>
    %789 = tpu.matmul %787, %788, %cst_254 {dimension_numbers = #tpu.dot_dimension_numbers<[1], [1], [0], [0], [0, 0, 1, 0], [], []>} : vector<12x8xbf16>, vector<12x8xbf16>, vector<12x12xf32> -> vector<12x12xf32>
    %cst_255 = arith.constant dense<0xFF800000> : vector<12xf32>
    %790 = vector.multi_reduction <maximumf>, %789, %cst_255 [1] : vector<12x12xf32> to vector<12xf32>
    %791 = vector.shape_cast %790 : vector<12xf32> to vector<12x1xf32>
    %792 = vector.broadcast %791 : vector<12x1xf32> to vector<12x12xf32>
    %793 = arith.subf %789, %792 : vector<12x12xf32>
    %794 = math.exp %793 : vector<12x12xf32>
    %cst_256 = arith.constant dense<0.000000e+00> : vector<12xf32>
    %795 = vector.multi_reduction <add>, %794, %cst_256 [1] : vector<12x12xf32> to vector<12xf32>
    %796 = vector.shape_cast %795 : vector<12xf32> to vector<12x1xf32>
    %797 = tpu.reciprocal %796 {approx = true} : vector<12x1xf32> -> vector<12x1xf32>
    %798 = arith.mulf %796, %797 : vector<12x1xf32>
    %cst_257 = arith.constant 2.000000e+00 : f32
    %799 = vector.broadcast %cst_257 : f32 to vector<12x1xf32>
    %800 = arith.subf %799, %798 : vector<12x1xf32>
    %801 = arith.mulf %797, %800 : vector<12x1xf32>
    %802 = vector.broadcast %801 : vector<12x1xf32> to vector<12x12xf32>
    %803 = arith.mulf %794, %802 : vector<12x12xf32>
    %804 = arith.truncf %803 : vector<12x12xf32> to vector<12x12xbf16>
    %805 = arith.truncf %786 : vector<12x8xf32> to vector<12x8xbf16>
    %cst_258 = arith.constant dense<0.000000e+00> : vector<12x8xf32>
    %806 = tpu.matmul %804, %805, %cst_258 {dimension_numbers = #tpu.dot_dimension_numbers<[1], [0], [0], [1], [0, 0, 1, 1], [], []>} : vector<12x12xbf16>, vector<12x8xbf16>, vector<12x8xf32> -> vector<12x8xf32>
    %807 = tpu.concatenate %737, %760, %783, %806 in 1 : vector<12x8xf32>, vector<12x8xf32>, vector<12x8xf32>, vector<12x8xf32> -> vector<12x32xf32>
    %808 = arith.truncf %807 : vector<12x32xf32> to vector<12x32xbf16>
    %c224_259 = arith.constant 224 : index
    %c96_260 = arith.constant 96 : index
    %809 = vector.load %arg4[%c224_259, %c96_260] : memref<416x128xbf16, #tpu.memory_space<vmem>>, vector<32x32xbf16>
    %cst_261 = arith.constant dense<0.000000e+00> : vector<12x32xf32>
    %810 = tpu.matmul %808, %809, %cst_261 {dimension_numbers = #tpu.dot_dimension_numbers<[1], [0], [0], [1], [0, 0, 1, 1], [], []>} : vector<12x32xbf16>, vector<32x32xbf16>, vector<12x32xf32> -> vector<12x32xf32>
    %811 = arith.addf %810, %711 : vector<12x32xf32>
    %cst_262 = arith.constant dense<0.000000e+00> : vector<12xf32>
    %812 = vector.multi_reduction <add>, %811, %cst_262 [1] : vector<12x32xf32> to vector<12xf32>
    %813 = vector.shape_cast %812 : vector<12xf32> to vector<12x1xf32>
    %cst_263 = arith.constant 3.200000e+01 : f32
    %814 = vector.broadcast %cst_263 : f32 to vector<12x1xf32>
    %815 = arith.divf %813, %814 : vector<12x1xf32>
    %816 = vector.broadcast %815 : vector<12x1xf32> to vector<12x32xf32>
    %817 = arith.subf %811, %816 : vector<12x32xf32>
    %818 = arith.mulf %817, %817 : vector<12x32xf32>
    %cst_264 = arith.constant dense<0.000000e+00> : vector<12xf32>
    %819 = vector.multi_reduction <add>, %818, %cst_264 [1] : vector<12x32xf32> to vector<12xf32>
    %820 = vector.shape_cast %819 : vector<12xf32> to vector<12x1xf32>
    %cst_265 = arith.constant 3.200000e+01 : f32
    %821 = vector.broadcast %cst_265 : f32 to vector<12x1xf32>
    %822 = arith.divf %820, %821 : vector<12x1xf32>
    %cst_266 = arith.constant 9.99999974E-6 : f32
    %823 = vector.broadcast %cst_266 : f32 to vector<12x1xf32>
    %824 = arith.addf %822, %823 : vector<12x1xf32>
    %825 = math.rsqrt %824 : vector<12x1xf32>
    %826 = vector.broadcast %825 : vector<12x1xf32> to vector<12x32xf32>
    %827 = arith.mulf %817, %826 : vector<12x32xf32>
    %c37 = arith.constant 37 : index
    %c0_267 = arith.constant 0 : index
    %828 = vector.load %arg5[%c37, %c0_267] : memref<48x128xf32, #tpu.memory_space<vmem>>, vector<1x32xf32>
    %829 = vector.broadcast %828 : vector<1x32xf32> to vector<12x32xf32>
    %830 = arith.mulf %827, %829 : vector<12x32xf32>
    %c38 = arith.constant 38 : index
    %c0_268 = arith.constant 0 : index
    %831 = vector.load %arg5[%c38, %c0_268] : memref<48x128xf32, #tpu.memory_space<vmem>>, vector<1x32xf32>
    %832 = vector.broadcast %831 : vector<1x32xf32> to vector<12x32xf32>
    %833 = arith.addf %830, %832 : vector<12x32xf32>
    %834 = arith.truncf %833 : vector<12x32xf32> to vector<12x32xbf16>
    %c256 = arith.constant 256 : index
    %c0_269 = arith.constant 0 : index
    %835 = vector.load %arg4[%c256, %c0_269] : memref<416x128xbf16, #tpu.memory_space<vmem>>, vector<32x128xbf16>
    %cst_270 = arith.constant dense<0.000000e+00> : vector<12x128xf32>
    %836 = tpu.matmul %834, %835, %cst_270 {dimension_numbers = #tpu.dot_dimension_numbers<[1], [0], [0], [1], [0, 0, 1, 1], [], []>} : vector<12x32xbf16>, vector<32x128xbf16>, vector<12x128xf32> -> vector<12x128xf32>
    %c35 = arith.constant 35 : index
    %c0_271 = arith.constant 0 : index
    %837 = vector.load %arg5[%c35, %c0_271] : memref<48x128xf32, #tpu.memory_space<vmem>>, vector<1x128xf32>
    %838 = vector.broadcast %837 : vector<1x128xf32> to vector<12x128xf32>
    %839 = arith.addf %836, %838 : vector<12x128xf32>
    %cst_272 = arith.constant 0.000000e+00 : f32
    %840 = vector.broadcast %cst_272 : f32 to vector<12x128xf32>
    %841 = arith.cmpf ogt, %839, %840 : vector<12x128xf32>
    %cst_273 = arith.constant 2.000000e-01 : f32
    %842 = vector.broadcast %cst_273 : f32 to vector<12x128xf32>
    %843 = arith.mulf %842, %839 : vector<12x128xf32>
    %844 = arith.select %841, %839, %843 : vector<12x128xi1>, vector<12x128xf32>
    %845 = arith.truncf %844 : vector<12x128xf32> to vector<12x128xbf16>
    %c288_274 = arith.constant 288 : index
    %c96_275 = arith.constant 96 : index
    %846 = vector.load %arg4[%c288_274, %c96_275] : memref<416x128xbf16, #tpu.memory_space<vmem>>, vector<128x32xbf16>
    %cst_276 = arith.constant dense<0.000000e+00> : vector<12x32xf32>
    %847 = tpu.matmul %845, %846, %cst_276 {dimension_numbers = #tpu.dot_dimension_numbers<[1], [0], [0], [1], [0, 0, 1, 1], [], []>} : vector<12x128xbf16>, vector<128x32xbf16>, vector<12x32xf32> -> vector<12x32xf32>
    %c36 = arith.constant 36 : index
    %c0_277 = arith.constant 0 : index
    %848 = vector.load %arg5[%c36, %c0_277] : memref<48x128xf32, #tpu.memory_space<vmem>>, vector<1x32xf32>
    %849 = vector.broadcast %848 : vector<1x32xf32> to vector<12x32xf32>
    %850 = arith.addf %847, %849 : vector<12x32xf32>
    %851 = arith.addf %833, %850 : vector<12x32xf32>
    %cst_278 = arith.constant dense<0.000000e+00> : vector<12xf32>
    %852 = vector.multi_reduction <add>, %851, %cst_278 [1] : vector<12x32xf32> to vector<12xf32>
    %853 = vector.shape_cast %852 : vector<12xf32> to vector<12x1xf32>
    %cst_279 = arith.constant 3.200000e+01 : f32
    %854 = vector.broadcast %cst_279 : f32 to vector<12x1xf32>
    %855 = arith.divf %853, %854 : vector<12x1xf32>
    %856 = vector.broadcast %855 : vector<12x1xf32> to vector<12x32xf32>
    %857 = arith.subf %851, %856 : vector<12x32xf32>
    %858 = arith.mulf %857, %857 : vector<12x32xf32>
    %cst_280 = arith.constant dense<0.000000e+00> : vector<12xf32>
    %859 = vector.multi_reduction <add>, %858, %cst_280 [1] : vector<12x32xf32> to vector<12xf32>
    %860 = vector.shape_cast %859 : vector<12xf32> to vector<12x1xf32>
    %cst_281 = arith.constant 3.200000e+01 : f32
    %861 = vector.broadcast %cst_281 : f32 to vector<12x1xf32>
    %862 = arith.divf %860, %861 : vector<12x1xf32>
    %cst_282 = arith.constant 9.99999974E-6 : f32
    %863 = vector.broadcast %cst_282 : f32 to vector<12x1xf32>
    %864 = arith.addf %862, %863 : vector<12x1xf32>
    %865 = math.rsqrt %864 : vector<12x1xf32>
    %866 = vector.broadcast %865 : vector<12x1xf32> to vector<12x32xf32>
    %867 = arith.mulf %857, %866 : vector<12x32xf32>
    %c39 = arith.constant 39 : index
    %c0_283 = arith.constant 0 : index
    %868 = vector.load %arg5[%c39, %c0_283] : memref<48x128xf32, #tpu.memory_space<vmem>>, vector<1x32xf32>
    %869 = vector.broadcast %868 : vector<1x32xf32> to vector<12x32xf32>
    %870 = arith.mulf %867, %869 : vector<12x32xf32>
    %c40 = arith.constant 40 : index
    %c0_284 = arith.constant 0 : index
    %871 = vector.load %arg5[%c40, %c0_284] : memref<48x128xf32, #tpu.memory_space<vmem>>, vector<1x32xf32>
    %872 = vector.broadcast %871 : vector<1x32xf32> to vector<12x32xf32>
    %873 = arith.addf %870, %872 : vector<12x32xf32>
    %c0_285 = arith.constant 0 : index
    %c0_286 = arith.constant 0 : index
    %874 = vector.load %arg7[%c0_285, %c0_286] : memref<20x32xf32, #tpu.memory_space<vmem>>, vector<8x32xf32>
    tpu.vector_store %arg7[%c0_285, %c0_286], %549 {strides = array<i32>} : memref<20x32xf32, #tpu.memory_space<vmem>>, vector<8x32xf32>,
    %c8_287 = arith.constant 8 : index
    %c0_288 = arith.constant 0 : index
    %875 = vector.load %arg7[%c8_287, %c0_288] : memref<20x32xf32, #tpu.memory_space<vmem>>, vector<12x32xf32>
    tpu.vector_store %arg7[%c8_287, %c0_288], %873 {strides = array<i32>} : memref<20x32xf32, #tpu.memory_space<vmem>>, vector<12x32xf32>,
    return
  }
}

</mosaic_0001>

<llo_original>
// kernel: forward.1
$region0: #{forward.1}
  #allocation0 [shape = 'u32[]', space=smem, size = 0x4, offset = 0x4, fixed_abs, tag = 'smem constant byte address 0x4 - core index']
  #allocation1 [shape = 'u32[144,128]{1,0:T(1,128)}', space=vmem, size = 0x12000, scoped, tag = 'internal scratch']
  %s0 = inlined_call_operand.vmem [shape: f32[16,3], index: 0, kind: input, shape index: {}]
  %s1 = inlined_call_operand.vmem [shape: f32[3,16,16], index: 1, kind: input, shape index: {}]
  %s2 = inlined_call_operand.vmem [shape: f32[8,9], index: 2, kind: input, shape index: {}]
  %s3 = inlined_call_operand.vmem [shape: f32[12,11], index: 3, kind: input, shape index: {}]
  %s4 = inlined_call_operand.vmem [shape: bf16[416,128], index: 4, kind: input, shape index: {}]
  %s5 = inlined_call_operand.vmem [shape: f32[48,128], index: 5, kind: input, shape index: {}]
  %s6 = inlined_call_operand.vmem [shape: f32[16,8], index: 6, kind: output, shape index: {0}]
  %s7 = inlined_call_operand.vmem [shape: f32[20,32], index: 7, kind: output, shape index: {1}]
  %8 = xla_tuple %s6, %s7
  %s9 = sld [smem:[#allocation0]]
  $region42: #{forward.1} parent=0
    _
  %s11 = ssub.s32 1, %s9
  %s12 = scalar_select 0, %s11, %s9
  // Predicated region
  $region2: #{forward.1} parent=0 // pred_check
    _
  $region3: #{forward.1} parent=0 // pred_check_branch
    %14 = sbr.rel (0) target = $region5
  $region4: #{forward.1} parent=0 // pred_region
    _
  $region5: #{forward.1} parent=0 // pred_fallthru
    _
  // Predicated region
  $region6: #{forward.1} parent=0 // pred_check
    _
  $region7: #{forward.1} parent=0 // pred_check_branch
    %16 = sbr.rel (0) target = $region9
  $region8: #{forward.1} parent=0 // pred_region
    _
  $region9: #{forward.1} parent=0 // pred_fallthru
    _
  // Predicated region
  $region10: #{forward.1} parent=0 // pred_check
    _
  $region11: #{forward.1} parent=0 // pred_check_branch
    %18 = sbr.rel (0) target = $region13
  $region12: #{forward.1} parent=0 // pred_region
    _
  $region13: #{forward.1} parent=0 // pred_fallthru
    _
  // Predicated region
  $region14: #{forward.1} parent=0 // pred_check
    _
  $region15: #{forward.1} parent=0 // pred_check_branch
    %20 = sbr.rel (0) target = $region17
  $region16: #{forward.1} parent=0 // pred_region
    _
  $region17: #{forward.1} parent=0 // pred_fallthru
    _
  // Predicated region
  $region18: #{forward.1} parent=0 // pred_check
    _
  $region19: #{forward.1} parent=0 // pred_check_branch
    %22 = sbr.rel (0) target = $region21
  $region20: #{forward.1} parent=0 // pred_region
    _
  $region21: #{forward.1} parent=0 // pred_fallthru
    _
  // Predicated region
  $region22: #{forward.1} parent=0 // pred_check
    _
  $region23: #{forward.1} parent=0 // pred_check_branch
    %24 = sbr.rel (0) target = $region25
  $region24: #{forward.1} parent=0 // pred_region
    _
  $region25: #{forward.1} parent=0 // pred_fallthru
    _
  %v26 = vld [vmem:[%s0] sm:$0xff]
  %v27 = vld [vmem:[%s0 + $0x8] sm:$0xff]
  %v28 = vpack.c.bf16 %v27, %v26
  %v29 = vld [vmem:[%s4] sm:$0x3]
  %vm30 = vcmask 23552
  %v32 = vsel %vm30, %v28, 0
  %vm34 = vcmask 1040384
  %vm35 = vcmask 1041408
  %v36 = vsel %vm34, 4294967295, 65535
  %v37 = vsel %vm35, %v36, 0
  %v39 = vand.u32 %v29, %v37
  %41 = vmatprep.subr.bf16.mxu0 0
  %42 = vmatpush1.bf16.msra.mxu0 %v39
  %43 = vmatprep.subr.bf16.mxu0 0
  %44 = vmatpush1.bf16.msra.mxu0 0
  %45 = vmatprep.subr.bf16.mxu0 0
  %46 = vmatpush1.bf16.msra.mxu0 0
  %47 = vmatprep.subr.bf16.mxu0 0
  %48 = vmatpush1.bf16.msra.mxu0 0
  %49 = vmatprep.subr.bf16.mxu0 0
  %50 = vmatpush1.bf16.msra.mxu0 0
  %51 = vmatprep.subr.bf16.mxu0 0
  %52 = vmatpush1.bf16.msra.mxu0 0
  %53 = vmatprep.subr.bf16.mxu0 0
  %54 = vmatpush1.bf16.msra.mxu0 0
  %55 = vmatprep.subr.bf16.mxu0 0
  %56 = vmatpush1.bf16.msra.mxu0 0
  %57 = vmatprep.subr.bf16.mxu0 0
  %58 = vmatpush1.bf16.msra.mxu0 0
  %59 = vmatprep.subr.bf16.mxu0 0
  %60 = vmatpush1.bf16.msra.mxu0 0
  %61 = vmatprep.subr.bf16.mxu0 0
  %62 = vmatpush1.bf16.msra.mxu0 0
  %63 = vmatprep.subr.bf16.mxu0 0
  %64 = vmatpush1.bf16.msra.mxu0 0
  %65 = vmatprep.subr.bf16.mxu0 0
  %66 = vmatpush1.bf16.msra.mxu0 0
  %67 = vmatprep.subr.bf16.mxu0 0
  %68 = vmatpush1.bf16.msra.mxu0 0
  %69 = vmatprep.subr.bf16.mxu0 0
  %70 = vmatpush1.bf16.msra.mxu0 0
  %71 = vmatprep.subr.bf16.mxu0 0
  %72 = vmatpush1.bf16.msra.mxu0 0
  %73 = vmatprep.mubr.bf16.mxu0 0
  %74 = vmatmul.mubr.bf16.gmra.mrb[0].mxu0 %v32
  %v75 = vpop.f32.mrb[0].mxu0
  %v76 = vadd.f32 0.0, %v75
  %v77 = vpop.f32.mrb[0].mxu0
  %v78 = vpop.f32.mrb[0].mxu0
  %v79 = vadd.f32 0.0, %v78
  %v80 = vpop.f32.mrb[0].mxu0
  %81 = vdwg.mxu0
  %v82 = vld [vmem:[%s5 + $0x1] sm:$0x1]
  %v83 = vlaneseq
  %v84 = vshrl.u32 %v83, 7
  %v85 = vsub.s32 0, %v84
  %v86 = vrot.slane %v82, %v85
  %v87 = vmul.f32 %v76, %v86
  %v88 = vmul.f32 %v79, %v86
  %vm89 = vcmask 130048
  %v90 = vsel %vm89, %v87, 0.0
  %91 = vadd.xlane.f32.xlu0 %v90
  %v92 = vpop.xlane.xlu0 %91
  %v93 = vsel %vm89, %v88, 0.0
  %94 = vadd.xlane.f32.xlu0 %v93
  %v95 = vpop.xlane.xlu0 %94
  %v96 = vld [vmem:[%s5] sm:$0x1]
  %v97 = vpack.c.bf16 %v96, %v96
  %v98 = vpack.c.bf16 %v79, %v76
  %v100 = vsel %vm89, %v97, 0
  %v103 = vsel %vm89, %v98, 0
  %105 = vmatprep.subr.bf16.mxu0 0
  %106 = vmatpush1.bf16.xpose.msra.mxu0 %v103
  %107 = vmatprep.subr.bf16.mxu0 0
  %108 = vmatpush1.bf16.xpose.msra.mxu0 0
  %109 = vmatprep.subr.bf16.mxu0 0
  %110 = vmatpush1.bf16.xpose.msra.mxu0 0
  %111 = vmatprep.subr.bf16.mxu0 0
  %112 = vmatpush1.bf16.xpose.msra.mxu0 0
  %113 = vmatprep.subr.bf16.mxu0 0
  %114 = vmatpush1.bf16.xpose.msra.mxu0 0
  %115 = vmatprep.subr.bf16.mxu0 0
  %116 = vmatpush1.bf16.xpose.msra.mxu0 0
  %117 = vmatprep.subr.bf16.mxu0 0
  %118 = vmatpush1.bf16.xpose.msra.mxu0 0
  %119 = vmatprep.subr.bf16.mxu0 0
  %120 = vmatpush1.bf16.xpose.msra.mxu0 0
  %121 = vmatprep.subr.bf16.mxu0 0
  %122 = vmatpush1.bf16.xpose.msra.mxu0 0
  %123 = vmatprep.subr.bf16.mxu0 0
  %124 = vmatpush1.bf16.xpose.msra.mxu0 0
  %125 = vmatprep.subr.bf16.mxu0 0
  %126 = vmatpush1.bf16.xpose.msra.mxu0 0
  %127 = vmatprep.subr.bf16.mxu0 0
  %128 = vmatpush1.bf16.xpose.msra.mxu0 0
  %129 = vmatprep.subr.bf16.mxu0 0
  %130 = vmatpush1.bf16.xpose.msra.mxu0 0
  %131 = vmatprep.subr.bf16.mxu0 0
  %132 = vmatpush1.bf16.xpose.msra.mxu0 0
  %133 = vmatprep.subr.bf16.mxu0 0
  %134 = vmatpush1.bf16.xpose.msra.mxu0 0
  %135 = vmatprep.subr.bf16.mxu0 0
  %136 = vmatpush1.bf16.xpose.msra.mxu0 0
  %137 = vmatprep.mubr.bf16.mxu0 0
  %138 = vmatmul.mubr.bf16.gmra.mrb[0].mxu0 %v100
  %v139 = vpop.f32.mrb[0].mxu0
  %v140 = vadd.f32 0.0, %v139
  %v141 = vpop.f32.mrb[0].mxu0
  %v142 = vpop.f32.mrb[0].mxu0
  %v143 = vpop.f32.mrb[0].mxu0
  %144 = vdwg.mxu0
  %v145 = vlaneseq
  %v146 = vshrl.u32 %v145, 7
  %v147 = vsub.s32 0, %v146
  %v148 = vrot.slane %v140, %v147
  %v149 = vadd.f32 %v92, %v148
  %v150 = vadd.f32 %v95, %v148
  %v151 = vld [vmem:[%s1] sm:$0xff]
  %v152 = vld [vmem:[%s1 + $0x8] sm:$0xff]
  %v153 = vadd.f32 %v149, %v151
  %v154 = vadd.f32 %v150, %v152
  %vm155 = vcmp.gt.f32.partialorder %v153, 0.0
  %vm156 = vcmp.gt.f32.partialorder %v154, 0.0
  %v157 = vmul.f32 %v153, 0.2
  %v158 = vmul.f32 %v154, 0.2
  %v159 = vsel %vm155, %v153, %v157
  %v160 = vsel %vm156, %v154, %v158
  %v161 = vsel %vm89, %v159, -inf
  %162 = vmax.xlane.f32.xlu0 %v161
  %v163 = vpop.xlane.xlu0 %162
  %v164 = vsel %vm89, %v160, -inf
  %165 = vmax.xlane.f32.xlu0 %v164
  %v166 = vpop.xlane.xlu0 %165
  %v167 = vsub.f32 %v159, %v163
  %v168 = vsub.f32 %v160, %v166
  %v169 = vmul.f32 %v167, 1.442695
  %v170 = vpow.pop %v169
  %v171 = vmul.f32 %v168, 1.442695
  %v172 = vpow.pop %v171
  %v173 = vsel %vm89, %v170, 0.0
  %174 = vadd.xlane.f32.xlu0 %v173
  %v175 = vpop.xlane.xlu0 %174
  %v176 = vsel %vm89, %v172, 0.0
  %177 = vadd.xlane.f32.xlu0 %v176
  %v178 = vpop.xlane.xlu0 %177
  %v179 = vrcp.pop %v175
  %v180 = vrcp.pop %v178
  %v181 = vmul.f32 %v175, %v179
  %v182 = vmul.f32 %v178, %v180
  %v183 = vsub.f32 2.0, %v181
  %v184 = vsub.f32 2.0, %v182
  %v185 = vmul.f32 %v179, %v183
  %v186 = vmul.f32 %v180, %v184
  %v187 = vmul.f32 %v170, %v185
  %v188 = vmul.f32 %v172, %v186
  %v189 = vpack.c.bf16 %v188, %v187
  %v190 = vld [vmem:[%s5 + $0x2] sm:$0x1]
  %v191 = vlaneseq
  %v192 = vshrl.u32 %v191, 7
  %v193 = vsub.s32 0, %v192
  %v194 = vrot.slane %v190, %v193
  %v196 = vsel %vm89, %v189, 0
  %198 = vmatprep.subr.bf16.mxu0 0
  %199 = vmatpush1.bf16.msra.mxu0 %v98
  %200 = vmatprep.subr.bf16.mxu0 0
  %201 = vmatpush1.bf16.msra.mxu0 0
  %202 = vmatprep.subr.bf16.mxu0 0
  %203 = vmatpush1.bf16.msra.mxu0 0
  %204 = vmatprep.subr.bf16.mxu0 0
  %205 = vmatpush1.bf16.msra.mxu0 0
  %206 = vmatprep.subr.bf16.mxu0 0
  %207 = vmatpush1.bf16.msra.mxu0 0
  %208 = vmatprep.subr.bf16.mxu0 0
  %209 = vmatpush1.bf16.msra.mxu0 0
  %210 = vmatprep.subr.bf16.mxu0 0
  %211 = vmatpush1.bf16.msra.mxu0 0
  %212 = vmatprep.subr.bf16.mxu0 0
  %213 = vmatpush1.bf16.msra.mxu0 0
  %214 = vmatprep.subr.bf16.mxu0 0
  %215 = vmatpush1.bf16.msra.mxu0 0
  %216 = vmatprep.subr.bf16.mxu0 0
  %217 = vmatpush1.bf16.msra.mxu0 0
  %218 = vmatprep.subr.bf16.mxu0 0
  %219 = vmatpush1.bf16.msra.mxu0 0
  %220 = vmatprep.subr.bf16.mxu0 0
  %221 = vmatpush1.bf16.msra.mxu0 0
  %222 = vmatprep.subr.bf16.mxu0 0
  %223 = vmatpush1.bf16.msra.mxu0 0
  %224 = vmatprep.subr.bf16.mxu0 0
  %225 = vmatpush1.bf16.msra.mxu0 0
  %226 = vmatprep.subr.bf16.mxu0 0
  %227 = vmatpush1.bf16.msra.mxu0 0
  %228 = vmatprep.subr.bf16.mxu0 0
  %229 = vmatpush1.bf16.msra.mxu0 0
  %230 = vmatprep.mubr.bf16.mxu0 0
  %231 = vmatmul.mubr.bf16.gmra.mrb[0].mxu0 %v196
  %v232 = vpop.f32.mrb[0].mxu0
  %v233 = vadd.f32 %v194, %v232
  %v234 = vpop.f32.mrb[0].mxu0
  %v235 = vpop.f32.mrb[0].mxu0
  %v236 = vadd.f32 %v194, %v235
  %v237 = vpop.f32.mrb[0].mxu0
  %238 = vdwg.mxu0
  %vm239 = vcmp.gt.f32.partialorder %v233, 0.0
  %vm240 = vcmp.gt.f32.partialorder %v236, 0.0
  %v241 = vmul.f32 %v233, 0.2
  %v242 = vmul.f32 %v236, 0.2
  %v243 = vsel %vm239, %v233, %v241
  %v244 = vsel %vm240, %v236, %v242
  %v245 = vsel %vm89, %v243, 0.0
  %246 = vadd.xlane.f32.xlu0 %v245
  %v247 = vpop.xlane.xlu0 %246
  %v248 = vsel %vm89, %v244, 0.0
  %249 = vadd.xlane.f32.xlu0 %v248
  %v250 = vpop.xlane.xlu0 %249
  %v251 = vrcp.pop 16.0
  %v252 = vmul.f32 %v247, %v251
  %v253 = vmul.f32 %v250, %v251
  %v254 = vsub.f32 %v243, %v252
  %v255 = vsub.f32 %v244, %v253
  %v256 = vmul.f32 %v254, %v254
  %v257 = vmul.f32 %v255, %v255
  %v258 = vsel %vm89, %v256, 0.0
  %259 = vadd.xlane.f32.xlu0 %v258
  %v260 = vpop.xlane.xlu0 %259
  %v261 = vsel %vm89, %v257, 0.0
  %262 = vadd.xlane.f32.xlu0 %v261
  %v263 = vpop.xlane.xlu0 %262
  %v264 = vmul.f32 %v260, %v251
  %v265 = vmul.f32 %v263, %v251
  %v266 = vadd.f32 %v264, 1e-05
  %v267 = vadd.f32 %v265, 1e-05
  %v268 = vrsqrt.pop %v266
  %v269 = vrsqrt.pop %v267
  %v270 = vmul.f32 %v254, %v268
  %v271 = vmul.f32 %v255, %v269
  %v272 = vld [vmem:[%s5 + $0x3] sm:$0x1]
  %v273 = vlaneseq
  %v274 = vshrl.u32 %v273, 7
  %v275 = vsub.s32 0, %v274
  %v276 = vrot.slane %v272, %v275
  %v277 = vmul.f32 %v270, %v276
  %v278 = vmul.f32 %v271, %v276
  %v279 = vld [vmem:[%s5 + $0x4] sm:$0x1]
  %v280 = vlaneseq
  %v281 = vshrl.u32 %v280, 7
  %v282 = vsub.s32 0, %v281
  %v283 = vrot.slane %v279, %v282
  %v284 = vadd.f32 %v277, %v283
  %v285 = vadd.f32 %v278, %v283
  %v286 = vpack.c.bf16 %v285, %v284
  %v287 = vld [vmem:[%s4] sm:$0xf]
  %v288 = vld [vmem:[%s4 + $0x4] sm:$0xf]
  %v291 = vunpack.c.l.b16 %v287
  %v292 = vunpack.c.l.b16 %v288
  %v293 = vpack.c.b16 %v292, %v291
  %294 = vrot.lane.b32.xlu0 %v293, 112
  %v295 = vpop.permute.xlu0 %294
  %v298 = vsel %vm89, %v286, 0
  %300 = vmatprep.subr.bf16.mxu0 0
  %301 = vmatpush1.bf16.msra.mxu0 %v295
  %302 = vmatprep.subr.bf16.mxu0 0
  %303 = vmatpush1.bf16.msra.mxu0 0
  %304 = vmatprep.subr.bf16.mxu0 0
  %305 = vmatpush1.bf16.msra.mxu0 0
  %306 = vmatprep.subr.bf16.mxu0 0
  %307 = vmatpush1.bf16.msra.mxu0 0
  %308 = vmatprep.subr.bf16.mxu0 0
  %309 = vmatpush1.bf16.msra.mxu0 0
  %310 = vmatprep.subr.bf16.mxu0 0
  %311 = vmatpush1.bf16.msra.mxu0 0
  %312 = vmatprep.subr.bf16.mxu0 0
  %313 = vmatpush1.bf16.msra.mxu0 0
  %314 = vmatprep.subr.bf16.mxu0 0
  %315 = vmatpush1.bf16.msra.mxu0 0
  %316 = vmatprep.subr.bf16.mxu0 0
  %317 = vmatpush1.bf16.msra.mxu0 0
  %318 = vmatprep.subr.bf16.mxu0 0
  %319 = vmatpush1.bf16.msra.mxu0 0
  %320 = vmatprep.subr.bf16.mxu0 0
  %321 = vmatpush1.bf16.msra.mxu0 0
  %322 = vmatprep.subr.bf16.mxu0 0
  %323 = vmatpush1.bf16.msra.mxu0 0
  %324 = vmatprep.subr.bf16.mxu0 0
  %325 = vmatpush1.bf16.msra.mxu0 0
  %326 = vmatprep.subr.bf16.mxu0 0
  %327 = vmatpush1.bf16.msra.mxu0 0
  %328 = vmatprep.subr.bf16.mxu0 0
  %329 = vmatpush1.bf16.msra.mxu0 0
  %330 = vmatprep.subr.bf16.mxu0 0
  %331 = vmatpush1.bf16.msra.mxu0 0
  %332 = vmatprep.mubr.bf16.mxu0 0
  %333 = vmatmul.mubr.bf16.gmra.mrb[0].mxu0 %v298
  %v334 = vpop.f32.mrb[0].mxu0
  %v335 = vadd.f32 0.0, %v334
  %v336 = vpop.f32.mrb[0].mxu0
  %v337 = vpop.f32.mrb[0].mxu0
  %v338 = vadd.f32 0.0, %v337
  %v339 = vpop.f32.mrb[0].mxu0
  %340 = vdwg.mxu0
  %v341 = vld [vmem:[%s5 + $0x6] sm:$0x1]
  %v342 = vlaneseq
  %v343 = vshrl.u32 %v342, 7
  %v344 = vsub.s32 0, %v343
  %v345 = vrot.slane %v341, %v344
  %v346 = vmul.f32 %v335, %v345
  %v347 = vmul.f32 %v338, %v345
  %v348 = vsel %vm89, %v346, 0.0
  %349 = vadd.xlane.f32.xlu0 %v348
  %v350 = vpop.xlane.xlu0 %349
  %v351 = vsel %vm89, %v347, 0.0
  %352 = vadd.xlane.f32.xlu0 %v351
  %v353 = vpop.xlane.xlu0 %352
  %v354 = vld [vmem:[%s5 + $0x5] sm:$0x1]
  %v355 = vpack.c.bf16 %v354, %v354
  %v356 = vpack.c.bf16 %v338, %v335
  %v358 = vsel %vm89, %v355, 0
  %v361 = vsel %vm89, %v356, 0
  %363 = vmatprep.subr.bf16.mxu0 0
  %364 = vmatpush1.bf16.xpose.msra.mxu0 %v361
  %365 = vmatprep.subr.bf16.mxu0 0
  %366 = vmatpush1.bf16.xpose.msra.mxu0 0
  %367 = vmatprep.subr.bf16.mxu0 0
  %368 = vmatpush1.bf16.xpose.msra.mxu0 0
  %369 = vmatprep.subr.bf16.mxu0 0
  %370 = vmatpush1.bf16.xpose.msra.mxu0 0
  %371 = vmatprep.subr.bf16.mxu0 0
  %372 = vmatpush1.bf16.xpose.msra.mxu0 0
  %373 = vmatprep.subr.bf16.mxu0 0
  %374 = vmatpush1.bf16.xpose.msra.mxu0 0
  %375 = vmatprep.subr.bf16.mxu0 0
  %376 = vmatpush1.bf16.xpose.msra.mxu0 0
  %377 = vmatprep.subr.bf16.mxu0 0
  %378 = vmatpush1.bf16.xpose.msra.mxu0 0
  %379 = vmatprep.subr.bf16.mxu0 0
  %380 = vmatpush1.bf16.xpose.msra.mxu0 0
  %381 = vmatprep.subr.bf16.mxu0 0
  %382 = vmatpush1.bf16.xpose.msra.mxu0 0
  %383 = vmatprep.subr.bf16.mxu0 0
  %384 = vmatpush1.bf16.xpose.msra.mxu0 0
  %385 = vmatprep.subr.bf16.mxu0 0
  %386 = vmatpush1.bf16.xpose.msra.mxu0 0
  %387 = vmatprep.subr.bf16.mxu0 0
  %388 = vmatpush1.bf16.xpose.msra.mxu0 0
  %389 = vmatprep.subr.bf16.mxu0 0
  %390 = vmatpush1.bf16.xpose.msra.mxu0 0
  %391 = vmatprep.subr.bf16.mxu0 0
  %392 = vmatpush1.bf16.xpose.msra.mxu0 0
  %393 = vmatprep.subr.bf16.mxu0 0
  %394 = vmatpush1.bf16.xpose.msra.mxu0 0
  %395 = vmatprep.mubr.bf16.mxu0 0
  %396 = vmatmul.mubr.bf16.gmra.mrb[0].mxu0 %v358
  %v397 = vpop.f32.mrb[0].mxu0
  %v398 = vadd.f32 0.0, %v397
  %v399 = vpop.f32.mrb[0].mxu0
  %v400 = vpop.f32.mrb[0].mxu0
  %v401 = vpop.f32.mrb[0].mxu0
  %402 = vdwg.mxu0
  %v403 = vlaneseq
  %v404 = vshrl.u32 %v403, 7
  %v405 = vsub.s32 0, %v404
  %v406 = vrot.slane %v398, %v405
  %v407 = vadd.f32 %v350, %v406
  %v408 = vadd.f32 %v353, %v406
  %s409 = scalar_lea.vmem %s1, 16
  %v410 = vld [vmem:[%s409] sm:$0xff]
  %v411 = vld [vmem:[%s409 + $0x8] sm:$0xff]
  %v412 = vadd.f32 %v407, %v410
  %v413 = vadd.f32 %v408, %v411
  %vm414 = vcmp.gt.f32.partialorder %v412, 0.0
  %vm415 = vcmp.gt.f32.partialorder %v413, 0.0
  %v416 = vmul.f32 %v412, 0.2
  %v417 = vmul.f32 %v413, 0.2
  %v418 = vsel %vm414, %v412, %v416
  %v419 = vsel %vm415, %v413, %v417
  %v420 = vsel %vm89, %v418, -inf
  %421 = vmax.xlane.f32.xlu0 %v420
  %v422 = vpop.xlane.xlu0 %421
  %v423 = vsel %vm89, %v419, -inf
  %424 = vmax.xlane.f32.xlu0 %v423
  %v425 = vpop.xlane.xlu0 %424
  %v426 = vsub.f32 %v418, %v422
  %v427 = vsub.f32 %v419, %v425
  %v428 = vmul.f32 %v426, 1.442695
  %v429 = vpow.pop %v428
  %v430 = vmul.f32 %v427, 1.442695
  %v431 = vpow.pop %v430
  %v432 = vsel %vm89, %v429, 0.0
  %433 = vadd.xlane.f32.xlu0 %v432
  %v434 = vpop.xlane.xlu0 %433
  %v435 = vsel %vm89, %v431, 0.0
  %436 = vadd.xlane.f32.xlu0 %v435
  %v437 = vpop.xlane.xlu0 %436
  %v438 = vrcp.pop %v434
  %v439 = vrcp.pop %v437
  %v440 = vmul.f32 %v434, %v438
  %v441 = vmul.f32 %v437, %v439
  %v442 = vsub.f32 2.0, %v440
  %v443 = vsub.f32 2.0, %v441
  %v444 = vmul.f32 %v438, %v442
  %v445 = vmul.f32 %v439, %v443
  %v446 = vmul.f32 %v429, %v444
  %v447 = vmul.f32 %v431, %v445
  %v448 = vpack.c.bf16 %v447, %v446
  %v449 = vld [vmem:[%s5 + $0x7] sm:$0x1]
  %v450 = vlaneseq
  %v451 = vshrl.u32 %v450, 7
  %v452 = vsub.s32 0, %v451
  %v453 = vrot.slane %v449, %v452
  %v455 = vsel %vm89, %v448, 0
  %457 = vmatprep.subr.bf16.mxu0 0
  %458 = vmatpush1.bf16.msra.mxu0 %v356
  %459 = vmatprep.subr.bf16.mxu0 0
  %460 = vmatpush1.bf16.msra.mxu0 0
  %461 = vmatprep.subr.bf16.mxu0 0
  %462 = vmatpush1.bf16.msra.mxu0 0
  %463 = vmatprep.subr.bf16.mxu0 0
  %464 = vmatpush1.bf16.msra.mxu0 0
  %465 = vmatprep.subr.bf16.mxu0 0
  %466 = vmatpush1.bf16.msra.mxu0 0
  %467 = vmatprep.subr.bf16.mxu0 0
  %468 = vmatpush1.bf16.msra.mxu0 0
  %469 = vmatprep.subr.bf16.mxu0 0
  %470 = vmatpush1.bf16.msra.mxu0 0
  %471 = vmatprep.subr.bf16.mxu0 0
  %472 = vmatpush1.bf16.msra.mxu0 0
  %473 = vmatprep.subr.bf16.mxu0 0
  %474 = vmatpush1.bf16.msra.mxu0 0
  %475 = vmatprep.subr.bf16.mxu0 0
  %476 = vmatpush1.bf16.msra.mxu0 0
  %477 = vmatprep.subr.bf16.mxu0 0
  %478 = vmatpush1.bf16.msra.mxu0 0
  %479 = vmatprep.subr.bf16.mxu0 0
  %480 = vmatpush1.bf16.msra.mxu0 0
  %481 = vmatprep.subr.bf16.mxu0 0
  %482 = vmatpush1.bf16.msra.mxu0 0
  %483 = vmatprep.subr.bf16.mxu0 0
  %484 = vmatpush1.bf16.msra.mxu0 0
  %485 = vmatprep.subr.bf16.mxu0 0
  %486 = vmatpush1.bf16.msra.mxu0 0
  %487 = vmatprep.subr.bf16.mxu0 0
  %488 = vmatpush1.bf16.msra.mxu0 0
  %489 = vmatprep.mubr.bf16.mxu0 0
  %490 = vmatmul.mubr.bf16.gmra.mrb[0].mxu0 %v455
  %v491 = vpop.f32.mrb[0].mxu0
  %v492 = vadd.f32 %v453, %v491
  %v493 = vpop.f32.mrb[0].mxu0
  %v494 = vpop.f32.mrb[0].mxu0
  %v495 = vadd.f32 %v453, %v494
  %v496 = vpop.f32.mrb[0].mxu0
  %497 = vdwg.mxu0
  %vm498 = vcmp.gt.f32.partialorder %v492, 0.0
  %vm499 = vcmp.gt.f32.partialorder %v495, 0.0
  %v500 = vmul.f32 %v492, 0.2
  %v501 = vmul.f32 %v495, 0.2
  %v502 = vsel %vm498, %v492, %v500
  %v503 = vsel %vm499, %v495, %v501
  %v504 = vsel %vm89, %v502, 0.0
  %505 = vadd.xlane.f32.xlu0 %v504
  %v506 = vpop.xlane.xlu0 %505
  %v507 = vsel %vm89, %v503, 0.0
  %508 = vadd.xlane.f32.xlu0 %v507
  %v509 = vpop.xlane.xlu0 %508
  %v510 = vmul.f32 %v506, %v251
  %v511 = vmul.f32 %v509, %v251
  %v512 = vsub.f32 %v502, %v510
  %v513 = vsub.f32 %v503, %v511
  %v514 = vmul.f32 %v512, %v512
  %v515 = vmul.f32 %v513, %v513
  %v516 = vsel %vm89, %v514, 0.0
  %517 = vadd.xlane.f32.xlu0 %v516
  %v518 = vpop.xlane.xlu0 %517
  %v519 = vsel %vm89, %v515, 0.0
  %520 = vadd.xlane.f32.xlu0 %v519
  %v521 = vpop.xlane.xlu0 %520
  %v522 = vmul.f32 %v518, %v251
  %v523 = vmul.f32 %v521, %v251
  %v524 = vadd.f32 %v522, 1e-05
  %v525 = vadd.f32 %v523, 1e-05
  %v526 = vrsqrt.pop %v524
  %v527 = vrsqrt.pop %v525
  %v528 = vmul.f32 %v512, %v526
  %v529 = vmul.f32 %v513, %v527
  %v530 = vld [vmem:[%s5 + $0x8] sm:$0x1]
  %v531 = vlaneseq
  %v532 = vshrl.u32 %v531, 7
  %v533 = vsub.s32 0, %v532
  %v534 = vrot.slane %v530, %v533
  %v535 = vmul.f32 %v528, %v534
  %v536 = vmul.f32 %v529, %v534
  %v537 = vld [vmem:[%s5 + $0x9] sm:$0x1]
  %v538 = vlaneseq
  %v539 = vshrl.u32 %v538, 7
  %v540 = vsub.s32 0, %v539
  %v541 = vrot.slane %v537, %v540
  %v542 = vadd.f32 %v535, %v541
  %v543 = vadd.f32 %v536, %v541
  %v544 = vpack.c.bf16 %v543, %v542
  %545 = vrot.lane.b32.xlu0 %v293, 96
  %v546 = vpop.permute.xlu0 %545
  %v549 = vsel %vm89, %v544, 0
  %551 = vmatprep.subr.bf16.mxu0 0
  %552 = vmatpush1.bf16.msra.mxu0 %v546
  %553 = vmatprep.subr.bf16.mxu0 0
  %554 = vmatpush1.bf16.msra.mxu0 0
  %555 = vmatprep.subr.bf16.mxu0 0
  %556 = vmatpush1.bf16.msra.mxu0 0
  %557 = vmatprep.subr.bf16.mxu0 0
  %558 = vmatpush1.bf16.msra.mxu0 0
  %559 = vmatprep.subr.bf16.mxu0 0
  %560 = vmatpush1.bf16.msra.mxu0 0
  %561 = vmatprep.subr.bf16.mxu0 0
  %562 = vmatpush1.bf16.msra.mxu0 0
  %563 = vmatprep.subr.bf16.mxu0 0
  %564 = vmatpush1.bf16.msra.mxu0 0
  %565 = vmatprep.subr.bf16.mxu0 0
  %566 = vmatpush1.bf16.msra.mxu0 0
  %567 = vmatprep.subr.bf16.mxu0 0
  %568 = vmatpush1.bf16.msra.mxu0 0
  %569 = vmatprep.subr.bf16.mxu0 0
  %570 = vmatpush1.bf16.msra.mxu0 0
  %571 = vmatprep.subr.bf16.mxu0 0
  %572 = vmatpush1.bf16.msra.mxu0 0
  %573 = vmatprep.subr.bf16.mxu0 0
  %574 = vmatpush1.bf16.msra.mxu0 0
  %575 = vmatprep.subr.bf16.mxu0 0
  %576 = vmatpush1.bf16.msra.mxu0 0
  %577 = vmatprep.subr.bf16.mxu0 0
  %578 = vmatpush1.bf16.msra.mxu0 0
  %579 = vmatprep.subr.bf16.mxu0 0
  %580 = vmatpush1.bf16.msra.mxu0 0
  %581 = vmatprep.subr.bf16.mxu0 0
  %582 = vmatpush1.bf16.msra.mxu0 0
  %583 = vmatprep.mubr.bf16.mxu0 0
  %584 = vmatmul.mubr.bf16.gmra.mrb[0].mxu0 %v549
  %v585 = vpop.f32.mrb[0].mxu0
  %v586 = vadd.f32 0.0, %v585
  %v587 = vpop.f32.mrb[0].mxu0
  %v588 = vpop.f32.mrb[0].mxu0
  %v589 = vadd.f32 0.0, %v588
  %v590 = vpop.f32.mrb[0].mxu0
  %591 = vdwg.mxu0
  %v592 = vld [vmem:[%s5 + $0xb] sm:$0x1]
  %v593 = vlaneseq
  %v594 = vshrl.u32 %v593, 7
  %v595 = vsub.s32 0, %v594
  %v596 = vrot.slane %v592, %v595
  %v597 = vmul.f32 %v586, %v596
  %v598 = vmul.f32 %v589, %v596
  %vm599 = vcmask 64512
  %v600 = vsel %vm599, %v597, 0.0
  %601 = vadd.xlane.f32.xlu0 %v600
  %v602 = vpop.xlane.xlu0 %601
  %v603 = vsel %vm599, %v598, 0.0
  %604 = vadd.xlane.f32.xlu0 %v603
  %v605 = vpop.xlane.xlu0 %604
  %v606 = vld [vmem:[%s5 + $0xa] sm:$0x1]
  %v607 = vpack.c.bf16 %v606, %v606
  %v608 = vpack.c.bf16 %v589, %v586
  %v610 = vsel %vm599, %v607, 0
  %v613 = vsel %vm599, %v608, 0
  %615 = vmatprep.subr.bf16.mxu0 0
  %616 = vmatpush1.bf16.xpose.msra.mxu0 %v613
  %617 = vmatprep.subr.bf16.mxu0 0
  %618 = vmatpush1.bf16.xpose.msra.mxu0 0
  %619 = vmatprep.subr.bf16.mxu0 0
  %620 = vmatpush1.bf16.xpose.msra.mxu0 0
  %621 = vmatprep.subr.bf16.mxu0 0
  %622 = vmatpush1.bf16.xpose.msra.mxu0 0
  %623 = vmatprep.subr.bf16.mxu0 0
  %624 = vmatpush1.bf16.xpose.msra.mxu0 0
  %625 = vmatprep.subr.bf16.mxu0 0
  %626 = vmatpush1.bf16.xpose.msra.mxu0 0
  %627 = vmatprep.subr.bf16.mxu0 0
  %628 = vmatpush1.bf16.xpose.msra.mxu0 0
  %629 = vmatprep.subr.bf16.mxu0 0
  %630 = vmatpush1.bf16.xpose.msra.mxu0 0
  %631 = vmatprep.subr.bf16.mxu0 0
  %632 = vmatpush1.bf16.xpose.msra.mxu0 0
  %633 = vmatprep.subr.bf16.mxu0 0
  %634 = vmatpush1.bf16.xpose.msra.mxu0 0
  %635 = vmatprep.subr.bf16.mxu0 0
  %636 = vmatpush1.bf16.xpose.msra.mxu0 0
  %637 = vmatprep.subr.bf16.mxu0 0
  %638 = vmatpush1.bf16.xpose.msra.mxu0 0
  %639 = vmatprep.subr.bf16.mxu0 0
  %640 = vmatpush1.bf16.xpose.msra.mxu0 0
  %641 = vmatprep.subr.bf16.mxu0 0
  %642 = vmatpush1.bf16.xpose.msra.mxu0 0
  %643 = vmatprep.subr.bf16.mxu0 0
  %644 = vmatpush1.bf16.xpose.msra.mxu0 0
  %645 = vmatprep.subr.bf16.mxu0 0
  %646 = vmatpush1.bf16.xpose.msra.mxu0 0
  %647 = vmatprep.mubr.bf16.mxu0 0
  %648 = vmatmul.mubr.bf16.gmra.mrb[0].mxu0 %v610
  %v649 = vpop.f32.mrb[0].mxu0
  %v650 = vadd.f32 0.0, %v649
  %v651 = vpop.f32.mrb[0].mxu0
  %v652 = vpop.f32.mrb[0].mxu0
  %v653 = vpop.f32.mrb[0].mxu0
  %654 = vdwg.mxu0
  %v655 = vlaneseq
  %v656 = vshrl.u32 %v655, 7
  %v657 = vsub.s32 0, %v656
  %v658 = vrot.slane %v650, %v657
  %v659 = vadd.f32 %v602, %v658
  %v660 = vadd.f32 %v605, %v658
  %s661 = scalar_lea.vmem %s1, 32
  %v662 = vld [vmem:[%s661] sm:$0xff]
  %v663 = vld [vmem:[%s661 + $0x8] sm:$0xff]
  %v664 = vadd.f32 %v659, %v662
  %v665 = vadd.f32 %v660, %v663
  %vm666 = vcmp.gt.f32.partialorder %v664, 0.0
  %vm667 = vcmp.gt.f32.partialorder %v665, 0.0
  %v668 = vmul.f32 %v664, 0.2
  %v669 = vmul.f32 %v665, 0.2
  %v670 = vsel %vm666, %v664, %v668
  %v671 = vsel %vm667, %v665, %v669
  %v672 = vsel %vm89, %v670, -inf
  %673 = vmax.xlane.f32.xlu0 %v672
  %v674 = vpop.xlane.xlu0 %673
  %v675 = vsel %vm89, %v671, -inf
  %676 = vmax.xlane.f32.xlu0 %v675
  %v677 = vpop.xlane.xlu0 %676
  %v678 = vsub.f32 %v670, %v674
  %v679 = vsub.f32 %v671, %v677
  %v680 = vmul.f32 %v678, 1.442695
  %v681 = vpow.pop %v680
  %v682 = vmul.f32 %v679, 1.442695
  %v683 = vpow.pop %v682
  %v684 = vsel %vm89, %v681, 0.0
  %685 = vadd.xlane.f32.xlu0 %v684
  %v686 = vpop.xlane.xlu0 %685
  %v687 = vsel %vm89, %v683, 0.0
  %688 = vadd.xlane.f32.xlu0 %v687
  %v689 = vpop.xlane.xlu0 %688
  %v690 = vrcp.pop %v686
  %v691 = vrcp.pop %v689
  %v692 = vmul.f32 %v686, %v690
  %v693 = vmul.f32 %v689, %v691
  %v694 = vsub.f32 2.0, %v692
  %v695 = vsub.f32 2.0, %v693
  %v696 = vmul.f32 %v690, %v694
  %v697 = vmul.f32 %v691, %v695
  %v698 = vmul.f32 %v681, %v696
  %v699 = vmul.f32 %v683, %v697
  %v700 = vpack.c.bf16 %v699, %v698
  %v701 = vld [vmem:[%s5 + $0xc] sm:$0x1]
  %v702 = vlaneseq
  %v703 = vshrl.u32 %v702, 7
  %v704 = vsub.s32 0, %v703
  %v705 = vrot.slane %v701, %v704
  %v707 = vsel %vm89, %v700, 0
  %709 = vmatprep.subr.bf16.mxu0 0
  %710 = vmatpush1.bf16.msra.mxu0 %v608
  %711 = vmatprep.subr.bf16.mxu0 0
  %712 = vmatpush1.bf16.msra.mxu0 0
  %713 = vmatprep.subr.bf16.mxu0 0
  %714 = vmatpush1.bf16.msra.mxu0 0
  %715 = vmatprep.subr.bf16.mxu0 0
  %716 = vmatpush1.bf16.msra.mxu0 0
  %717 = vmatprep.subr.bf16.mxu0 0
  %718 = vmatpush1.bf16.msra.mxu0 0
  %719 = vmatprep.subr.bf16.mxu0 0
  %720 = vmatpush1.bf16.msra.mxu0 0
  %721 = vmatprep.subr.bf16.mxu0 0
  %722 = vmatpush1.bf16.msra.mxu0 0
  %723 = vmatprep.subr.bf16.mxu0 0
  %724 = vmatpush1.bf16.msra.mxu0 0
  %725 = vmatprep.subr.bf16.mxu0 0
  %726 = vmatpush1.bf16.msra.mxu0 0
  %727 = vmatprep.subr.bf16.mxu0 0
  %728 = vmatpush1.bf16.msra.mxu0 0
  %729 = vmatprep.subr.bf16.mxu0 0
  %730 = vmatpush1.bf16.msra.mxu0 0
  %731 = vmatprep.subr.bf16.mxu0 0
  %732 = vmatpush1.bf16.msra.mxu0 0
  %733 = vmatprep.subr.bf16.mxu0 0
  %734 = vmatpush1.bf16.msra.mxu0 0
  %735 = vmatprep.subr.bf16.mxu0 0
  %736 = vmatpush1.bf16.msra.mxu0 0
  %737 = vmatprep.subr.bf16.mxu0 0
  %738 = vmatpush1.bf16.msra.mxu0 0
  %739 = vmatprep.subr.bf16.mxu0 0
  %740 = vmatpush1.bf16.msra.mxu0 0
  %741 = vmatprep.mubr.bf16.mxu0 0
  %742 = vmatmul.mubr.bf16.gmra.mrb[0].mxu0 %v707
  %v743 = vpop.f32.mrb[0].mxu0
  %v744 = vadd.f32 %v705, %v743
  %v745 = vpop.f32.mrb[0].mxu0
  %v746 = vpop.f32.mrb[0].mxu0
  %v747 = vadd.f32 %v705, %v746
  %v748 = vpop.f32.mrb[0].mxu0
  %749 = vdwg.mxu0
  %vm750 = vcmp.gt.f32.partialorder %v744, 0.0
  %vm751 = vcmp.gt.f32.partialorder %v747, 0.0
  %v752 = vmul.f32 %v744, 0.2
  %v753 = vmul.f32 %v747, 0.2
  %v754 = vsel %vm750, %v744, %v752
  %v755 = vsel %vm751, %v747, %v753
  %v756 = vsel %vm599, %v754, 0.0
  %757 = vadd.xlane.f32.xlu0 %v756
  %v758 = vpop.xlane.xlu0 %757
  %v759 = vsel %vm599, %v755, 0.0
  %760 = vadd.xlane.f32.xlu0 %v759
  %v761 = vpop.xlane.xlu0 %760
  %v762 = vrcp.pop 8.0
  %v763 = vmul.f32 %v758, %v762
  %v764 = vmul.f32 %v761, %v762
  %v765 = vsub.f32 %v754, %v763
  %v766 = vsub.f32 %v755, %v764
  %v767 = vmul.f32 %v765, %v765
  %v768 = vmul.f32 %v766, %v766
  %v769 = vsel %vm599, %v767, 0.0
  %770 = vadd.xlane.f32.xlu0 %v769
  %v771 = vpop.xlane.xlu0 %770
  %v772 = vsel %vm599, %v768, 0.0
  %773 = vadd.xlane.f32.xlu0 %v772
  %v774 = vpop.xlane.xlu0 %773
  %v775 = vmul.f32 %v771, %v762
  %v776 = vmul.f32 %v774, %v762
  %v777 = vadd.f32 %v775, 1e-05
  %v778 = vadd.f32 %v776, 1e-05
  %v779 = vrsqrt.pop %v777
  %v780 = vrsqrt.pop %v778
  %v781 = vmul.f32 %v765, %v779
  %v782 = vmul.f32 %v766, %v780
  %v783 = vld [vmem:[%s5 + $0xd] sm:$0x1]
  %v784 = vlaneseq
  %v785 = vshrl.u32 %v784, 7
  %v786 = vsub.s32 0, %v785
  %v787 = vrot.slane %v783, %v786
  %v788 = vmul.f32 %v781, %v787
  %v789 = vmul.f32 %v782, %v787
  %v790 = vld [vmem:[%s5 + $0xe] sm:$0x1]
  %v791 = vlaneseq
  %v792 = vshrl.u32 %v791, 7
  %v793 = vsub.s32 0, %v792
  %v794 = vrot.slane %v790, %v793
  %v795 = vadd.f32 %v788, %v794
  %v796 = vadd.f32 %v789, %v794
  %797 = vst.msk [vmem:[%s6] sm:$0xff] %vm599, %v795
  %798 = vst.msk [vmem:[%s6 + $0x8] sm:$0xff] %vm599, %v796
  %v799 = vld [vmem:[%s2] sm:$0xff]
  %v800 = vpack.c.bf16 %v799, %v799
  %v801 = vld [vmem:[%s4 + $0x8] sm:$0xf]
  %v802 = vld [vmem:[%s4 + $0xc] sm:$0x1]
  %v803 = vld [vmem:[%s5 + $0xf] sm:$0x1]
  %v804 = vlaneseq
  %v805 = vshrl.u32 %v804, 7
  %v806 = vsub.s32 0, %v805
  %v807 = vrot.slane %v803, %v806
  %v810 = vunpack.c.l.b16 %v801
  %v811 = vunpack.c.l.b16 %v802
  %v812 = vpack.c.b16 %v811, %v810
  %vm813 = vcmask 72704
  %v815 = vsel %vm813, %v800, 0
  %vm817 = vcmask 1043456
  %vm818 = vcmask 1044480
  %v819 = vsel %vm817, 4294967295, 65535
  %v820 = vsel %vm818, %v819, 0
  %v822 = vand.u32 %v812, %v820
  %824 = vmatprep.subr.bf16.mxu0 0
  %825 = vmatpush1.bf16.msra.mxu0 %v822
  %826 = vmatprep.subr.bf16.mxu0 0
  %827 = vmatpush1.bf16.msra.mxu0 0
  %828 = vmatprep.subr.bf16.mxu0 0
  %829 = vmatpush1.bf16.msra.mxu0 0
  %830 = vmatprep.subr.bf16.mxu0 0
  %831 = vmatpush1.bf16.msra.mxu0 0
  %832 = vmatprep.subr.bf16.mxu0 0
  %833 = vmatpush1.bf16.msra.mxu0 0
  %834 = vmatprep.subr.bf16.mxu0 0
  %835 = vmatpush1.bf16.msra.mxu0 0
  %836 = vmatprep.subr.bf16.mxu0 0
  %837 = vmatpush1.bf16.msra.mxu0 0
  %838 = vmatprep.subr.bf16.mxu0 0
  %839 = vmatpush1.bf16.msra.mxu0 0
  %840 = vmatprep.subr.bf16.mxu0 0
  %841 = vmatpush1.bf16.msra.mxu0 0
  %842 = vmatprep.subr.bf16.mxu0 0
  %843 = vmatpush1.bf16.msra.mxu0 0
  %844 = vmatprep.subr.bf16.mxu0 0
  %845 = vmatpush1.bf16.msra.mxu0 0
  %846 = vmatprep.subr.bf16.mxu0 0
  %847 = vmatpush1.bf16.msra.mxu0 0
  %848 = vmatprep.subr.bf16.mxu0 0
  %849 = vmatpush1.bf16.msra.mxu0 0
  %850 = vmatprep.subr.bf16.mxu0 0
  %851 = vmatpush1.bf16.msra.mxu0 0
  %852 = vmatprep.subr.bf16.mxu0 0
  %853 = vmatpush1.bf16.msra.mxu0 0
  %854 = vmatprep.subr.bf16.mxu0 0
  %855 = vmatpush1.bf16.msra.mxu0 0
  %856 = vmatprep.mubr.bf16.mxu0 0
  %857 = vmatmul.mubr.bf16.gmra.mrb[0].mxu0 %v815
  %v858 = vpop.f32.mrb[0].mxu0
  %v859 = vadd.f32 %v807, %v858
  %v860 = vpop.f32.mrb[0].mxu0
  %v861 = vpop.f32.mrb[0].mxu0
  %v862 = vpop.f32.mrb[0].mxu0
  %863 = vdwg.mxu0
  %v864 = vld [vmem:[%s3] sm:$0xff]
  %v865 = vld [vmem:[%s3 + $0x8] sm:$0xf]
  %v866 = vpack.c.bf16 %v865, %v864
  %v867 = vld [vmem:[%s4 + $0xc] sm:$0x3]
  %v868 = vld [vmem:[%s5 + $0x10] sm:$0x1]
  %v869 = vlaneseq
  %v870 = vshrl.u32 %v869, 7
  %v871 = vsub.s32 0, %v870
  %v872 = vrot.slane %v868, %v871
  %v874 = vunpack.c.l.b16 %v867
  %v875 = vpack.c.b16 %v874, %v810
  %876 = vrot.lane.b32.xlu0 %v875, 96
  %v877 = vpop.permute.xlu0 %876
  %vm878 = vcmask 89088
  %v880 = vsel %vm878, %v866, 0
  %vm882 = vcmask 1045504
  %v883 = vsel %vm818, 4294967295, 65535
  %v884 = vsel %vm882, %v883, 0
  %v886 = vand.u32 %v877, %v884
  %888 = vmatprep.subr.bf16.mxu0 0
  %889 = vmatpush1.bf16.msra.mxu0 %v886
  %890 = vmatprep.subr.bf16.mxu0 0
  %891 = vmatpush1.bf16.msra.mxu0 0
  %892 = vmatprep.subr.bf16.mxu0 0
  %893 = vmatpush1.bf16.msra.mxu0 0
  %894 = vmatprep.subr.bf16.mxu0 0
  %895 = vmatpush1.bf16.msra.mxu0 0
  %896 = vmatprep.subr.bf16.mxu0 0
  %897 = vmatpush1.bf16.msra.mxu0 0
  %898 = vmatprep.subr.bf16.mxu0 0
  %899 = vmatpush1.bf16.msra.mxu0 0
  %900 = vmatprep.subr.bf16.mxu0 0
  %901 = vmatpush1.bf16.msra.mxu0 0
  %902 = vmatprep.subr.bf16.mxu0 0
  %903 = vmatpush1.bf16.msra.mxu0 0
  %904 = vmatprep.subr.bf16.mxu0 0
  %905 = vmatpush1.bf16.msra.mxu0 0
  %906 = vmatprep.subr.bf16.mxu0 0
  %907 = vmatpush1.bf16.msra.mxu0 0
  %908 = vmatprep.subr.bf16.mxu0 0
  %909 = vmatpush1.bf16.msra.mxu0 0
  %910 = vmatprep.subr.bf16.mxu0 0
  %911 = vmatpush1.bf16.msra.mxu0 0
  %912 = vmatprep.subr.bf16.mxu0 0
  %913 = vmatpush1.bf16.msra.mxu0 0
  %914 = vmatprep.subr.bf16.mxu0 0
  %915 = vmatpush1.bf16.msra.mxu0 0
  %916 = vmatprep.subr.bf16.mxu0 0
  %917 = vmatpush1.bf16.msra.mxu0 0
  %918 = vmatprep.subr.bf16.mxu0 0
  %919 = vmatpush1.bf16.msra.mxu0 0
  %920 = vmatprep.mubr.bf16.mxu0 0
  %921 = vmatmul.mubr.bf16.gmra.mrb[0].mxu0 %v880
  %v922 = vpop.f32.mrb[0].mxu0
  %v923 = vadd.f32 %v872, %v922
  %v924 = vpop.f32.mrb[0].mxu0
  %v925 = vpop.f32.mrb[0].mxu0
  %v926 = vadd.f32 %v872, %v925
  %v927 = vpop.f32.mrb[0].mxu0
  %928 = vdwg.mxu0
  %v929 = vpack.c.bf16 %v859, %v859
  %v930 = vld [vmem:[%s4 + $0x10] sm:$0xf]
  %v931 = vld [vmem:[%s4 + $0x14] sm:$0xf]
  %v932 = vld [vmem:[%s4 + $0x18] sm:$0xf]
  %v933 = vld [vmem:[%s4 + $0x1c] sm:$0xf]
  %v938 = vunpack.c.l.b16 %v930
  %v939 = vunpack.c.l.b16 %v931
  %v940 = vunpack.c.l.b16 %v932
  %v941 = vunpack.c.l.b16 %v933
  %v942 = vpack.c.b16 %v939, %v938
  %v943 = vpack.c.b16 %v941, %v940
  %vm946 = vcmask 261120
  %v948 = vsel %vm946, %v929, 0
  %950 = vmatprep.subr.bf16.mxu0 0
  %951 = vmatpush1.bf16.msra.mxu0 %v942
  %952 = vmatprep.subr.bf16.mxu0 0
  %953 = vmatpush1.bf16.msra.mxu0 %v943
  %954 = vmatprep.subr.bf16.mxu0 0
  %955 = vmatpush1.bf16.msra.mxu0 0
  %956 = vmatprep.subr.bf16.mxu0 0
  %957 = vmatpush1.bf16.msra.mxu0 0
  %958 = vmatprep.subr.bf16.mxu0 0
  %959 = vmatpush1.bf16.msra.mxu0 0
  %960 = vmatprep.subr.bf16.mxu0 0
  %961 = vmatpush1.bf16.msra.mxu0 0
  %962 = vmatprep.subr.bf16.mxu0 0
  %963 = vmatpush1.bf16.msra.mxu0 0
  %964 = vmatprep.subr.bf16.mxu0 0
  %965 = vmatpush1.bf16.msra.mxu0 0
  %966 = vmatprep.subr.bf16.mxu0 0
  %967 = vmatpush1.bf16.msra.mxu0 0
  %968 = vmatprep.subr.bf16.mxu0 0
  %969 = vmatpush1.bf16.msra.mxu0 0
  %970 = vmatprep.subr.bf16.mxu0 0
  %971 = vmatpush1.bf16.msra.mxu0 0
  %972 = vmatprep.subr.bf16.mxu0 0
  %973 = vmatpush1.bf16.msra.mxu0 0
  %974 = vmatprep.subr.bf16.mxu0 0
  %975 = vmatpush1.bf16.msra.mxu0 0
  %976 = vmatprep.subr.bf16.mxu0 0
  %977 = vmatpush1.bf16.msra.mxu0 0
  %978 = vmatprep.subr.bf16.mxu0 0
  %979 = vmatpush1.bf16.msra.mxu0 0
  %980 = vmatprep.subr.bf16.mxu0 0
  %981 = vmatpush1.bf16.msra.mxu0 0
  %982 = vmatprep.mubr.bf16.mxu0 0
  %983 = vmatmul.mubr.bf16.gmra.mrb[0].mxu0 %v948
  %v984 = vpop.f32.mrb[0].mxu0
  %v985 = vadd.f32 0.0, %v984
  %v986 = vpop.f32.mrb[0].mxu0
  %v987 = vpop.f32.mrb[0].mxu0
  %v988 = vpop.f32.mrb[0].mxu0
  %989 = vdwg.mxu0
  %v990 = vpack.c.bf16 %v985, %v985
  %992 = vrot.lane.b32.xlu0 %v990, 96
  %v993 = vpop.permute.xlu0 %992
  %v995 = vsel %vm599, %v990, 0
  %v998 = vsel %vm599, %v993, 0
  %1000 = vmatprep.subr.bf16.mxu0 0
  %1001 = vmatpush1.bf16.xpose.msra.mxu0 %v998
  %1002 = vmatprep.subr.bf16.mxu0 0
  %1003 = vmatpush1.bf16.xpose.msra.mxu0 0
  %1004 = vmatprep.subr.bf16.mxu0 0
  %1005 = vmatpush1.bf16.xpose.msra.mxu0 0
  %1006 = vmatprep.subr.bf16.mxu0 0
  %1007 = vmatpush1.bf16.xpose.msra.mxu0 0
  %1008 = vmatprep.subr.bf16.mxu0 0
  %1009 = vmatpush1.bf16.xpose.msra.mxu0 0
  %1010 = vmatprep.subr.bf16.mxu0 0
  %1011 = vmatpush1.bf16.xpose.msra.mxu0 0
  %1012 = vmatprep.subr.bf16.mxu0 0
  %1013 = vmatpush1.bf16.xpose.msra.mxu0 0
  %1014 = vmatprep.subr.bf16.mxu0 0
  %1015 = vmatpush1.bf16.xpose.msra.mxu0 0
  %1016 = vmatprep.subr.bf16.mxu0 0
  %1017 = vmatpush1.bf16.xpose.msra.mxu0 0
  %1018 = vmatprep.subr.bf16.mxu0 0
  %1019 = vmatpush1.bf16.xpose.msra.mxu0 0
  %1020 = vmatprep.subr.bf16.mxu0 0
  %1021 = vmatpush1.bf16.xpose.msra.mxu0 0
  %1022 = vmatprep.subr.bf16.mxu0 0
  %1023 = vmatpush1.bf16.xpose.msra.mxu0 0
  %1024 = vmatprep.subr.bf16.mxu0 0
  %1025 = vmatpush1.bf16.xpose.msra.mxu0 0
  %1026 = vmatprep.subr.bf16.mxu0 0
  %1027 = vmatpush1.bf16.xpose.msra.mxu0 0
  %1028 = vmatprep.subr.bf16.mxu0 0
  %1029 = vmatpush1.bf16.xpose.msra.mxu0 0
  %1030 = vmatprep.subr.bf16.mxu0 0
  %1031 = vmatpush1.bf16.xpose.msra.mxu0 0
  %1032 = vmatprep.mubr.bf16.mxu0 0
  %1033 = vmatmul.mubr.bf16.gmra.mrb[0].mxu0 %v995
  %v1034 = vpop.f32.mrb[0].mxu0
  %v1035 = vadd.f32 0.0, %v1034
  %v1036 = vpop.f32.mrb[0].mxu0
  %v1037 = vpop.f32.mrb[0].mxu0
  %v1038 = vpop.f32.mrb[0].mxu0
  %1039 = vdwg.mxu0
  %v1040 = vsel %vm599, %v1035, -inf
  %1041 = vmax.xlane.f32.xlu0 %v1040
  %v1042 = vpop.xlane.xlu0 %1041
  %v1043 = vsub.f32 %v1035, %v1042
  %v1044 = vmul.f32 %v1043, 1.442695
  %v1045 = vpow.pop %v1044
  %v1046 = vsel %vm599, %v1045, 0.0
  %1047 = vadd.xlane.f32.xlu0 %v1046
  %v1048 = vpop.xlane.xlu0 %1047
  %v1049 = vrcp.pop %v1048
  %v1050 = vmul.f32 %v1048, %v1049
  %v1051 = vsub.f32 2.0, %v1050
  %v1052 = vmul.f32 %v1049, %v1051
  %v1053 = vmul.f32 %v1045, %v1052
  %v1054 = vpack.c.bf16 %v1053, %v1053
  %1055 = vrot.lane.b32.xlu0 %v990, 64
  %v1056 = vpop.permute.xlu0 %1055
  %v1058 = vsel %vm599, %v1054, 0
  %v1061 = vsel %vm817, %v1056, 0
  %1063 = vmatprep.subr.bf16.mxu0 0
  %1064 = vmatpush1.bf16.msra.mxu0 %v1061
  %1065 = vmatprep.subr.bf16.mxu0 0
  %1066 = vmatpush1.bf16.msra.mxu0 0
  %1067 = vmatprep.subr.bf16.mxu0 0
  %1068 = vmatpush1.bf16.msra.mxu0 0
  %1069 = vmatprep.subr.bf16.mxu0 0
  %1070 = vmatpush1.bf16.msra.mxu0 0
  %1071 = vmatprep.subr.bf16.mxu0 0
  %1072 = vmatpush1.bf16.msra.mxu0 0
  %1073 = vmatprep.subr.bf16.mxu0 0
  %1074 = vmatpush1.bf16.msra.mxu0 0
  %1075 = vmatprep.subr.bf16.mxu0 0
  %1076 = vmatpush1.bf16.msra.mxu0 0
  %1077 = vmatprep.subr.bf16.mxu0 0
  %1078 = vmatpush1.bf16.msra.mxu0 0
  %1079 = vmatprep.subr.bf16.mxu0 0
  %1080 = vmatpush1.bf16.msra.mxu0 0
  %1081 = vmatprep.subr.bf16.mxu0 0
  %1082 = vmatpush1.bf16.msra.mxu0 0
  %1083 = vmatprep.subr.bf16.mxu0 0
  %1084 = vmatpush1.bf16.msra.mxu0 0
  %1085 = vmatprep.subr.bf16.mxu0 0
  %1086 = vmatpush1.bf16.msra.mxu0 0
  %1087 = vmatprep.subr.bf16.mxu0 0
  %1088 = vmatpush1.bf16.msra.mxu0 0
  %1089 = vmatprep.subr.bf16.mxu0 0
  %1090 = vmatpush1.bf16.msra.mxu0 0
  %1091 = vmatprep.subr.bf16.mxu0 0
  %1092 = vmatpush1.bf16.msra.mxu0 0
  %1093 = vmatprep.subr.bf16.mxu0 0
  %1094 = vmatpush1.bf16.msra.mxu0 0
  %1095 = vmatprep.mubr.bf16.mxu0 0
  %1096 = vmatmul.mubr.bf16.gmra.mrb[0].mxu0 %v1058
  %v1097 = vpop.f32.mrb[0].mxu0
  %v1098 = vadd.f32 0.0, %v1097
  %v1099 = vpop.f32.mrb[0].mxu0
  %v1100 = vpop.f32.mrb[0].mxu0
  %v1101 = vpop.f32.mrb[0].mxu0
  %1102 = vdwg.mxu0
  %1103 = vrot.lane.b32.xlu0 %v990, 120
  %v1104 = vpop.permute.xlu0 %1103
  %1105 = vrot.lane.b32.xlu0 %v990, 88
  %v1106 = vpop.permute.xlu0 %1105
  %v1108 = vsel %vm599, %v1104, 0
  %v1111 = vsel %vm599, %v1106, 0
  %1113 = vmatprep.subr.bf16.mxu0 0
  %1114 = vmatpush1.bf16.xpose.msra.mxu0 %v1111
  %1115 = vmatprep.subr.bf16.mxu0 0
  %1116 = vmatpush1.bf16.xpose.msra.mxu0 0
  %1117 = vmatprep.subr.bf16.mxu0 0
  %1118 = vmatpush1.bf16.xpose.msra.mxu0 0
  %1119 = vmatprep.subr.bf16.mxu0 0
  %1120 = vmatpush1.bf16.xpose.msra.mxu0 0
  %1121 = vmatprep.subr.bf16.mxu0 0
  %1122 = vmatpush1.bf16.xpose.msra.mxu0 0
  %1123 = vmatprep.subr.bf16.mxu0 0
  %1124 = vmatpush1.bf16.xpose.msra.mxu0 0
  %1125 = vmatprep.subr.bf16.mxu0 0
  %1126 = vmatpush1.bf16.xpose.msra.mxu0 0
  %1127 = vmatprep.subr.bf16.mxu0 0
  %1128 = vmatpush1.bf16.xpose.msra.mxu0 0
  %1129 = vmatprep.subr.bf16.mxu0 0
  %1130 = vmatpush1.bf16.xpose.msra.mxu0 0
  %1131 = vmatprep.subr.bf16.mxu0 0
  %1132 = vmatpush1.bf16.xpose.msra.mxu0 0
  %1133 = vmatprep.subr.bf16.mxu0 0
  %1134 = vmatpush1.bf16.xpose.msra.mxu0 0
  %1135 = vmatprep.subr.bf16.mxu0 0
  %1136 = vmatpush1.bf16.xpose.msra.mxu0 0
  %1137 = vmatprep.subr.bf16.mxu0 0
  %1138 = vmatpush1.bf16.xpose.msra.mxu0 0
  %1139 = vmatprep.subr.bf16.mxu0 0
  %1140 = vmatpush1.bf16.xpose.msra.mxu0 0
  %1141 = vmatprep.subr.bf16.mxu0 0
  %1142 = vmatpush1.bf16.xpose.msra.mxu0 0
  %1143 = vmatprep.subr.bf16.mxu0 0
  %1144 = vmatpush1.bf16.xpose.msra.mxu0 0
  %1145 = vmatprep.mubr.bf16.mxu0 0
  %1146 = vmatmul.mubr.bf16.gmra.mrb[0].mxu0 %v1108
  %v1147 = vpop.f32.mrb[0].mxu0
  %v1148 = vadd.f32 0.0, %v1147
  %v1149 = vpop.f32.mrb[0].mxu0
  %v1150 = vpop.f32.mrb[0].mxu0
  %v1151 = vpop.f32.mrb[0].mxu0
  %1152 = vdwg.mxu0
  %v1153 = vsel %vm599, %v1148, -inf
  %1154 = vmax.xlane.f32.xlu0 %v1153
  %v1155 = vpop.xlane.xlu0 %1154
  %v1156 = vsub.f32 %v1148, %v1155
  %v1157 = vmul.f32 %v1156, 1.442695
  %v1158 = vpow.pop %v1157
  %v1159 = vsel %vm599, %v1158, 0.0
  %1160 = vadd.xlane.f32.xlu0 %v1159
  %v1161 = vpop.xlane.xlu0 %1160
  %v1162 = vrcp.pop %v1161
  %v1163 = vmul.f32 %v1161, %v1162
  %v1164 = vsub.f32 2.0, %v1163
  %v1165 = vmul.f32 %v1162, %v1164
  %v1166 = vmul.f32 %v1158, %v1165
  %v1167 = vpack.c.bf16 %v1166, %v1166
  %1168 = vrot.lane.b32.xlu0 %v990, 56
  %v1169 = vpop.permute.xlu0 %1168
  %v1171 = vsel %vm599, %v1167, 0
  %v1174 = vsel %vm817, %v1169, 0
  %1176 = vmatprep.subr.bf16.mxu0 0
  %1177 = vmatpush1.bf16.msra.mxu0 %v1174
  %1178 = vmatprep.subr.bf16.mxu0 0
  %1179 = vmatpush1.bf16.msra.mxu0 0
  %1180 = vmatprep.subr.bf16.mxu0 0
  %1181 = vmatpush1.bf16.msra.mxu0 0
  %1182 = vmatprep.subr.bf16.mxu0 0
  %1183 = vmatpush1.bf16.msra.mxu0 0
  %1184 = vmatprep.subr.bf16.mxu0 0
  %1185 = vmatpush1.bf16.msra.mxu0 0
  %1186 = vmatprep.subr.bf16.mxu0 0
  %1187 = vmatpush1.bf16.msra.mxu0 0
  %1188 = vmatprep.subr.bf16.mxu0 0
  %1189 = vmatpush1.bf16.msra.mxu0 0
  %1190 = vmatprep.subr.bf16.mxu0 0
  %1191 = vmatpush1.bf16.msra.mxu0 0
  %1192 = vmatprep.subr.bf16.mxu0 0
  %1193 = vmatpush1.bf16.msra.mxu0 0
  %1194 = vmatprep.subr.bf16.mxu0 0
  %1195 = vmatpush1.bf16.msra.mxu0 0
  %1196 = vmatprep.subr.bf16.mxu0 0
  %1197 = vmatpush1.bf16.msra.mxu0 0
  %1198 = vmatprep.subr.bf16.mxu0 0
  %1199 = vmatpush1.bf16.msra.mxu0 0
  %1200 = vmatprep.subr.bf16.mxu0 0
  %1201 = vmatpush1.bf16.msra.mxu0 0
  %1202 = vmatprep.subr.bf16.mxu0 0
  %1203 = vmatpush1.bf16.msra.mxu0 0
  %1204 = vmatprep.subr.bf16.mxu0 0
  %1205 = vmatpush1.bf16.msra.mxu0 0
  %1206 = vmatprep.subr.bf16.mxu0 0
  %1207 = vmatpush1.bf16.msra.mxu0 0
  %1208 = vmatprep.mubr.bf16.mxu0 0
  %1209 = vmatmul.mubr.bf16.gmra.mrb[0].mxu0 %v1171
  %v1210 = vpop.f32.mrb[0].mxu0
  %v1211 = vadd.f32 0.0, %v1210
  %v1212 = vpop.f32.mrb[0].mxu0
  %v1213 = vpop.f32.mrb[0].mxu0
  %v1214 = vpop.f32.mrb[0].mxu0
  %1215 = vdwg.mxu0
  %1216 = vrot.lane.b32.xlu0 %v990, 112
  %v1217 = vpop.permute.xlu0 %1216
  %1218 = vrot.lane.b32.xlu0 %v990, 80
  %v1219 = vpop.permute.xlu0 %1218
  %v1221 = vsel %vm599, %v1217, 0
  %v1224 = vsel %vm599, %v1219, 0
  %1226 = vmatprep.subr.bf16.mxu0 0
  %1227 = vmatpush1.bf16.xpose.msra.mxu0 %v1224
  %1228 = vmatprep.subr.bf16.mxu0 0
  %1229 = vmatpush1.bf16.xpose.msra.mxu0 0
  %1230 = vmatprep.subr.bf16.mxu0 0
  %1231 = vmatpush1.bf16.xpose.msra.mxu0 0
  %1232 = vmatprep.subr.bf16.mxu0 0
  %1233 = vmatpush1.bf16.xpose.msra.mxu0 0
  %1234 = vmatprep.subr.bf16.mxu0 0
  %1235 = vmatpush1.bf16.xpose.msra.mxu0 0
  %1236 = vmatprep.subr.bf16.mxu0 0
  %1237 = vmatpush1.bf16.xpose.msra.mxu0 0
  %1238 = vmatprep.subr.bf16.mxu0 0
  %1239 = vmatpush1.bf16.xpose.msra.mxu0 0
  %1240 = vmatprep.subr.bf16.mxu0 0
  %1241 = vmatpush1.bf16.xpose.msra.mxu0 0
  %1242 = vmatprep.subr.bf16.mxu0 0
  %1243 = vmatpush1.bf16.xpose.msra.mxu0 0
  %1244 = vmatprep.subr.bf16.mxu0 0
  %1245 = vmatpush1.bf16.xpose.msra.mxu0 0
  %1246 = vmatprep.subr.bf16.mxu0 0
  %1247 = vmatpush1.bf16.xpose.msra.mxu0 0
  %1248 = vmatprep.subr.bf16.mxu0 0
  %1249 = vmatpush1.bf16.xpose.msra.mxu0 0
  %1250 = vmatprep.subr.bf16.mxu0 0
  %1251 = vmatpush1.bf16.xpose.msra.mxu0 0
  %1252 = vmatprep.subr.bf16.mxu0 0
  %1253 = vmatpush1.bf16.xpose.msra.mxu0 0
  %1254 = vmatprep.subr.bf16.mxu0 0
  %1255 = vmatpush1.bf16.xpose.msra.mxu0 0
  %1256 = vmatprep.subr.bf16.mxu0 0
  %1257 = vmatpush1.bf16.xpose.msra.mxu0 0
  %1258 = vmatprep.mubr.bf16.mxu0 0
  %1259 = vmatmul.mubr.bf16.gmra.mrb[0].mxu0 %v1221
  %v1260 = vpop.f32.mrb[0].mxu0
  %v1261 = vadd.f32 0.0, %v1260
  %v1262 = vpop.f32.mrb[0].mxu0
  %v1263 = vpop.f32.mrb[0].mxu0
  %v1264 = vpop.f32.mrb[0].mxu0
  %1265 = vdwg.mxu0
  %v1266 = vsel %vm599, %v1261, -inf
  %1267 = vmax.xlane.f32.xlu0 %v1266
  %v1268 = vpop.xlane.xlu0 %1267
  %v1269 = vsub.f32 %v1261, %v1268
  %v1270 = vmul.f32 %v1269, 1.442695
  %v1271 = vpow.pop %v1270
  %v1272 = vsel %vm599, %v1271, 0.0
  %1273 = vadd.xlane.f32.xlu0 %v1272
  %v1274 = vpop.xlane.xlu0 %1273
  %v1275 = vrcp.pop %v1274
  %v1276 = vmul.f32 %v1274, %v1275
  %v1277 = vsub.f32 2.0, %v1276
  %v1278 = vmul.f32 %v1275, %v1277
  %v1279 = vmul.f32 %v1271, %v1278
  %v1280 = vpack.c.bf16 %v1279, %v1279
  %1281 = vrot.lane.b32.xlu0 %v990, 48
  %v1282 = vpop.permute.xlu0 %1281
  %v1284 = vsel %vm599, %v1280, 0
  %v1287 = vsel %vm817, %v1282, 0
  %1289 = vmatprep.subr.bf16.mxu0 0
  %1290 = vmatpush1.bf16.msra.mxu0 %v1287
  %1291 = vmatprep.subr.bf16.mxu0 0
  %1292 = vmatpush1.bf16.msra.mxu0 0
  %1293 = vmatprep.subr.bf16.mxu0 0
  %1294 = vmatpush1.bf16.msra.mxu0 0
  %1295 = vmatprep.subr.bf16.mxu0 0
  %1296 = vmatpush1.bf16.msra.mxu0 0
  %1297 = vmatprep.subr.bf16.mxu0 0
  %1298 = vmatpush1.bf16.msra.mxu0 0
  %1299 = vmatprep.subr.bf16.mxu0 0
  %1300 = vmatpush1.bf16.msra.mxu0 0
  %1301 = vmatprep.subr.bf16.mxu0 0
  %1302 = vmatpush1.bf16.msra.mxu0 0
  %1303 = vmatprep.subr.bf16.mxu0 0
  %1304 = vmatpush1.bf16.msra.mxu0 0
  %1305 = vmatprep.subr.bf16.mxu0 0
  %1306 = vmatpush1.bf16.msra.mxu0 0
  %1307 = vmatprep.subr.bf16.mxu0 0
  %1308 = vmatpush1.bf16.msra.mxu0 0
  %1309 = vmatprep.subr.bf16.mxu0 0
  %1310 = vmatpush1.bf16.msra.mxu0 0
  %1311 = vmatprep.subr.bf16.mxu0 0
  %1312 = vmatpush1.bf16.msra.mxu0 0
  %1313 = vmatprep.subr.bf16.mxu0 0
  %1314 = vmatpush1.bf16.msra.mxu0 0
  %1315 = vmatprep.subr.bf16.mxu0 0
  %1316 = vmatpush1.bf16.msra.mxu0 0
  %1317 = vmatprep.subr.bf16.mxu0 0
  %1318 = vmatpush1.bf16.msra.mxu0 0
  %1319 = vmatprep.subr.bf16.mxu0 0
  %1320 = vmatpush1.bf16.msra.mxu0 0
  %1321 = vmatprep.mubr.bf16.mxu0 0
  %1322 = vmatmul.mubr.bf16.gmra.mrb[0].mxu0 %v1284
  %v1323 = vpop.f32.mrb[0].mxu0
  %v1324 = vadd.f32 0.0, %v1323
  %v1325 = vpop.f32.mrb[0].mxu0
  %v1326 = vpop.f32.mrb[0].mxu0
  %v1327 = vpop.f32.mrb[0].mxu0
  %1328 = vdwg.mxu0
  %1329 = vrot.lane.b32.xlu0 %v990, 104
  %v1330 = vpop.permute.xlu0 %1329
  %1331 = vrot.lane.b32.xlu0 %v990, 72
  %v1332 = vpop.permute.xlu0 %1331
  %v1334 = vsel %vm599, %v1330, 0
  %v1337 = vsel %vm599, %v1332, 0
  %1339 = vmatprep.subr.bf16.mxu0 0
  %1340 = vmatpush1.bf16.xpose.msra.mxu0 %v1337
  %1341 = vmatprep.subr.bf16.mxu0 0
  %1342 = vmatpush1.bf16.xpose.msra.mxu0 0
  %1343 = vmatprep.subr.bf16.mxu0 0
  %1344 = vmatpush1.bf16.xpose.msra.mxu0 0
  %1345 = vmatprep.subr.bf16.mxu0 0
  %1346 = vmatpush1.bf16.xpose.msra.mxu0 0
  %1347 = vmatprep.subr.bf16.mxu0 0
  %1348 = vmatpush1.bf16.xpose.msra.mxu0 0
  %1349 = vmatprep.subr.bf16.mxu0 0
  %1350 = vmatpush1.bf16.xpose.msra.mxu0 0
  %1351 = vmatprep.subr.bf16.mxu0 0
  %1352 = vmatpush1.bf16.xpose.msra.mxu0 0
  %1353 = vmatprep.subr.bf16.mxu0 0
  %1354 = vmatpush1.bf16.xpose.msra.mxu0 0
  %1355 = vmatprep.subr.bf16.mxu0 0
  %1356 = vmatpush1.bf16.xpose.msra.mxu0 0
  %1357 = vmatprep.subr.bf16.mxu0 0
  %1358 = vmatpush1.bf16.xpose.msra.mxu0 0
  %1359 = vmatprep.subr.bf16.mxu0 0
  %1360 = vmatpush1.bf16.xpose.msra.mxu0 0
  %1361 = vmatprep.subr.bf16.mxu0 0
  %1362 = vmatpush1.bf16.xpose.msra.mxu0 0
  %1363 = vmatprep.subr.bf16.mxu0 0
  %1364 = vmatpush1.bf16.xpose.msra.mxu0 0
  %1365 = vmatprep.subr.bf16.mxu0 0
  %1366 = vmatpush1.bf16.xpose.msra.mxu0 0
  %1367 = vmatprep.subr.bf16.mxu0 0
  %1368 = vmatpush1.bf16.xpose.msra.mxu0 0
  %1369 = vmatprep.subr.bf16.mxu0 0
  %1370 = vmatpush1.bf16.xpose.msra.mxu0 0
  %1371 = vmatprep.mubr.bf16.mxu0 0
  %1372 = vmatmul.mubr.bf16.gmra.mrb[0].mxu0 %v1334
  %v1373 = vpop.f32.mrb[0].mxu0
  %v1374 = vadd.f32 0.0, %v1373
  %v1375 = vpop.f32.mrb[0].mxu0
  %v1376 = vpop.f32.mrb[0].mxu0
  %v1377 = vpop.f32.mrb[0].mxu0
  %1378 = vdwg.mxu0
  %v1379 = vsel %vm599, %v1374, -inf
  %1380 = vmax.xlane.f32.xlu0 %v1379
  %v1381 = vpop.xlane.xlu0 %1380
  %v1382 = vsub.f32 %v1374, %v1381
  %v1383 = vmul.f32 %v1382, 1.442695
  %v1384 = vpow.pop %v1383
  %v1385 = vsel %vm599, %v1384, 0.0
  %1386 = vadd.xlane.f32.xlu0 %v1385
  %v1387 = vpop.xlane.xlu0 %1386
  %v1388 = vrcp.pop %v1387
  %v1389 = vmul.f32 %v1387, %v1388
  %v1390 = vsub.f32 2.0, %v1389
  %v1391 = vmul.f32 %v1388, %v1390
  %v1392 = vmul.f32 %v1384, %v1391
  %v1393 = vpack.c.bf16 %v1392, %v1392
  %1394 = vrot.lane.b32.xlu0 %v990, 40
  %v1395 = vpop.permute.xlu0 %1394
  %v1397 = vsel %vm599, %v1393, 0
  %v1400 = vsel %vm817, %v1395, 0
  %1402 = vmatprep.subr.bf16.mxu0 0
  %1403 = vmatpush1.bf16.msra.mxu0 %v1400
  %1404 = vmatprep.subr.bf16.mxu0 0
  %1405 = vmatpush1.bf16.msra.mxu0 0
  %1406 = vmatprep.subr.bf16.mxu0 0
  %1407 = vmatpush1.bf16.msra.mxu0 0
  %1408 = vmatprep.subr.bf16.mxu0 0
  %1409 = vmatpush1.bf16.msra.mxu0 0
  %1410 = vmatprep.subr.bf16.mxu0 0
  %1411 = vmatpush1.bf16.msra.mxu0 0
  %1412 = vmatprep.subr.bf16.mxu0 0
  %1413 = vmatpush1.bf16.msra.mxu0 0
  %1414 = vmatprep.subr.bf16.mxu0 0
  %1415 = vmatpush1.bf16.msra.mxu0 0
  %1416 = vmatprep.subr.bf16.mxu0 0
  %1417 = vmatpush1.bf16.msra.mxu0 0
  %1418 = vmatprep.subr.bf16.mxu0 0
  %1419 = vmatpush1.bf16.msra.mxu0 0
  %1420 = vmatprep.subr.bf16.mxu0 0
  %1421 = vmatpush1.bf16.msra.mxu0 0
  %1422 = vmatprep.subr.bf16.mxu0 0
  %1423 = vmatpush1.bf16.msra.mxu0 0
  %1424 = vmatprep.subr.bf16.mxu0 0
  %1425 = vmatpush1.bf16.msra.mxu0 0
  %1426 = vmatprep.subr.bf16.mxu0 0
  %1427 = vmatpush1.bf16.msra.mxu0 0
  %1428 = vmatprep.subr.bf16.mxu0 0
  %1429 = vmatpush1.bf16.msra.mxu0 0
  %1430 = vmatprep.subr.bf16.mxu0 0
  %1431 = vmatpush1.bf16.msra.mxu0 0
  %1432 = vmatprep.subr.bf16.mxu0 0
  %1433 = vmatpush1.bf16.msra.mxu0 0
  %1434 = vmatprep.mubr.bf16.mxu0 0
  %1435 = vmatmul.mubr.bf16.gmra.mrb[0].mxu0 %v1397
  %v1436 = vpop.f32.mrb[0].mxu0
  %v1437 = vadd.f32 0.0, %v1436
  %v1438 = vpop.f32.mrb[0].mxu0
  %v1439 = vpop.f32.mrb[0].mxu0
  %v1440 = vpop.f32.mrb[0].mxu0
  %1441 = vdwg.mxu0
  %1443 = vrot.lane.b32.xlu0 %v1211, 8
  %v1444 = vpop.permute.xlu0 %1443
  %1447 = vrot.lane.b32.xlu0 %v1324, 16
  %v1448 = vpop.permute.xlu0 %1447
  %1451 = vrot.lane.b32.xlu0 %v1437, 24
  %v1452 = vpop.permute.xlu0 %1451
  %v1454 = vsel %vm599, %v1098, %v1444
  %v1455 = vsel %vm89, %v1454, %v1448
  %vm1456 = vcmask 195584
  %v1457 = vsel %vm1456, %v1455, %v1452
  %v1458 = vpack.c.bf16 %v1457, %v1457
  %1459 = vrot.lane.b32.xlu0 %v942, 32
  %v1460 = vpop.permute.xlu0 %1459
  %1461 = vrot.lane.b32.xlu0 %v943, 32
  %v1462 = vpop.permute.xlu0 %1461
  %v1466 = vsel %vm946, %v1458, 0
  %1468 = vmatprep.subr.bf16.mxu0 0
  %1469 = vmatpush1.bf16.msra.mxu0 %v1460
  %1470 = vmatprep.subr.bf16.mxu0 0
  %1471 = vmatpush1.bf16.msra.mxu0 %v1462
  %1472 = vmatprep.subr.bf16.mxu0 0
  %1473 = vmatpush1.bf16.msra.mxu0 0
  %1474 = vmatprep.subr.bf16.mxu0 0
  %1475 = vmatpush1.bf16.msra.mxu0 0
  %1476 = vmatprep.subr.bf16.mxu0 0
  %1477 = vmatpush1.bf16.msra.mxu0 0
  %1478 = vmatprep.subr.bf16.mxu0 0
  %1479 = vmatpush1.bf16.msra.mxu0 0
  %1480 = vmatprep.subr.bf16.mxu0 0
  %1481 = vmatpush1.bf16.msra.mxu0 0
  %1482 = vmatprep.subr.bf16.mxu0 0
  %1483 = vmatpush1.bf16.msra.mxu0 0
  %1484 = vmatprep.subr.bf16.mxu0 0
  %1485 = vmatpush1.bf16.msra.mxu0 0
  %1486 = vmatprep.subr.bf16.mxu0 0
  %1487 = vmatpush1.bf16.msra.mxu0 0
  %1488 = vmatprep.subr.bf16.mxu0 0
  %1489 = vmatpush1.bf16.msra.mxu0 0
  %1490 = vmatprep.subr.bf16.mxu0 0
  %1491 = vmatpush1.bf16.msra.mxu0 0
  %1492 = vmatprep.subr.bf16.mxu0 0
  %1493 = vmatpush1.bf16.msra.mxu0 0
  %1494 = vmatprep.subr.bf16.mxu0 0
  %1495 = vmatpush1.bf16.msra.mxu0 0
  %1496 = vmatprep.subr.bf16.mxu0 0
  %1497 = vmatpush1.bf16.msra.mxu0 0
  %1498 = vmatprep.subr.bf16.mxu0 0
  %1499 = vmatpush1.bf16.msra.mxu0 0
  %1500 = vmatprep.mubr.bf16.mxu0 0
  %1501 = vmatmul.mubr.bf16.gmra.mrb[0].mxu0 %v1466
  %v1502 = vpop.f32.mrb[0].mxu0
  %v1503 = vadd.f32 %v859, %v1502
  %v1504 = vpop.f32.mrb[0].mxu0
  %v1505 = vpop.f32.mrb[0].mxu0
  %v1506 = vpop.f32.mrb[0].mxu0
  %1507 = vdwg.mxu0
  %v1508 = vsel %vm946, %v1503, 0.0
  %1509 = vadd.xlane.f32.xlu0 %v1508
  %v1510 = vpop.xlane.xlu0 %1509
  %v1511 = vrcp.pop 32.0
  %v1512 = vmul.f32 %v1510, %v1511
  %v1513 = vsub.f32 %v1503, %v1512
  %v1514 = vmul.f32 %v1513, %v1513
  %v1515 = vsel %vm946, %v1514, 0.0
  %1516 = vadd.xlane.f32.xlu0 %v1515
  %v1517 = vpop.xlane.xlu0 %1516
  %v1518 = vmul.f32 %v1517, %v1511
  %v1519 = vadd.f32 %v1518, 1e-05
  %v1520 = vrsqrt.pop %v1519
  %v1521 = vmul.f32 %v1513, %v1520
  %v1522 = vld [vmem:[%s5 + $0x13] sm:$0x1]
  %v1523 = vlaneseq
  %v1524 = vshrl.u32 %v1523, 7
  %v1525 = vsub.s32 0, %v1524
  %v1526 = vrot.slane %v1522, %v1525
  %v1527 = vmul.f32 %v1521, %v1526
  %v1528 = vld [vmem:[%s5 + $0x14] sm:$0x1]
  %v1529 = vlaneseq
  %v1530 = vshrl.u32 %v1529, 7
  %v1531 = vsub.s32 0, %v1530
  %v1532 = vrot.slane %v1528, %v1531
  %v1533 = vadd.f32 %v1527, %v1532
  %v1534 = vpack.c.bf16 %v1533, %v1533
  %v1535 = vld [vmem:[%s4 + $0x20] sm:$0xf]
  %v1536 = vld [vmem:[%s4 + $0x24] sm:$0xf]
  %v1537 = vld [vmem:[%s4 + $0x28] sm:$0xf]
  %v1538 = vld [vmem:[%s4 + $0x2c] sm:$0xf]
  %v1539 = vld [vmem:[%s5 + $0x11] sm:$0x1]
  %v1540 = vlaneseq
  %v1541 = vshrl.u32 %v1540, 7
  %v1542 = vsub.s32 0, %v1541
  %v1543 = vrot.slane %v1539, %v1542
  %v1548 = vunpack.c.l.b16 %v1535
  %v1549 = vunpack.c.l.b16 %v1536
  %v1550 = vunpack.c.l.b16 %v1537
  %v1551 = vunpack.c.l.b16 %v1538
  %v1552 = vpack.c.b16 %v1549, %v1548
  %v1553 = vpack.c.b16 %v1551, %v1550
  %v1557 = vsel %vm946, %v1534, 0
  %1559 = vmatprep.subr.bf16.mxu0 0
  %1560 = vmatpush1.bf16.msra.mxu0 %v1552
  %1561 = vmatprep.subr.bf16.mxu0 0
  %1562 = vmatpush1.bf16.msra.mxu0 %v1553
  %1563 = vmatprep.subr.bf16.mxu0 0
  %1564 = vmatpush1.bf16.msra.mxu0 0
  %1565 = vmatprep.subr.bf16.mxu0 0
  %1566 = vmatpush1.bf16.msra.mxu0 0
  %1567 = vmatprep.subr.bf16.mxu0 0
  %1568 = vmatpush1.bf16.msra.mxu0 0
  %1569 = vmatprep.subr.bf16.mxu0 0
  %1570 = vmatpush1.bf16.msra.mxu0 0
  %1571 = vmatprep.subr.bf16.mxu0 0
  %1572 = vmatpush1.bf16.msra.mxu0 0
  %1573 = vmatprep.subr.bf16.mxu0 0
  %1574 = vmatpush1.bf16.msra.mxu0 0
  %1575 = vmatprep.subr.bf16.mxu0 0
  %1576 = vmatpush1.bf16.msra.mxu0 0
  %1577 = vmatprep.subr.bf16.mxu0 0
  %1578 = vmatpush1.bf16.msra.mxu0 0
  %1579 = vmatprep.subr.bf16.mxu0 0
  %1580 = vmatpush1.bf16.msra.mxu0 0
  %1581 = vmatprep.subr.bf16.mxu0 0
  %1582 = vmatpush1.bf16.msra.mxu0 0
  %1583 = vmatprep.subr.bf16.mxu0 0
  %1584 = vmatpush1.bf16.msra.mxu0 0
  %1585 = vmatprep.subr.bf16.mxu0 0
  %1586 = vmatpush1.bf16.msra.mxu0 0
  %1587 = vmatprep.subr.bf16.mxu0 0
  %1588 = vmatpush1.bf16.msra.mxu0 0
  %1589 = vmatprep.subr.bf16.mxu0 0
  %1590 = vmatpush1.bf16.msra.mxu0 0
  %1591 = vmatprep.mubr.bf16.mxu0 0
  %1592 = vmatmul.mubr.bf16.gmra.mrb[0].mxu0 %v1557
  %v1593 = vpop.f32.mrb[0].mxu0
  %v1594 = vadd.f32 %v1543, %v1593
  %v1595 = vpop.f32.mrb[0].mxu0
  %v1596 = vpop.f32.mrb[0].mxu0
  %v1597 = vpop.f32.mrb[0].mxu0
  %1598 = vdwg.mxu0
  %vm1599 = vcmp.gt.f32.partialorder %v1594, 0.0
  %v1600 = vmul.f32 %v1594, 0.2
  %v1601 = vsel %vm1599, %v1594, %v1600
  %v1602 = vpack.c.bf16 %v1601, %v1601
  %v1603 = vld [vmem:[%s4 + $0x90] sm:$0xf]
  %v1604 = vld [vmem:[%s4 + $0x94] sm:$0xf]
  %v1605 = vld [vmem:[%s4 + $0x98] sm:$0xf]
  %v1606 = vld [vmem:[%s4 + $0x9c] sm:$0xf]
  %v1607 = vld [vmem:[%s4 + $0xa0] sm:$0xf]
  %v1608 = vld [vmem:[%s4 + $0xa4] sm:$0xf]
  %v1609 = vld [vmem:[%s4 + $0xa8] sm:$0xf]
  %v1610 = vld [vmem:[%s4 + $0xac] sm:$0xf]
  %v1611 = vld [vmem:[%s4 + $0xb0] sm:$0xf]
  %v1612 = vld [vmem:[%s4 + $0xb4] sm:$0xf]
  %v1613 = vld [vmem:[%s4 + $0xb8] sm:$0xf]
  %v1614 = vld [vmem:[%s4 + $0xbc] sm:$0xf]
  %v1615 = vld [vmem:[%s4 + $0xc0] sm:$0xf]
  %v1616 = vld [vmem:[%s4 + $0xc4] sm:$0xf]
  %v1617 = vld [vmem:[%s4 + $0xc8] sm:$0xf]
  %v1618 = vld [vmem:[%s4 + $0xcc] sm:$0xf]
  %v1619 = vld [vmem:[%s5 + $0x12] sm:$0x1]
  %v1620 = vlaneseq
  %v1621 = vshrl.u32 %v1620, 7
  %v1622 = vsub.s32 0, %v1621
  %v1623 = vrot.slane %v1619, %v1622
  %v1640 = vunpack.c.l.b16 %v1603
  %v1641 = vunpack.c.l.b16 %v1604
  %v1642 = vunpack.c.l.b16 %v1605
  %v1643 = vunpack.c.l.b16 %v1606
  %v1644 = vunpack.c.l.b16 %v1607
  %v1645 = vunpack.c.l.b16 %v1608
  %v1646 = vunpack.c.l.b16 %v1609
  %v1647 = vunpack.c.l.b16 %v1610
  %v1648 = vunpack.c.l.b16 %v1611
  %v1649 = vunpack.c.l.b16 %v1612
  %v1650 = vunpack.c.l.b16 %v1613
  %v1651 = vunpack.c.l.b16 %v1614
  %v1652 = vunpack.c.l.b16 %v1615
  %v1653 = vunpack.c.l.b16 %v1616
  %v1654 = vunpack.c.l.b16 %v1617
  %v1655 = vunpack.c.l.b16 %v1618
  %v1656 = vpack.c.b16 %v1641, %v1640
  %v1657 = vpack.c.b16 %v1643, %v1642
  %v1658 = vpack.c.b16 %v1645, %v1644
  %v1659 = vpack.c.b16 %v1647, %v1646
  %v1660 = vpack.c.b16 %v1649, %v1648
  %v1661 = vpack.c.b16 %v1651, %v1650
  %v1662 = vpack.c.b16 %v1653, %v1652
  %v1663 = vpack.c.b16 %v1655, %v1654
  %1672 = vmatprep.subr.bf16.mxu0 0
  %1673 = vmatpush1.bf16.msra.mxu0 %v1656
  %1674 = vmatprep.subr.bf16.mxu0 0
  %1675 = vmatpush1.bf16.msra.mxu0 %v1657
  %1676 = vmatprep.subr.bf16.mxu0 0
  %1677 = vmatpush1.bf16.msra.mxu0 %v1658
  %1678 = vmatprep.subr.bf16.mxu0 0
  %1679 = vmatpush1.bf16.msra.mxu0 %v1659
  %1680 = vmatprep.subr.bf16.mxu0 0
  %1681 = vmatpush1.bf16.msra.mxu0 %v1660
  %1682 = vmatprep.subr.bf16.mxu0 0
  %1683 = vmatpush1.bf16.msra.mxu0 %v1661
  %1684 = vmatprep.subr.bf16.mxu0 0
  %1685 = vmatpush1.bf16.msra.mxu0 %v1662
  %1686 = vmatprep.subr.bf16.mxu0 0
  %1687 = vmatpush1.bf16.msra.mxu0 %v1663
  %1688 = vmatprep.subr.bf16.mxu0 0
  %1689 = vmatpush1.bf16.msra.mxu0 0
  %1690 = vmatprep.subr.bf16.mxu0 0
  %1691 = vmatpush1.bf16.msra.mxu0 0
  %1692 = vmatprep.subr.bf16.mxu0 0
  %1693 = vmatpush1.bf16.msra.mxu0 0
  %1694 = vmatprep.subr.bf16.mxu0 0
  %1695 = vmatpush1.bf16.msra.mxu0 0
  %1696 = vmatprep.subr.bf16.mxu0 0
  %1697 = vmatpush1.bf16.msra.mxu0 0
  %1698 = vmatprep.subr.bf16.mxu0 0
  %1699 = vmatpush1.bf16.msra.mxu0 0
  %1700 = vmatprep.subr.bf16.mxu0 0
  %1701 = vmatpush1.bf16.msra.mxu0 0
  %1702 = vmatprep.subr.bf16.mxu0 0
  %1703 = vmatpush1.bf16.msra.mxu0 0
  %1704 = vmatprep.mubr.bf16.mxu0 0
  %1705 = vmatmul.mubr.bf16.gmra.mrb[0].mxu0 %v1602
  %v1706 = vpop.f32.mrb[0].mxu0
  %v1707 = vadd.f32 %v1623, %v1706
  %v1708 = vpop.f32.mrb[0].mxu0
  %v1709 = vpop.f32.mrb[0].mxu0
  %v1710 = vpop.f32.mrb[0].mxu0
  %1711 = vdwg.mxu0
  %v1712 = vadd.f32 %v1533, %v1707
  %v1713 = vsel %vm946, %v1712, 0.0
  %1714 = vadd.xlane.f32.xlu0 %v1713
  %v1715 = vpop.xlane.xlu0 %1714
  %v1716 = vmul.f32 %v1715, %v1511
  %v1717 = vsub.f32 %v1712, %v1716
  %v1718 = vmul.f32 %v1717, %v1717
  %v1719 = vsel %vm946, %v1718, 0.0
  %1720 = vadd.xlane.f32.xlu0 %v1719
  %v1721 = vpop.xlane.xlu0 %1720
  %v1722 = vmul.f32 %v1721, %v1511
  %v1723 = vadd.f32 %v1722, 1e-05
  %v1724 = vrsqrt.pop %v1723
  %v1725 = vmul.f32 %v1717, %v1724
  %v1726 = vld [vmem:[%s5 + $0x15] sm:$0x1]
  %v1727 = vlaneseq
  %v1728 = vshrl.u32 %v1727, 7
  %v1729 = vsub.s32 0, %v1728
  %v1730 = vrot.slane %v1726, %v1729
  %v1731 = vmul.f32 %v1725, %v1730
  %v1732 = vld [vmem:[%s5 + $0x16] sm:$0x1]
  %v1733 = vlaneseq
  %v1734 = vshrl.u32 %v1733, 7
  %v1735 = vsub.s32 0, %v1734
  %v1736 = vrot.slane %v1732, %v1735
  %v1737 = vadd.f32 %v1731, %v1736
  %v1738 = vpack.c.bf16 %v1737, %v1737
  %v1739 = vld [vmem:[%s4 + $0x30] sm:$0xf]
  %v1740 = vld [vmem:[%s4 + $0x34] sm:$0xf]
  %v1741 = vld [vmem:[%s4 + $0x38] sm:$0xf]
  %v1742 = vld [vmem:[%s4 + $0x3c] sm:$0xf]
  %v1747 = vunpack.c.l.b16 %v1739
  %v1748 = vunpack.c.l.b16 %v1740
  %v1749 = vunpack.c.l.b16 %v1741
  %v1750 = vunpack.c.l.b16 %v1742
  %v1751 = vpack.c.b16 %v1748, %v1747
  %v1752 = vpack.c.b16 %v1750, %v1749
  %v1756 = vsel %vm946, %v1738, 0
  %1758 = vmatprep.subr.bf16.mxu0 0
  %1759 = vmatpush1.bf16.msra.mxu0 %v1751
  %1760 = vmatprep.subr.bf16.mxu0 0
  %1761 = vmatpush1.bf16.msra.mxu0 %v1752
  %1762 = vmatprep.subr.bf16.mxu0 0
  %1763 = vmatpush1.bf16.msra.mxu0 0
  %1764 = vmatprep.subr.bf16.mxu0 0
  %1765 = vmatpush1.bf16.msra.mxu0 0
  %1766 = vmatprep.subr.bf16.mxu0 0
  %1767 = vmatpush1.bf16.msra.mxu0 0
  %1768 = vmatprep.subr.bf16.mxu0 0
  %1769 = vmatpush1.bf16.msra.mxu0 0
  %1770 = vmatprep.subr.bf16.mxu0 0
  %1771 = vmatpush1.bf16.msra.mxu0 0
  %1772 = vmatprep.subr.bf16.mxu0 0
  %1773 = vmatpush1.bf16.msra.mxu0 0
  %1774 = vmatprep.subr.bf16.mxu0 0
  %1775 = vmatpush1.bf16.msra.mxu0 0
  %1776 = vmatprep.subr.bf16.mxu0 0
  %1777 = vmatpush1.bf16.msra.mxu0 0
  %1778 = vmatprep.subr.bf16.mxu0 0
  %1779 = vmatpush1.bf16.msra.mxu0 0
  %1780 = vmatprep.subr.bf16.mxu0 0
  %1781 = vmatpush1.bf16.msra.mxu0 0
  %1782 = vmatprep.subr.bf16.mxu0 0
  %1783 = vmatpush1.bf16.msra.mxu0 0
  %1784 = vmatprep.subr.bf16.mxu0 0
  %1785 = vmatpush1.bf16.msra.mxu0 0
  %1786 = vmatprep.subr.bf16.mxu0 0
  %1787 = vmatpush1.bf16.msra.mxu0 0
  %1788 = vmatprep.subr.bf16.mxu0 0
  %1789 = vmatpush1.bf16.msra.mxu0 0
  %1790 = vmatprep.mubr.bf16.mxu0 0
  %1791 = vmatmul.mubr.bf16.gmra.mrb[0].mxu0 %v1756
  %v1792 = vpop.f32.mrb[0].mxu0
  %v1793 = vadd.f32 0.0, %v1792
  %v1794 = vpop.f32.mrb[0].mxu0
  %v1795 = vpop.f32.mrb[0].mxu0
  %v1796 = vpop.f32.mrb[0].mxu0
  %1797 = vdwg.mxu0
  %v1798 = vpack.c.bf16 %v1793, %v1793
  %1800 = vrot.lane.b32.xlu0 %v1798, 96
  %v1801 = vpop.permute.xlu0 %1800
  %v1803 = vsel %vm599, %v1798, 0
  %v1806 = vsel %vm599, %v1801, 0
  %1808 = vmatprep.subr.bf16.mxu0 0
  %1809 = vmatpush1.bf16.xpose.msra.mxu0 %v1806
  %1810 = vmatprep.subr.bf16.mxu0 0
  %1811 = vmatpush1.bf16.xpose.msra.mxu0 0
  %1812 = vmatprep.subr.bf16.mxu0 0
  %1813 = vmatpush1.bf16.xpose.msra.mxu0 0
  %1814 = vmatprep.subr.bf16.mxu0 0
  %1815 = vmatpush1.bf16.xpose.msra.mxu0 0
  %1816 = vmatprep.subr.bf16.mxu0 0
  %1817 = vmatpush1.bf16.xpose.msra.mxu0 0
  %1818 = vmatprep.subr.bf16.mxu0 0
  %1819 = vmatpush1.bf16.xpose.msra.mxu0 0
  %1820 = vmatprep.subr.bf16.mxu0 0
  %1821 = vmatpush1.bf16.xpose.msra.mxu0 0
  %1822 = vmatprep.subr.bf16.mxu0 0
  %1823 = vmatpush1.bf16.xpose.msra.mxu0 0
  %1824 = vmatprep.subr.bf16.mxu0 0
  %1825 = vmatpush1.bf16.xpose.msra.mxu0 0
  %1826 = vmatprep.subr.bf16.mxu0 0
  %1827 = vmatpush1.bf16.xpose.msra.mxu0 0
  %1828 = vmatprep.subr.bf16.mxu0 0
  %1829 = vmatpush1.bf16.xpose.msra.mxu0 0
  %1830 = vmatprep.subr.bf16.mxu0 0
  %1831 = vmatpush1.bf16.xpose.msra.mxu0 0
  %1832 = vmatprep.subr.bf16.mxu0 0
  %1833 = vmatpush1.bf16.xpose.msra.mxu0 0
  %1834 = vmatprep.subr.bf16.mxu0 0
  %1835 = vmatpush1.bf16.xpose.msra.mxu0 0
  %1836 = vmatprep.subr.bf16.mxu0 0
  %1837 = vmatpush1.bf16.xpose.msra.mxu0 0
  %1838 = vmatprep.subr.bf16.mxu0 0
  %1839 = vmatpush1.bf16.xpose.msra.mxu0 0
  %1840 = vmatprep.mubr.bf16.mxu0 0
  %1841 = vmatmul.mubr.bf16.gmra.mrb[0].mxu0 %v1803
  %v1842 = vpop.f32.mrb[0].mxu0
  %v1843 = vadd.f32 0.0, %v1842
  %v1844 = vpop.f32.mrb[0].mxu0
  %v1845 = vpop.f32.mrb[0].mxu0
  %v1846 = vpop.f32.mrb[0].mxu0
  %1847 = vdwg.mxu0
  %v1848 = vsel %vm599, %v1843, -inf
  %1849 = vmax.xlane.f32.xlu0 %v1848
  %v1850 = vpop.xlane.xlu0 %1849
  %v1851 = vsub.f32 %v1843, %v1850
  %v1852 = vmul.f32 %v1851, 1.442695
  %v1853 = vpow.pop %v1852
  %v1854 = vsel %vm599, %v1853, 0.0
  %1855 = vadd.xlane.f32.xlu0 %v1854
  %v1856 = vpop.xlane.xlu0 %1855
  %v1857 = vrcp.pop %v1856
  %v1858 = vmul.f32 %v1856, %v1857
  %v1859 = vsub.f32 2.0, %v1858
  %v1860 = vmul.f32 %v1857, %v1859
  %v1861 = vmul.f32 %v1853, %v1860
  %v1862 = vpack.c.bf16 %v1861, %v1861
  %1863 = vrot.lane.b32.xlu0 %v1798, 64
  %v1864 = vpop.permute.xlu0 %1863
  %v1866 = vsel %vm599, %v1862, 0
  %v1869 = vsel %vm817, %v1864, 0
  %1871 = vmatprep.subr.bf16.mxu0 0
  %1872 = vmatpush1.bf16.msra.mxu0 %v1869
  %1873 = vmatprep.subr.bf16.mxu0 0
  %1874 = vmatpush1.bf16.msra.mxu0 0
  %1875 = vmatprep.subr.bf16.mxu0 0
  %1876 = vmatpush1.bf16.msra.mxu0 0
  %1877 = vmatprep.subr.bf16.mxu0 0
  %1878 = vmatpush1.bf16.msra.mxu0 0
  %1879 = vmatprep.subr.bf16.mxu0 0
  %1880 = vmatpush1.bf16.msra.mxu0 0
  %1881 = vmatprep.subr.bf16.mxu0 0
  %1882 = vmatpush1.bf16.msra.mxu0 0
  %1883 = vmatprep.subr.bf16.mxu0 0
  %1884 = vmatpush1.bf16.msra.mxu0 0
  %1885 = vmatprep.subr.bf16.mxu0 0
  %1886 = vmatpush1.bf16.msra.mxu0 0
  %1887 = vmatprep.subr.bf16.mxu0 0
  %1888 = vmatpush1.bf16.msra.mxu0 0
  %1889 = vmatprep.subr.bf16.mxu0 0
  %1890 = vmatpush1.bf16.msra.mxu0 0
  %1891 = vmatprep.subr.bf16.mxu0 0
  %1892 = vmatpush1.bf16.msra.mxu0 0
  %1893 = vmatprep.subr.bf16.mxu0 0
  %1894 = vmatpush1.bf16.msra.mxu0 0
  %1895 = vmatprep.subr.bf16.mxu0 0
  %1896 = vmatpush1.bf16.msra.mxu0 0
  %1897 = vmatprep.subr.bf16.mxu0 0
  %1898 = vmatpush1.bf16.msra.mxu0 0
  %1899 = vmatprep.subr.bf16.mxu0 0
  %1900 = vmatpush1.bf16.msra.mxu0 0
  %1901 = vmatprep.subr.bf16.mxu0 0
  %1902 = vmatpush1.bf16.msra.mxu0 0
  %1903 = vmatprep.mubr.bf16.mxu0 0
  %1904 = vmatmul.mubr.bf16.gmra.mrb[0].mxu0 %v1866
  %v1905 = vpop.f32.mrb[0].mxu0
  %v1906 = vadd.f32 0.0, %v1905
  %v1907 = vpop.f32.mrb[0].mxu0
  %v1908 = vpop.f32.mrb[0].mxu0
  %v1909 = vpop.f32.mrb[0].mxu0
  %1910 = vdwg.mxu0
  %1911 = vrot.lane.b32.xlu0 %v1798, 120
  %v1912 = vpop.permute.xlu0 %1911
  %1913 = vrot.lane.b32.xlu0 %v1798, 88
  %v1914 = vpop.permute.xlu0 %1913
  %v1916 = vsel %vm599, %v1912, 0
  %v1919 = vsel %vm599, %v1914, 0
  %1921 = vmatprep.subr.bf16.mxu0 0
  %1922 = vmatpush1.bf16.xpose.msra.mxu0 %v1919
  %1923 = vmatprep.subr.bf16.mxu0 0
  %1924 = vmatpush1.bf16.xpose.msra.mxu0 0
  %1925 = vmatprep.subr.bf16.mxu0 0
  %1926 = vmatpush1.bf16.xpose.msra.mxu0 0
  %1927 = vmatprep.subr.bf16.mxu0 0
  %1928 = vmatpush1.bf16.xpose.msra.mxu0 0
  %1929 = vmatprep.subr.bf16.mxu0 0
  %1930 = vmatpush1.bf16.xpose.msra.mxu0 0
  %1931 = vmatprep.subr.bf16.mxu0 0
  %1932 = vmatpush1.bf16.xpose.msra.mxu0 0
  %1933 = vmatprep.subr.bf16.mxu0 0
  %1934 = vmatpush1.bf16.xpose.msra.mxu0 0
  %1935 = vmatprep.subr.bf16.mxu0 0
  %1936 = vmatpush1.bf16.xpose.msra.mxu0 0
  %1937 = vmatprep.subr.bf16.mxu0 0
  %1938 = vmatpush1.bf16.xpose.msra.mxu0 0
  %1939 = vmatprep.subr.bf16.mxu0 0
  %1940 = vmatpush1.bf16.xpose.msra.mxu0 0
  %1941 = vmatprep.subr.bf16.mxu0 0
  %1942 = vmatpush1.bf16.xpose.msra.mxu0 0
  %1943 = vmatprep.subr.bf16.mxu0 0
  %1944 = vmatpush1.bf16.xpose.msra.mxu0 0
  %1945 = vmatprep.subr.bf16.mxu0 0
  %1946 = vmatpush1.bf16.xpose.msra.mxu0 0
  %1947 = vmatprep.subr.bf16.mxu0 0
  %1948 = vmatpush1.bf16.xpose.msra.mxu0 0
  %1949 = vmatprep.subr.bf16.mxu0 0
  %1950 = vmatpush1.bf16.xpose.msra.mxu0 0
  %1951 = vmatprep.subr.bf16.mxu0 0
  %1952 = vmatpush1.bf16.xpose.msra.mxu0 0
  %1953 = vmatprep.mubr.bf16.mxu0 0
  %1954 = vmatmul.mubr.bf16.gmra.mrb[0].mxu0 %v1916
  %v1955 = vpop.f32.mrb[0].mxu0
  %v1956 = vadd.f32 0.0, %v1955
  %v1957 = vpop.f32.mrb[0].mxu0
  %v1958 = vpop.f32.mrb[0].mxu0
  %v1959 = vpop.f32.mrb[0].mxu0
  %1960 = vdwg.mxu0
  %v1961 = vsel %vm599, %v1956, -inf
  %1962 = vmax.xlane.f32.xlu0 %v1961
  %v1963 = vpop.xlane.xlu0 %1962
  %v1964 = vsub.f32 %v1956, %v1963
  %v1965 = vmul.f32 %v1964, 1.442695
  %v1966 = vpow.pop %v1965
  %v1967 = vsel %vm599, %v1966, 0.0
  %1968 = vadd.xlane.f32.xlu0 %v1967
  %v1969 = vpop.xlane.xlu0 %1968
  %v1970 = vrcp.pop %v1969
  %v1971 = vmul.f32 %v1969, %v1970
  %v1972 = vsub.f32 2.0, %v1971
  %v1973 = vmul.f32 %v1970, %v1972
  %v1974 = vmul.f32 %v1966, %v1973
  %v1975 = vpack.c.bf16 %v1974, %v1974
  %1976 = vrot.lane.b32.xlu0 %v1798, 56
  %v1977 = vpop.permute.xlu0 %1976
  %v1979 = vsel %vm599, %v1975, 0
  %v1982 = vsel %vm817, %v1977, 0
  %1984 = vmatprep.subr.bf16.mxu0 0
  %1985 = vmatpush1.bf16.msra.mxu0 %v1982
  %1986 = vmatprep.subr.bf16.mxu0 0
  %1987 = vmatpush1.bf16.msra.mxu0 0
  %1988 = vmatprep.subr.bf16.mxu0 0
  %1989 = vmatpush1.bf16.msra.mxu0 0
  %1990 = vmatprep.subr.bf16.mxu0 0
  %1991 = vmatpush1.bf16.msra.mxu0 0
  %1992 = vmatprep.subr.bf16.mxu0 0
  %1993 = vmatpush1.bf16.msra.mxu0 0
  %1994 = vmatprep.subr.bf16.mxu0 0
  %1995 = vmatpush1.bf16.msra.mxu0 0
  %1996 = vmatprep.subr.bf16.mxu0 0
  %1997 = vmatpush1.bf16.msra.mxu0 0
  %1998 = vmatprep.subr.bf16.mxu0 0
  %1999 = vmatpush1.bf16.msra.mxu0 0
  %2000 = vmatprep.subr.bf16.mxu0 0
  %2001 = vmatpush1.bf16.msra.mxu0 0
  %2002 = vmatprep.subr.bf16.mxu0 0
  %2003 = vmatpush1.bf16.msra.mxu0 0
  %2004 = vmatprep.subr.bf16.mxu0 0
  %2005 = vmatpush1.bf16.msra.mxu0 0
  %2006 = vmatprep.subr.bf16.mxu0 0
  %2007 = vmatpush1.bf16.msra.mxu0 0
  %2008 = vmatprep.subr.bf16.mxu0 0
  %2009 = vmatpush1.bf16.msra.mxu0 0
  %2010 = vmatprep.subr.bf16.mxu0 0
  %2011 = vmatpush1.bf16.msra.mxu0 0
  %2012 = vmatprep.subr.bf16.mxu0 0
  %2013 = vmatpush1.bf16.msra.mxu0 0
  %2014 = vmatprep.subr.bf16.mxu0 0
  %2015 = vmatpush1.bf16.msra.mxu0 0
  %2016 = vmatprep.mubr.bf16.mxu0 0
  %2017 = vmatmul.mubr.bf16.gmra.mrb[0].mxu0 %v1979
  %v2018 = vpop.f32.mrb[0].mxu0
  %v2019 = vadd.f32 0.0, %v2018
  %v2020 = vpop.f32.mrb[0].mxu0
  %v2021 = vpop.f32.mrb[0].mxu0
  %v2022 = vpop.f32.mrb[0].mxu0
  %2023 = vdwg.mxu0
  %2024 = vrot.lane.b32.xlu0 %v1798, 112
  %v2025 = vpop.permute.xlu0 %2024
  %2026 = vrot.lane.b32.xlu0 %v1798, 80
  %v2027 = vpop.permute.xlu0 %2026
  %v2029 = vsel %vm599, %v2025, 0
  %v2032 = vsel %vm599, %v2027, 0
  %2034 = vmatprep.subr.bf16.mxu0 0
  %2035 = vmatpush1.bf16.xpose.msra.mxu0 %v2032
  %2036 = vmatprep.subr.bf16.mxu0 0
  %2037 = vmatpush1.bf16.xpose.msra.mxu0 0
  %2038 = vmatprep.subr.bf16.mxu0 0
  %2039 = vmatpush1.bf16.xpose.msra.mxu0 0
  %2040 = vmatprep.subr.bf16.mxu0 0
  %2041 = vmatpush1.bf16.xpose.msra.mxu0 0
  %2042 = vmatprep.subr.bf16.mxu0 0
  %2043 = vmatpush1.bf16.xpose.msra.mxu0 0
  %2044 = vmatprep.subr.bf16.mxu0 0
  %2045 = vmatpush1.bf16.xpose.msra.mxu0 0
  %2046 = vmatprep.subr.bf16.mxu0 0
  %2047 = vmatpush1.bf16.xpose.msra.mxu0 0
  %2048 = vmatprep.subr.bf16.mxu0 0
  %2049 = vmatpush1.bf16.xpose.msra.mxu0 0
  %2050 = vmatprep.subr.bf16.mxu0 0
  %2051 = vmatpush1.bf16.xpose.msra.mxu0 0
  %2052 = vmatprep.subr.bf16.mxu0 0
  %2053 = vmatpush1.bf16.xpose.msra.mxu0 0
  %2054 = vmatprep.subr.bf16.mxu0 0
  %2055 = vmatpush1.bf16.xpose.msra.mxu0 0
  %2056 = vmatprep.subr.bf16.mxu0 0
  %2057 = vmatpush1.bf16.xpose.msra.mxu0 0
  %2058 = vmatprep.subr.bf16.mxu0 0
  %2059 = vmatpush1.bf16.xpose.msra.mxu0 0
  %2060 = vmatprep.subr.bf16.mxu0 0
  %2061 = vmatpush1.bf16.xpose.msra.mxu0 0
  %2062 = vmatprep.subr.bf16.mxu0 0
  %2063 = vmatpush1.bf16.xpose.msra.mxu0 0
  %2064 = vmatprep.subr.bf16.mxu0 0
  %2065 = vmatpush1.bf16.xpose.msra.mxu0 0
  %2066 = vmatprep.mubr.bf16.mxu0 0
  %2067 = vmatmul.mubr.bf16.gmra.mrb[0].mxu0 %v2029
  %v2068 = vpop.f32.mrb[0].mxu0
  %v2069 = vadd.f32 0.0, %v2068
  %v2070 = vpop.f32.mrb[0].mxu0
  %v2071 = vpop.f32.mrb[0].mxu0
  %v2072 = vpop.f32.mrb[0].mxu0
  %2073 = vdwg.mxu0
  %v2074 = vsel %vm599, %v2069, -inf
  %2075 = vmax.xlane.f32.xlu0 %v2074
  %v2076 = vpop.xlane.xlu0 %2075
  %v2077 = vsub.f32 %v2069, %v2076
  %v2078 = vmul.f32 %v2077, 1.442695
  %v2079 = vpow.pop %v2078
  %v2080 = vsel %vm599, %v2079, 0.0
  %2081 = vadd.xlane.f32.xlu0 %v2080
  %v2082 = vpop.xlane.xlu0 %2081
  %v2083 = vrcp.pop %v2082
  %v2084 = vmul.f32 %v2082, %v2083
  %v2085 = vsub.f32 2.0, %v2084
  %v2086 = vmul.f32 %v2083, %v2085
  %v2087 = vmul.f32 %v2079, %v2086
  %v2088 = vpack.c.bf16 %v2087, %v2087
  %2089 = vrot.lane.b32.xlu0 %v1798, 48
  %v2090 = vpop.permute.xlu0 %2089
  %v2092 = vsel %vm599, %v2088, 0
  %v2095 = vsel %vm817, %v2090, 0
  %2097 = vmatprep.subr.bf16.mxu0 0
  %2098 = vmatpush1.bf16.msra.mxu0 %v2095
  %2099 = vmatprep.subr.bf16.mxu0 0
  %2100 = vmatpush1.bf16.msra.mxu0 0
  %2101 = vmatprep.subr.bf16.mxu0 0
  %2102 = vmatpush1.bf16.msra.mxu0 0
  %2103 = vmatprep.subr.bf16.mxu0 0
  %2104 = vmatpush1.bf16.msra.mxu0 0
  %2105 = vmatprep.subr.bf16.mxu0 0
  %2106 = vmatpush1.bf16.msra.mxu0 0
  %2107 = vmatprep.subr.bf16.mxu0 0
  %2108 = vmatpush1.bf16.msra.mxu0 0
  %2109 = vmatprep.subr.bf16.mxu0 0
  %2110 = vmatpush1.bf16.msra.mxu0 0
  %2111 = vmatprep.subr.bf16.mxu0 0
  %2112 = vmatpush1.bf16.msra.mxu0 0
  %2113 = vmatprep.subr.bf16.mxu0 0
  %2114 = vmatpush1.bf16.msra.mxu0 0
  %2115 = vmatprep.subr.bf16.mxu0 0
  %2116 = vmatpush1.bf16.msra.mxu0 0
  %2117 = vmatprep.subr.bf16.mxu0 0
  %2118 = vmatpush1.bf16.msra.mxu0 0
  %2119 = vmatprep.subr.bf16.mxu0 0
  %2120 = vmatpush1.bf16.msra.mxu0 0
  %2121 = vmatprep.subr.bf16.mxu0 0
  %2122 = vmatpush1.bf16.msra.mxu0 0
  %2123 = vmatprep.subr.bf16.mxu0 0
  %2124 = vmatpush1.bf16.msra.mxu0 0
  %2125 = vmatprep.subr.bf16.mxu0 0
  %2126 = vmatpush1.bf16.msra.mxu0 0
  %2127 = vmatprep.subr.bf16.mxu0 0
  %2128 = vmatpush1.bf16.msra.mxu0 0
  %2129 = vmatprep.mubr.bf16.mxu0 0
  %2130 = vmatmul.mubr.bf16.gmra.mrb[0].mxu0 %v2092
  %v2131 = vpop.f32.mrb[0].mxu0
  %v2132 = vadd.f32 0.0, %v2131
  %v2133 = vpop.f32.mrb[0].mxu0
  %v2134 = vpop.f32.mrb[0].mxu0
  %v2135 = vpop.f32.mrb[0].mxu0
  %2136 = vdwg.mxu0
  %2137 = vrot.lane.b32.xlu0 %v1798, 104
  %v2138 = vpop.permute.xlu0 %2137
  %2139 = vrot.lane.b32.xlu0 %v1798, 72
  %v2140 = vpop.permute.xlu0 %2139
  %v2142 = vsel %vm599, %v2138, 0
  %v2145 = vsel %vm599, %v2140, 0
  %2147 = vmatprep.subr.bf16.mxu0 0
  %2148 = vmatpush1.bf16.xpose.msra.mxu0 %v2145
  %2149 = vmatprep.subr.bf16.mxu0 0
  %2150 = vmatpush1.bf16.xpose.msra.mxu0 0
  %2151 = vmatprep.subr.bf16.mxu0 0
  %2152 = vmatpush1.bf16.xpose.msra.mxu0 0
  %2153 = vmatprep.subr.bf16.mxu0 0
  %2154 = vmatpush1.bf16.xpose.msra.mxu0 0
  %2155 = vmatprep.subr.bf16.mxu0 0
  %2156 = vmatpush1.bf16.xpose.msra.mxu0 0
  %2157 = vmatprep.subr.bf16.mxu0 0
  %2158 = vmatpush1.bf16.xpose.msra.mxu0 0
  %2159 = vmatprep.subr.bf16.mxu0 0
  %2160 = vmatpush1.bf16.xpose.msra.mxu0 0
  %2161 = vmatprep.subr.bf16.mxu0 0
  %2162 = vmatpush1.bf16.xpose.msra.mxu0 0
  %2163 = vmatprep.subr.bf16.mxu0 0
  %2164 = vmatpush1.bf16.xpose.msra.mxu0 0
  %2165 = vmatprep.subr.bf16.mxu0 0
  %2166 = vmatpush1.bf16.xpose.msra.mxu0 0
  %2167 = vmatprep.subr.bf16.mxu0 0
  %2168 = vmatpush1.bf16.xpose.msra.mxu0 0
  %2169 = vmatprep.subr.bf16.mxu0 0
  %2170 = vmatpush1.bf16.xpose.msra.mxu0 0
  %2171 = vmatprep.subr.bf16.mxu0 0
  %2172 = vmatpush1.bf16.xpose.msra.mxu0 0
  %2173 = vmatprep.subr.bf16.mxu0 0
  %2174 = vmatpush1.bf16.xpose.msra.mxu0 0
  %2175 = vmatprep.subr.bf16.mxu0 0
  %2176 = vmatpush1.bf16.xpose.msra.mxu0 0
  %2177 = vmatprep.subr.bf16.mxu0 0
  %2178 = vmatpush1.bf16.xpose.msra.mxu0 0
  %2179 = vmatprep.mubr.bf16.mxu0 0
  %2180 = vmatmul.mubr.bf16.gmra.mrb[0].mxu0 %v2142
  %v2181 = vpop.f32.mrb[0].mxu0
  %v2182 = vadd.f32 0.0, %v2181
  %v2183 = vpop.f32.mrb[0].mxu0
  %v2184 = vpop.f32.mrb[0].mxu0
  %v2185 = vpop.f32.mrb[0].mxu0
  %2186 = vdwg.mxu0
  %v2187 = vsel %vm599, %v2182, -inf
  %2188 = vmax.xlane.f32.xlu0 %v2187
  %v2189 = vpop.xlane.xlu0 %2188
  %v2190 = vsub.f32 %v2182, %v2189
  %v2191 = vmul.f32 %v2190, 1.442695
  %v2192 = vpow.pop %v2191
  %v2193 = vsel %vm599, %v2192, 0.0
  %2194 = vadd.xlane.f32.xlu0 %v2193
  %v2195 = vpop.xlane.xlu0 %2194
  %v2196 = vrcp.pop %v2195
  %v2197 = vmul.f32 %v2195, %v2196
  %v2198 = vsub.f32 2.0, %v2197
  %v2199 = vmul.f32 %v2196, %v2198
  %v2200 = vmul.f32 %v2192, %v2199
  %v2201 = vpack.c.bf16 %v2200, %v2200
  %2202 = vrot.lane.b32.xlu0 %v1798, 40
  %v2203 = vpop.permute.xlu0 %2202
  %v2205 = vsel %vm599, %v2201, 0
  %v2208 = vsel %vm817, %v2203, 0
  %2210 = vmatprep.subr.bf16.mxu0 0
  %2211 = vmatpush1.bf16.msra.mxu0 %v2208
  %2212 = vmatprep.subr.bf16.mxu0 0
  %2213 = vmatpush1.bf16.msra.mxu0 0
  %2214 = vmatprep.subr.bf16.mxu0 0
  %2215 = vmatpush1.bf16.msra.mxu0 0
  %2216 = vmatprep.subr.bf16.mxu0 0
  %2217 = vmatpush1.bf16.msra.mxu0 0
  %2218 = vmatprep.subr.bf16.mxu0 0
  %2219 = vmatpush1.bf16.msra.mxu0 0
  %2220 = vmatprep.subr.bf16.mxu0 0
  %2221 = vmatpush1.bf16.msra.mxu0 0
  %2222 = vmatprep.subr.bf16.mxu0 0
  %2223 = vmatpush1.bf16.msra.mxu0 0
  %2224 = vmatprep.subr.bf16.mxu0 0
  %2225 = vmatpush1.bf16.msra.mxu0 0
  %2226 = vmatprep.subr.bf16.mxu0 0
  %2227 = vmatpush1.bf16.msra.mxu0 0
  %2228 = vmatprep.subr.bf16.mxu0 0
  %2229 = vmatpush1.bf16.msra.mxu0 0
  %2230 = vmatprep.subr.bf16.mxu0 0
  %2231 = vmatpush1.bf16.msra.mxu0 0
  %2232 = vmatprep.subr.bf16.mxu0 0
  %2233 = vmatpush1.bf16.msra.mxu0 0
  %2234 = vmatprep.subr.bf16.mxu0 0
  %2235 = vmatpush1.bf16.msra.mxu0 0
  %2236 = vmatprep.subr.bf16.mxu0 0
  %2237 = vmatpush1.bf16.msra.mxu0 0
  %2238 = vmatprep.subr.bf16.mxu0 0
  %2239 = vmatpush1.bf16.msra.mxu0 0
  %2240 = vmatprep.subr.bf16.mxu0 0
  %2241 = vmatpush1.bf16.msra.mxu0 0
  %2242 = vmatprep.mubr.bf16.mxu0 0
  %2243 = vmatmul.mubr.bf16.gmra.mrb[0].mxu0 %v2205
  %v2244 = vpop.f32.mrb[0].mxu0
  %v2245 = vadd.f32 0.0, %v2244
  %v2246 = vpop.f32.mrb[0].mxu0
  %v2247 = vpop.f32.mrb[0].mxu0
  %v2248 = vpop.f32.mrb[0].mxu0
  %2249 = vdwg.mxu0
  %2251 = vrot.lane.b32.xlu0 %v2019, 8
  %v2252 = vpop.permute.xlu0 %2251
  %2255 = vrot.lane.b32.xlu0 %v2132, 16
  %v2256 = vpop.permute.xlu0 %2255
  %2259 = vrot.lane.b32.xlu0 %v2245, 24
  %v2260 = vpop.permute.xlu0 %2259
  %v2262 = vsel %vm599, %v1906, %v2252
  %v2263 = vsel %vm89, %v2262, %v2256
  %v2264 = vsel %vm1456, %v2263, %v2260
  %v2265 = vpack.c.bf16 %v2264, %v2264
  %2266 = vrot.lane.b32.xlu0 %v1751, 32
  %v2267 = vpop.permute.xlu0 %2266
  %2268 = vrot.lane.b32.xlu0 %v1752, 32
  %v2269 = vpop.permute.xlu0 %2268
  %v2273 = vsel %vm946, %v2265, 0
  %2275 = vmatprep.subr.bf16.mxu0 0
  %2276 = vmatpush1.bf16.msra.mxu0 %v2267
  %2277 = vmatprep.subr.bf16.mxu0 0
  %2278 = vmatpush1.bf16.msra.mxu0 %v2269
  %2279 = vmatprep.subr.bf16.mxu0 0
  %2280 = vmatpush1.bf16.msra.mxu0 0
  %2281 = vmatprep.subr.bf16.mxu0 0
  %2282 = vmatpush1.bf16.msra.mxu0 0
  %2283 = vmatprep.subr.bf16.mxu0 0
  %2284 = vmatpush1.bf16.msra.mxu0 0
  %2285 = vmatprep.subr.bf16.mxu0 0
  %2286 = vmatpush1.bf16.msra.mxu0 0
  %2287 = vmatprep.subr.bf16.mxu0 0
  %2288 = vmatpush1.bf16.msra.mxu0 0
  %2289 = vmatprep.subr.bf16.mxu0 0
  %2290 = vmatpush1.bf16.msra.mxu0 0
  %2291 = vmatprep.subr.bf16.mxu0 0
  %2292 = vmatpush1.bf16.msra.mxu0 0
  %2293 = vmatprep.subr.bf16.mxu0 0
  %2294 = vmatpush1.bf16.msra.mxu0 0
  %2295 = vmatprep.subr.bf16.mxu0 0
  %2296 = vmatpush1.bf16.msra.mxu0 0
  %2297 = vmatprep.subr.bf16.mxu0 0
  %2298 = vmatpush1.bf16.msra.mxu0 0
  %2299 = vmatprep.subr.bf16.mxu0 0
  %2300 = vmatpush1.bf16.msra.mxu0 0
  %2301 = vmatprep.subr.bf16.mxu0 0
  %2302 = vmatpush1.bf16.msra.mxu0 0
  %2303 = vmatprep.subr.bf16.mxu0 0
  %2304 = vmatpush1.bf16.msra.mxu0 0
  %2305 = vmatprep.subr.bf16.mxu0 0
  %2306 = vmatpush1.bf16.msra.mxu0 0
  %2307 = vmatprep.mubr.bf16.mxu0 0
  %2308 = vmatmul.mubr.bf16.gmra.mrb[0].mxu0 %v2273
  %v2309 = vpop.f32.mrb[0].mxu0
  %v2310 = vadd.f32 %v1737, %v2309
  %v2311 = vpop.f32.mrb[0].mxu0
  %v2312 = vpop.f32.mrb[0].mxu0
  %v2313 = vpop.f32.mrb[0].mxu0
  %2314 = vdwg.mxu0
  %v2315 = vsel %vm946, %v2310, 0.0
  %2316 = vadd.xlane.f32.xlu0 %v2315
  %v2317 = vpop.xlane.xlu0 %2316
  %v2318 = vmul.f32 %v2317, %v1511
  %v2319 = vsub.f32 %v2310, %v2318
  %v2320 = vmul.f32 %v2319, %v2319
  %v2321 = vsel %vm946, %v2320, 0.0
  %2322 = vadd.xlane.f32.xlu0 %v2321
  %v2323 = vpop.xlane.xlu0 %2322
  %v2324 = vmul.f32 %v2323, %v1511
  %v2325 = vadd.f32 %v2324, 1e-05
  %v2326 = vrsqrt.pop %v2325
  %v2327 = vmul.f32 %v2319, %v2326
  %v2328 = vld [vmem:[%s5 + $0x19] sm:$0x1]
  %v2329 = vlaneseq
  %v2330 = vshrl.u32 %v2329, 7
  %v2331 = vsub.s32 0, %v2330
  %v2332 = vrot.slane %v2328, %v2331
  %v2333 = vmul.f32 %v2327, %v2332
  %v2334 = vld [vmem:[%s5 + $0x1a] sm:$0x1]
  %v2335 = vlaneseq
  %v2336 = vshrl.u32 %v2335, 7
  %v2337 = vsub.s32 0, %v2336
  %v2338 = vrot.slane %v2334, %v2337
  %v2339 = vadd.f32 %v2333, %v2338
  %v2340 = vpack.c.bf16 %v2339, %v2339
  %v2341 = vld [vmem:[%s4 + $0x40] sm:$0xf]
  %v2342 = vld [vmem:[%s4 + $0x44] sm:$0xf]
  %v2343 = vld [vmem:[%s4 + $0x48] sm:$0xf]
  %v2344 = vld [vmem:[%s4 + $0x4c] sm:$0xf]
  %v2345 = vld [vmem:[%s5 + $0x17] sm:$0x1]
  %v2346 = vlaneseq
  %v2347 = vshrl.u32 %v2346, 7
  %v2348 = vsub.s32 0, %v2347
  %v2349 = vrot.slane %v2345, %v2348
  %v2354 = vunpack.c.l.b16 %v2341
  %v2355 = vunpack.c.l.b16 %v2342
  %v2356 = vunpack.c.l.b16 %v2343
  %v2357 = vunpack.c.l.b16 %v2344
  %v2358 = vpack.c.b16 %v2355, %v2354
  %v2359 = vpack.c.b16 %v2357, %v2356
  %v2363 = vsel %vm946, %v2340, 0
  %2365 = vmatprep.subr.bf16.mxu0 0
  %2366 = vmatpush1.bf16.msra.mxu0 %v2358
  %2367 = vmatprep.subr.bf16.mxu0 0
  %2368 = vmatpush1.bf16.msra.mxu0 %v2359
  %2369 = vmatprep.subr.bf16.mxu0 0
  %2370 = vmatpush1.bf16.msra.mxu0 0
  %2371 = vmatprep.subr.bf16.mxu0 0
  %2372 = vmatpush1.bf16.msra.mxu0 0
  %2373 = vmatprep.subr.bf16.mxu0 0
  %2374 = vmatpush1.bf16.msra.mxu0 0
  %2375 = vmatprep.subr.bf16.mxu0 0
  %2376 = vmatpush1.bf16.msra.mxu0 0
  %2377 = vmatprep.subr.bf16.mxu0 0
  %2378 = vmatpush1.bf16.msra.mxu0 0
  %2379 = vmatprep.subr.bf16.mxu0 0
  %2380 = vmatpush1.bf16.msra.mxu0 0
  %2381 = vmatprep.subr.bf16.mxu0 0
  %2382 = vmatpush1.bf16.msra.mxu0 0
  %2383 = vmatprep.subr.bf16.mxu0 0
  %2384 = vmatpush1.bf16.msra.mxu0 0
  %2385 = vmatprep.subr.bf16.mxu0 0
  %2386 = vmatpush1.bf16.msra.mxu0 0
  %2387 = vmatprep.subr.bf16.mxu0 0
  %2388 = vmatpush1.bf16.msra.mxu0 0
  %2389 = vmatprep.subr.bf16.mxu0 0
  %2390 = vmatpush1.bf16.msra.mxu0 0
  %2391 = vmatprep.subr.bf16.mxu0 0
  %2392 = vmatpush1.bf16.msra.mxu0 0
  %2393 = vmatprep.subr.bf16.mxu0 0
  %2394 = vmatpush1.bf16.msra.mxu0 0
  %2395 = vmatprep.subr.bf16.mxu0 0
  %2396 = vmatpush1.bf16.msra.mxu0 0
  %2397 = vmatprep.mubr.bf16.mxu0 0
  %2398 = vmatmul.mubr.bf16.gmra.mrb[0].mxu0 %v2363
  %v2399 = vpop.f32.mrb[0].mxu0
  %v2400 = vadd.f32 %v2349, %v2399
  %v2401 = vpop.f32.mrb[0].mxu0
  %v2402 = vpop.f32.mrb[0].mxu0
  %v2403 = vpop.f32.mrb[0].mxu0
  %2404 = vdwg.mxu0
  %vm2405 = vcmp.gt.f32.partialorder %v2400, 0.0
  %v2406 = vmul.f32 %v2400, 0.2
  %v2407 = vsel %vm2405, %v2400, %v2406
  %v2408 = vpack.c.bf16 %v2407, %v2407
  %v2409 = vld [vmem:[%s5 + $0x18] sm:$0x1]
  %v2410 = vlaneseq
  %v2411 = vshrl.u32 %v2410, 7
  %v2412 = vsub.s32 0, %v2411
  %v2413 = vrot.slane %v2409, %v2412
  %2414 = vrot.lane.b32.xlu0 %v1656, 96
  %v2415 = vpop.permute.xlu0 %2414
  %2416 = vrot.lane.b32.xlu0 %v1657, 96
  %v2417 = vpop.permute.xlu0 %2416
  %2418 = vrot.lane.b32.xlu0 %v1658, 96
  %v2419 = vpop.permute.xlu0 %2418
  %2420 = vrot.lane.b32.xlu0 %v1659, 96
  %v2421 = vpop.permute.xlu0 %2420
  %2422 = vrot.lane.b32.xlu0 %v1660, 96
  %v2423 = vpop.permute.xlu0 %2422
  %2424 = vrot.lane.b32.xlu0 %v1661, 96
  %v2425 = vpop.permute.xlu0 %2424
  %2426 = vrot.lane.b32.xlu0 %v1662, 96
  %v2427 = vpop.permute.xlu0 %2426
  %2428 = vrot.lane.b32.xlu0 %v1663, 96
  %v2429 = vpop.permute.xlu0 %2428
  %2438 = vmatprep.subr.bf16.mxu0 0
  %2439 = vmatpush1.bf16.msra.mxu0 %v2415
  %2440 = vmatprep.subr.bf16.mxu0 0
  %2441 = vmatpush1.bf16.msra.mxu0 %v2417
  %2442 = vmatprep.subr.bf16.mxu0 0
  %2443 = vmatpush1.bf16.msra.mxu0 %v2419
  %2444 = vmatprep.subr.bf16.mxu0 0
  %2445 = vmatpush1.bf16.msra.mxu0 %v2421
  %2446 = vmatprep.subr.bf16.mxu0 0
  %2447 = vmatpush1.bf16.msra.mxu0 %v2423
  %2448 = vmatprep.subr.bf16.mxu0 0
  %2449 = vmatpush1.bf16.msra.mxu0 %v2425
  %2450 = vmatprep.subr.bf16.mxu0 0
  %2451 = vmatpush1.bf16.msra.mxu0 %v2427
  %2452 = vmatprep.subr.bf16.mxu0 0
  %2453 = vmatpush1.bf16.msra.mxu0 %v2429
  %2454 = vmatprep.subr.bf16.mxu0 0
  %2455 = vmatpush1.bf16.msra.mxu0 0
  %2456 = vmatprep.subr.bf16.mxu0 0
  %2457 = vmatpush1.bf16.msra.mxu0 0
  %2458 = vmatprep.subr.bf16.mxu0 0
  %2459 = vmatpush1.bf16.msra.mxu0 0
  %2460 = vmatprep.subr.bf16.mxu0 0
  %2461 = vmatpush1.bf16.msra.mxu0 0
  %2462 = vmatprep.subr.bf16.mxu0 0
  %2463 = vmatpush1.bf16.msra.mxu0 0
  %2464 = vmatprep.subr.bf16.mxu0 0
  %2465 = vmatpush1.bf16.msra.mxu0 0
  %2466 = vmatprep.subr.bf16.mxu0 0
  %2467 = vmatpush1.bf16.msra.mxu0 0
  %2468 = vmatprep.subr.bf16.mxu0 0
  %2469 = vmatpush1.bf16.msra.mxu0 0
  %2470 = vmatprep.mubr.bf16.mxu0 0
  %2471 = vmatmul.mubr.bf16.gmra.mrb[0].mxu0 %v2408
  %v2472 = vpop.f32.mrb[0].mxu0
  %v2473 = vadd.f32 %v2413, %v2472
  %v2474 = vpop.f32.mrb[0].mxu0
  %v2475 = vpop.f32.mrb[0].mxu0
  %v2476 = vpop.f32.mrb[0].mxu0
  %2477 = vdwg.mxu0
  %v2478 = vadd.f32 %v2339, %v2473
  %v2479 = vsel %vm946, %v2478, 0.0
  %2480 = vadd.xlane.f32.xlu0 %v2479
  %v2481 = vpop.xlane.xlu0 %2480
  %v2482 = vmul.f32 %v2481, %v1511
  %v2483 = vsub.f32 %v2478, %v2482
  %v2484 = vmul.f32 %v2483, %v2483
  %v2485 = vsel %vm946, %v2484, 0.0
  %2486 = vadd.xlane.f32.xlu0 %v2485
  %v2487 = vpop.xlane.xlu0 %2486
  %v2488 = vmul.f32 %v2487, %v1511
  %v2489 = vadd.f32 %v2488, 1e-05
  %v2490 = vrsqrt.pop %v2489
  %v2491 = vmul.f32 %v2483, %v2490
  %v2492 = vld [vmem:[%s5 + $0x1b] sm:$0x1]
  %v2493 = vlaneseq
  %v2494 = vshrl.u32 %v2493, 7
  %v2495 = vsub.s32 0, %v2494
  %v2496 = vrot.slane %v2492, %v2495
  %v2497 = vmul.f32 %v2491, %v2496
  %v2498 = vld [vmem:[%s5 + $0x1c] sm:$0x1]
  %v2499 = vlaneseq
  %v2500 = vshrl.u32 %v2499, 7
  %v2501 = vsub.s32 0, %v2500
  %v2502 = vrot.slane %v2498, %v2501
  %v2503 = vadd.f32 %v2497, %v2502
  %v2504 = vpack.c.bf16 %v926, %v923
  %v2505 = vld [vmem:[%s4 + $0x50] sm:$0xf]
  %v2506 = vld [vmem:[%s4 + $0x54] sm:$0xf]
  %v2507 = vld [vmem:[%s4 + $0x58] sm:$0xf]
  %v2508 = vld [vmem:[%s4 + $0x5c] sm:$0xf]
  %v2513 = vunpack.c.l.b16 %v2505
  %v2514 = vunpack.c.l.b16 %v2506
  %v2515 = vunpack.c.l.b16 %v2507
  %v2516 = vunpack.c.l.b16 %v2508
  %v2517 = vpack.c.b16 %v2514, %v2513
  %v2518 = vpack.c.b16 %v2516, %v2515
  %v2522 = vsel %vm946, %v2504, 0
  %2524 = vmatprep.subr.bf16.mxu0 0
  %2525 = vmatpush1.bf16.msra.mxu0 %v2517
  %2526 = vmatprep.subr.bf16.mxu0 0
  %2527 = vmatpush1.bf16.msra.mxu0 %v2518
  %2528 = vmatprep.subr.bf16.mxu0 0
  %2529 = vmatpush1.bf16.msra.mxu0 0
  %2530 = vmatprep.subr.bf16.mxu0 0
  %2531 = vmatpush1.bf16.msra.mxu0 0
  %2532 = vmatprep.subr.bf16.mxu0 0
  %2533 = vmatpush1.bf16.msra.mxu0 0
  %2534 = vmatprep.subr.bf16.mxu0 0
  %2535 = vmatpush1.bf16.msra.mxu0 0
  %2536 = vmatprep.subr.bf16.mxu0 0
  %2537 = vmatpush1.bf16.msra.mxu0 0
  %2538 = vmatprep.subr.bf16.mxu0 0
  %2539 = vmatpush1.bf16.msra.mxu0 0
  %2540 = vmatprep.subr.bf16.mxu0 0
  %2541 = vmatpush1.bf16.msra.mxu0 0
  %2542 = vmatprep.subr.bf16.mxu0 0
  %2543 = vmatpush1.bf16.msra.mxu0 0
  %2544 = vmatprep.subr.bf16.mxu0 0
  %2545 = vmatpush1.bf16.msra.mxu0 0
  %2546 = vmatprep.subr.bf16.mxu0 0
  %2547 = vmatpush1.bf16.msra.mxu0 0
  %2548 = vmatprep.subr.bf16.mxu0 0
  %2549 = vmatpush1.bf16.msra.mxu0 0
  %2550 = vmatprep.subr.bf16.mxu0 0
  %2551 = vmatpush1.bf16.msra.mxu0 0
  %2552 = vmatprep.subr.bf16.mxu0 0
  %2553 = vmatpush1.bf16.msra.mxu0 0
  %2554 = vmatprep.subr.bf16.mxu0 0
  %2555 = vmatpush1.bf16.msra.mxu0 0
  %2556 = vmatprep.mubr.bf16.mxu0 0
  %2557 = vmatmul.mubr.bf16.gmra.mrb[0].mxu0 %v2522
  %v2558 = vpop.f32.mrb[0].mxu0
  %v2559 = vadd.f32 0.0, %v2558
  %v2560 = vpop.f32.mrb[0].mxu0
  %v2561 = vpop.f32.mrb[0].mxu0
  %v2562 = vadd.f32 0.0, %v2561
  %v2563 = vpop.f32.mrb[0].mxu0
  %2564 = vdwg.mxu0
  %v2565 = vpack.c.bf16 %v2562, %v2559
  %2567 = vrot.lane.b32.xlu0 %v2565, 96
  %v2568 = vpop.permute.xlu0 %2567
  %v2570 = vsel %vm599, %v2565, 0
  %v2573 = vsel %vm599, %v2568, 0
  %2575 = vmatprep.subr.bf16.mxu0 0
  %2576 = vmatpush1.bf16.xpose.msra.mxu0 %v2573
  %2577 = vmatprep.subr.bf16.mxu0 0
  %2578 = vmatpush1.bf16.xpose.msra.mxu0 0
  %2579 = vmatprep.subr.bf16.mxu0 0
  %2580 = vmatpush1.bf16.xpose.msra.mxu0 0
  %2581 = vmatprep.subr.bf16.mxu0 0
  %2582 = vmatpush1.bf16.xpose.msra.mxu0 0
  %2583 = vmatprep.subr.bf16.mxu0 0
  %2584 = vmatpush1.bf16.xpose.msra.mxu0 0
  %2585 = vmatprep.subr.bf16.mxu0 0
  %2586 = vmatpush1.bf16.xpose.msra.mxu0 0
  %2587 = vmatprep.subr.bf16.mxu0 0
  %2588 = vmatpush1.bf16.xpose.msra.mxu0 0
  %2589 = vmatprep.subr.bf16.mxu0 0
  %2590 = vmatpush1.bf16.xpose.msra.mxu0 0
  %2591 = vmatprep.subr.bf16.mxu0 0
  %2592 = vmatpush1.bf16.xpose.msra.mxu0 0
  %2593 = vmatprep.subr.bf16.mxu0 0
  %2594 = vmatpush1.bf16.xpose.msra.mxu0 0
  %2595 = vmatprep.subr.bf16.mxu0 0
  %2596 = vmatpush1.bf16.xpose.msra.mxu0 0
  %2597 = vmatprep.subr.bf16.mxu0 0
  %2598 = vmatpush1.bf16.xpose.msra.mxu0 0
  %2599 = vmatprep.subr.bf16.mxu0 0
  %2600 = vmatpush1.bf16.xpose.msra.mxu0 0
  %2601 = vmatprep.subr.bf16.mxu0 0
  %2602 = vmatpush1.bf16.xpose.msra.mxu0 0
  %2603 = vmatprep.subr.bf16.mxu0 0
  %2604 = vmatpush1.bf16.xpose.msra.mxu0 0
  %2605 = vmatprep.subr.bf16.mxu0 0
  %2606 = vmatpush1.bf16.xpose.msra.mxu0 0
  %2607 = vmatprep.mubr.bf16.mxu0 0
  %2608 = vmatmul.mubr.bf16.gmra.mrb[0].mxu0 %v2570
  %v2609 = vpop.f32.mrb[0].mxu0
  %v2610 = vadd.f32 0.0, %v2609
  %v2611 = vpop.f32.mrb[0].mxu0
  %v2612 = vpop.f32.mrb[0].mxu0
  %v2613 = vadd.f32 0.0, %v2612
  %v2614 = vpop.f32.mrb[0].mxu0
  %2615 = vdwg.mxu0
  %vm2616 = vcmask 97280
  %v2617 = vsel %vm2616, %v2610, -inf
  %2618 = vmax.xlane.f32.xlu0 %v2617
  %v2619 = vpop.xlane.xlu0 %2618
  %vm2620 = vcmask 93184
  %v2621 = vsel %vm2620, %v2613, -inf
  %2622 = vmax.xlane.f32.xlu0 %v2621
  %v2623 = vpop.xlane.xlu0 %2622
  %v2624 = vsub.f32 %v2610, %v2619
  %v2625 = vsub.f32 %v2613, %v2623
  %v2626 = vmul.f32 %v2624, 1.442695
  %v2627 = vpow.pop %v2626
  %v2628 = vmul.f32 %v2625, 1.442695
  %v2629 = vpow.pop %v2628
  %v2630 = vsel %vm2616, %v2627, 0.0
  %2631 = vadd.xlane.f32.xlu0 %v2630
  %v2632 = vpop.xlane.xlu0 %2631
  %v2633 = vsel %vm2620, %v2629, 0.0
  %2634 = vadd.xlane.f32.xlu0 %v2633
  %v2635 = vpop.xlane.xlu0 %2634
  %v2636 = vrcp.pop %v2632
  %v2637 = vrcp.pop %v2635
  %v2638 = vmul.f32 %v2632, %v2636
  %v2639 = vmul.f32 %v2635, %v2637
  %v2640 = vsub.f32 2.0, %v2638
  %v2641 = vsub.f32 2.0, %v2639
  %v2642 = vmul.f32 %v2636, %v2640
  %v2643 = vmul.f32 %v2637, %v2641
  %v2644 = vmul.f32 %v2627, %v2642
  %v2645 = vmul.f32 %v2629, %v2643
  %v2646 = vpack.c.bf16 %v2645, %v2644
  %2647 = vrot.lane.b32.xlu0 %v2565, 64
  %v2648 = vpop.permute.xlu0 %2647
  %v2650 = vsel %vm2616, %v2646, 0
  %v2653 = vsel %vm882, %v2648, 0
  %2655 = vmatprep.subr.bf16.mxu0 0
  %2656 = vmatpush1.bf16.msra.mxu0 %v2653
  %2657 = vmatprep.subr.bf16.mxu0 0
  %2658 = vmatpush1.bf16.msra.mxu0 0
  %2659 = vmatprep.subr.bf16.mxu0 0
  %2660 = vmatpush1.bf16.msra.mxu0 0
  %2661 = vmatprep.subr.bf16.mxu0 0
  %2662 = vmatpush1.bf16.msra.mxu0 0
  %2663 = vmatprep.subr.bf16.mxu0 0
  %2664 = vmatpush1.bf16.msra.mxu0 0
  %2665 = vmatprep.subr.bf16.mxu0 0
  %2666 = vmatpush1.bf16.msra.mxu0 0
  %2667 = vmatprep.subr.bf16.mxu0 0
  %2668 = vmatpush1.bf16.msra.mxu0 0
  %2669 = vmatprep.subr.bf16.mxu0 0
  %2670 = vmatpush1.bf16.msra.mxu0 0
  %2671 = vmatprep.subr.bf16.mxu0 0
  %2672 = vmatpush1.bf16.msra.mxu0 0
  %2673 = vmatprep.subr.bf16.mxu0 0
  %2674 = vmatpush1.bf16.msra.mxu0 0
  %2675 = vmatprep.subr.bf16.mxu0 0
  %2676 = vmatpush1.bf16.msra.mxu0 0
  %2677 = vmatprep.subr.bf16.mxu0 0
  %2678 = vmatpush1.bf16.msra.mxu0 0
  %2679 = vmatprep.subr.bf16.mxu0 0
  %2680 = vmatpush1.bf16.msra.mxu0 0
  %2681 = vmatprep.subr.bf16.mxu0 0
  %2682 = vmatpush1.bf16.msra.mxu0 0
  %2683 = vmatprep.subr.bf16.mxu0 0
  %2684 = vmatpush1.bf16.msra.mxu0 0
  %2685 = vmatprep.subr.bf16.mxu0 0
  %2686 = vmatpush1.bf16.msra.mxu0 0
  %2687 = vmatprep.mubr.bf16.mxu0 0
  %2688 = vmatmul.mubr.bf16.gmra.mrb[0].mxu0 %v2650
  %v2689 = vpop.f32.mrb[0].mxu0
  %v2690 = vadd.f32 0.0, %v2689
  %v2691 = vpop.f32.mrb[0].mxu0
  %v2692 = vpop.f32.mrb[0].mxu0
  %v2693 = vadd.f32 0.0, %v2692
  %v2694 = vpop.f32.mrb[0].mxu0
  %2695 = vdwg.mxu0
  %2696 = vrot.lane.b32.xlu0 %v2565, 120
  %v2697 = vpop.permute.xlu0 %2696
  %2698 = vrot.lane.b32.xlu0 %v2565, 88
  %v2699 = vpop.permute.xlu0 %2698
  %v2701 = vsel %vm599, %v2697, 0
  %v2704 = vsel %vm599, %v2699, 0
  %2706 = vmatprep.subr.bf16.mxu0 0
  %2707 = vmatpush1.bf16.xpose.msra.mxu0 %v2704
  %2708 = vmatprep.subr.bf16.mxu0 0
  %2709 = vmatpush1.bf16.xpose.msra.mxu0 0
  %2710 = vmatprep.subr.bf16.mxu0 0
  %2711 = vmatpush1.bf16.xpose.msra.mxu0 0
  %2712 = vmatprep.subr.bf16.mxu0 0
  %2713 = vmatpush1.bf16.xpose.msra.mxu0 0
  %2714 = vmatprep.subr.bf16.mxu0 0
  %2715 = vmatpush1.bf16.xpose.msra.mxu0 0
  %2716 = vmatprep.subr.bf16.mxu0 0
  %2717 = vmatpush1.bf16.xpose.msra.mxu0 0
  %2718 = vmatprep.subr.bf16.mxu0 0
  %2719 = vmatpush1.bf16.xpose.msra.mxu0 0
  %2720 = vmatprep.subr.bf16.mxu0 0
  %2721 = vmatpush1.bf16.xpose.msra.mxu0 0
  %2722 = vmatprep.subr.bf16.mxu0 0
  %2723 = vmatpush1.bf16.xpose.msra.mxu0 0
  %2724 = vmatprep.subr.bf16.mxu0 0
  %2725 = vmatpush1.bf16.xpose.msra.mxu0 0
  %2726 = vmatprep.subr.bf16.mxu0 0
  %2727 = vmatpush1.bf16.xpose.msra.mxu0 0
  %2728 = vmatprep.subr.bf16.mxu0 0
  %2729 = vmatpush1.bf16.xpose.msra.mxu0 0
  %2730 = vmatprep.subr.bf16.mxu0 0
  %2731 = vmatpush1.bf16.xpose.msra.mxu0 0
  %2732 = vmatprep.subr.bf16.mxu0 0
  %2733 = vmatpush1.bf16.xpose.msra.mxu0 0
  %2734 = vmatprep.subr.bf16.mxu0 0
  %2735 = vmatpush1.bf16.xpose.msra.mxu0 0
  %2736 = vmatprep.subr.bf16.mxu0 0
  %2737 = vmatpush1.bf16.xpose.msra.mxu0 0
  %2738 = vmatprep.mubr.bf16.mxu0 0
  %2739 = vmatmul.mubr.bf16.gmra.mrb[0].mxu0 %v2701
  %v2740 = vpop.f32.mrb[0].mxu0
  %v2741 = vadd.f32 0.0, %v2740
  %v2742 = vpop.f32.mrb[0].mxu0
  %v2743 = vpop.f32.mrb[0].mxu0
  %v2744 = vadd.f32 0.0, %v2743
  %v2745 = vpop.f32.mrb[0].mxu0
  %2746 = vdwg.mxu0
  %v2747 = vsel %vm2616, %v2741, -inf
  %2748 = vmax.xlane.f32.xlu0 %v2747
  %v2749 = vpop.xlane.xlu0 %2748
  %v2750 = vsel %vm2620, %v2744, -inf
  %2751 = vmax.xlane.f32.xlu0 %v2750
  %v2752 = vpop.xlane.xlu0 %2751
  %v2753 = vsub.f32 %v2741, %v2749
  %v2754 = vsub.f32 %v2744, %v2752
  %v2755 = vmul.f32 %v2753, 1.442695
  %v2756 = vpow.pop %v2755
  %v2757 = vmul.f32 %v2754, 1.442695
  %v2758 = vpow.pop %v2757
  %v2759 = vsel %vm2616, %v2756, 0.0
  %2760 = vadd.xlane.f32.xlu0 %v2759
  %v2761 = vpop.xlane.xlu0 %2760
  %v2762 = vsel %vm2620, %v2758, 0.0
  %2763 = vadd.xlane.f32.xlu0 %v2762
  %v2764 = vpop.xlane.xlu0 %2763
  %v2765 = vrcp.pop %v2761
  %v2766 = vrcp.pop %v2764
  %v2767 = vmul.f32 %v2761, %v2765
  %v2768 = vmul.f32 %v2764, %v2766
  %v2769 = vsub.f32 2.0, %v2767
  %v2770 = vsub.f32 2.0, %v2768
  %v2771 = vmul.f32 %v2765, %v2769
  %v2772 = vmul.f32 %v2766, %v2770
  %v2773 = vmul.f32 %v2756, %v2771
  %v2774 = vmul.f32 %v2758, %v2772
  %v2775 = vpack.c.bf16 %v2774, %v2773
  %2776 = vrot.lane.b32.xlu0 %v2565, 56
  %v2777 = vpop.permute.xlu0 %2776
  %v2779 = vsel %vm2616, %v2775, 0
  %v2782 = vsel %vm882, %v2777, 0
  %2784 = vmatprep.subr.bf16.mxu0 0
  %2785 = vmatpush1.bf16.msra.mxu0 %v2782
  %2786 = vmatprep.subr.bf16.mxu0 0
  %2787 = vmatpush1.bf16.msra.mxu0 0
  %2788 = vmatprep.subr.bf16.mxu0 0
  %2789 = vmatpush1.bf16.msra.mxu0 0
  %2790 = vmatprep.subr.bf16.mxu0 0
  %2791 = vmatpush1.bf16.msra.mxu0 0
  %2792 = vmatprep.subr.bf16.mxu0 0
  %2793 = vmatpush1.bf16.msra.mxu0 0
  %2794 = vmatprep.subr.bf16.mxu0 0
  %2795 = vmatpush1.bf16.msra.mxu0 0
  %2796 = vmatprep.subr.bf16.mxu0 0
  %2797 = vmatpush1.bf16.msra.mxu0 0
  %2798 = vmatprep.subr.bf16.mxu0 0
  %2799 = vmatpush1.bf16.msra.mxu0 0
  %2800 = vmatprep.subr.bf16.mxu0 0
  %2801 = vmatpush1.bf16.msra.mxu0 0
  %2802 = vmatprep.subr.bf16.mxu0 0
  %2803 = vmatpush1.bf16.msra.mxu0 0
  %2804 = vmatprep.subr.bf16.mxu0 0
  %2805 = vmatpush1.bf16.msra.mxu0 0
  %2806 = vmatprep.subr.bf16.mxu0 0
  %2807 = vmatpush1.bf16.msra.mxu0 0
  %2808 = vmatprep.subr.bf16.mxu0 0
  %2809 = vmatpush1.bf16.msra.mxu0 0
  %2810 = vmatprep.subr.bf16.mxu0 0
  %2811 = vmatpush1.bf16.msra.mxu0 0
  %2812 = vmatprep.subr.bf16.mxu0 0
  %2813 = vmatpush1.bf16.msra.mxu0 0
  %2814 = vmatprep.subr.bf16.mxu0 0
  %2815 = vmatpush1.bf16.msra.mxu0 0
  %2816 = vmatprep.mubr.bf16.mxu0 0
  %2817 = vmatmul.mubr.bf16.gmra.mrb[0].mxu0 %v2779
  %v2818 = vpop.f32.mrb[0].mxu0
  %v2819 = vadd.f32 0.0, %v2818
  %v2820 = vpop.f32.mrb[0].mxu0
  %v2821 = vpop.f32.mrb[0].mxu0
  %v2822 = vadd.f32 0.0, %v2821
  %v2823 = vpop.f32.mrb[0].mxu0
  %2824 = vdwg.mxu0
  %2825 = vrot.lane.b32.xlu0 %v2565, 112
  %v2826 = vpop.permute.xlu0 %2825
  %2827 = vrot.lane.b32.xlu0 %v2565, 80
  %v2828 = vpop.permute.xlu0 %2827
  %v2830 = vsel %vm599, %v2826, 0
  %v2833 = vsel %vm599, %v2828, 0
  %2835 = vmatprep.subr.bf16.mxu0 0
  %2836 = vmatpush1.bf16.xpose.msra.mxu0 %v2833
  %2837 = vmatprep.subr.bf16.mxu0 0
  %2838 = vmatpush1.bf16.xpose.msra.mxu0 0
  %2839 = vmatprep.subr.bf16.mxu0 0
  %2840 = vmatpush1.bf16.xpose.msra.mxu0 0
  %2841 = vmatprep.subr.bf16.mxu0 0
  %2842 = vmatpush1.bf16.xpose.msra.mxu0 0
  %2843 = vmatprep.subr.bf16.mxu0 0
  %2844 = vmatpush1.bf16.xpose.msra.mxu0 0
  %2845 = vmatprep.subr.bf16.mxu0 0
  %2846 = vmatpush1.bf16.xpose.msra.mxu0 0
  %2847 = vmatprep.subr.bf16.mxu0 0
  %2848 = vmatpush1.bf16.xpose.msra.mxu0 0
  %2849 = vmatprep.subr.bf16.mxu0 0
  %2850 = vmatpush1.bf16.xpose.msra.mxu0 0
  %2851 = vmatprep.subr.bf16.mxu0 0
  %2852 = vmatpush1.bf16.xpose.msra.mxu0 0
  %2853 = vmatprep.subr.bf16.mxu0 0
  %2854 = vmatpush1.bf16.xpose.msra.mxu0 0
  %2855 = vmatprep.subr.bf16.mxu0 0
  %2856 = vmatpush1.bf16.xpose.msra.mxu0 0
  %2857 = vmatprep.subr.bf16.mxu0 0
  %2858 = vmatpush1.bf16.xpose.msra.mxu0 0
  %2859 = vmatprep.subr.bf16.mxu0 0
  %2860 = vmatpush1.bf16.xpose.msra.mxu0 0
  %2861 = vmatprep.subr.bf16.mxu0 0
  %2862 = vmatpush1.bf16.xpose.msra.mxu0 0
  %2863 = vmatprep.subr.bf16.mxu0 0
  %2864 = vmatpush1.bf16.xpose.msra.mxu0 0
  %2865 = vmatprep.subr.bf16.mxu0 0
  %2866 = vmatpush1.bf16.xpose.msra.mxu0 0
  %2867 = vmatprep.mubr.bf16.mxu0 0
  %2868 = vmatmul.mubr.bf16.gmra.mrb[0].mxu0 %v2830
  %v2869 = vpop.f32.mrb[0].mxu0
  %v2870 = vadd.f32 0.0, %v2869
  %v2871 = vpop.f32.mrb[0].mxu0
  %v2872 = vpop.f32.mrb[0].mxu0
  %v2873 = vadd.f32 0.0, %v2872
  %v2874 = vpop.f32.mrb[0].mxu0
  %2875 = vdwg.mxu0
  %v2876 = vsel %vm2616, %v2870, -inf
  %2877 = vmax.xlane.f32.xlu0 %v2876
  %v2878 = vpop.xlane.xlu0 %2877
  %v2879 = vsel %vm2620, %v2873, -inf
  %2880 = vmax.xlane.f32.xlu0 %v2879
  %v2881 = vpop.xlane.xlu0 %2880
  %v2882 = vsub.f32 %v2870, %v2878
  %v2883 = vsub.f32 %v2873, %v2881
  %v2884 = vmul.f32 %v2882, 1.442695
  %v2885 = vpow.pop %v2884
  %v2886 = vmul.f32 %v2883, 1.442695
  %v2887 = vpow.pop %v2886
  %v2888 = vsel %vm2616, %v2885, 0.0
  %2889 = vadd.xlane.f32.xlu0 %v2888
  %v2890 = vpop.xlane.xlu0 %2889
  %v2891 = vsel %vm2620, %v2887, 0.0
  %2892 = vadd.xlane.f32.xlu0 %v2891
  %v2893 = vpop.xlane.xlu0 %2892
  %v2894 = vrcp.pop %v2890
  %v2895 = vrcp.pop %v2893
  %v2896 = vmul.f32 %v2890, %v2894
  %v2897 = vmul.f32 %v2893, %v2895
  %v2898 = vsub.f32 2.0, %v2896
  %v2899 = vsub.f32 2.0, %v2897
  %v2900 = vmul.f32 %v2894, %v2898
  %v2901 = vmul.f32 %v2895, %v2899
  %v2902 = vmul.f32 %v2885, %v2900
  %v2903 = vmul.f32 %v2887, %v2901
  %v2904 = vpack.c.bf16 %v2903, %v2902
  %2905 = vrot.lane.b32.xlu0 %v2565, 48
  %v2906 = vpop.permute.xlu0 %2905
  %v2908 = vsel %vm2616, %v2904, 0
  %v2911 = vsel %vm882, %v2906, 0
  %2913 = vmatprep.subr.bf16.mxu0 0
  %2914 = vmatpush1.bf16.msra.mxu0 %v2911
  %2915 = vmatprep.subr.bf16.mxu0 0
  %2916 = vmatpush1.bf16.msra.mxu0 0
  %2917 = vmatprep.subr.bf16.mxu0 0
  %2918 = vmatpush1.bf16.msra.mxu0 0
  %2919 = vmatprep.subr.bf16.mxu0 0
  %2920 = vmatpush1.bf16.msra.mxu0 0
  %2921 = vmatprep.subr.bf16.mxu0 0
  %2922 = vmatpush1.bf16.msra.mxu0 0
  %2923 = vmatprep.subr.bf16.mxu0 0
  %2924 = vmatpush1.bf16.msra.mxu0 0
  %2925 = vmatprep.subr.bf16.mxu0 0
  %2926 = vmatpush1.bf16.msra.mxu0 0
  %2927 = vmatprep.subr.bf16.mxu0 0
  %2928 = vmatpush1.bf16.msra.mxu0 0
  %2929 = vmatprep.subr.bf16.mxu0 0
  %2930 = vmatpush1.bf16.msra.mxu0 0
  %2931 = vmatprep.subr.bf16.mxu0 0
  %2932 = vmatpush1.bf16.msra.mxu0 0
  %2933 = vmatprep.subr.bf16.mxu0 0
  %2934 = vmatpush1.bf16.msra.mxu0 0
  %2935 = vmatprep.subr.bf16.mxu0 0
  %2936 = vmatpush1.bf16.msra.mxu0 0
  %2937 = vmatprep.subr.bf16.mxu0 0
  %2938 = vmatpush1.bf16.msra.mxu0 0
  %2939 = vmatprep.subr.bf16.mxu0 0
  %2940 = vmatpush1.bf16.msra.mxu0 0
  %2941 = vmatprep.subr.bf16.mxu0 0
  %2942 = vmatpush1.bf16.msra.mxu0 0
  %2943 = vmatprep.subr.bf16.mxu0 0
  %2944 = vmatpush1.bf16.msra.mxu0 0
  %2945 = vmatprep.mubr.bf16.mxu0 0
  %2946 = vmatmul.mubr.bf16.gmra.mrb[0].mxu0 %v2908
  %v2947 = vpop.f32.mrb[0].mxu0
  %v2948 = vadd.f32 0.0, %v2947
  %v2949 = vpop.f32.mrb[0].mxu0
  %v2950 = vpop.f32.mrb[0].mxu0
  %v2951 = vadd.f32 0.0, %v2950
  %v2952 = vpop.f32.mrb[0].mxu0
  %2953 = vdwg.mxu0
  %2954 = vrot.lane.b32.xlu0 %v2565, 104
  %v2955 = vpop.permute.xlu0 %2954
  %2956 = vrot.lane.b32.xlu0 %v2565, 72
  %v2957 = vpop.permute.xlu0 %2956
  %v2959 = vsel %vm599, %v2955, 0
  %v2962 = vsel %vm599, %v2957, 0
  %2964 = vmatprep.subr.bf16.mxu0 0
  %2965 = vmatpush1.bf16.xpose.msra.mxu0 %v2962
  %2966 = vmatprep.subr.bf16.mxu0 0
  %2967 = vmatpush1.bf16.xpose.msra.mxu0 0
  %2968 = vmatprep.subr.bf16.mxu0 0
  %2969 = vmatpush1.bf16.xpose.msra.mxu0 0
  %2970 = vmatprep.subr.bf16.mxu0 0
  %2971 = vmatpush1.bf16.xpose.msra.mxu0 0
  %2972 = vmatprep.subr.bf16.mxu0 0
  %2973 = vmatpush1.bf16.xpose.msra.mxu0 0
  %2974 = vmatprep.subr.bf16.mxu0 0
  %2975 = vmatpush1.bf16.xpose.msra.mxu0 0
  %2976 = vmatprep.subr.bf16.mxu0 0
  %2977 = vmatpush1.bf16.xpose.msra.mxu0 0
  %2978 = vmatprep.subr.bf16.mxu0 0
  %2979 = vmatpush1.bf16.xpose.msra.mxu0 0
  %2980 = vmatprep.subr.bf16.mxu0 0
  %2981 = vmatpush1.bf16.xpose.msra.mxu0 0
  %2982 = vmatprep.subr.bf16.mxu0 0
  %2983 = vmatpush1.bf16.xpose.msra.mxu0 0
  %2984 = vmatprep.subr.bf16.mxu0 0
  %2985 = vmatpush1.bf16.xpose.msra.mxu0 0
  %2986 = vmatprep.subr.bf16.mxu0 0
  %2987 = vmatpush1.bf16.xpose.msra.mxu0 0
  %2988 = vmatprep.subr.bf16.mxu0 0
  %2989 = vmatpush1.bf16.xpose.msra.mxu0 0
  %2990 = vmatprep.subr.bf16.mxu0 0
  %2991 = vmatpush1.bf16.xpose.msra.mxu0 0
  %2992 = vmatprep.subr.bf16.mxu0 0
  %2993 = vmatpush1.bf16.xpose.msra.mxu0 0
  %2994 = vmatprep.subr.bf16.mxu0 0
  %2995 = vmatpush1.bf16.xpose.msra.mxu0 0
  %2996 = vmatprep.mubr.bf16.mxu0 0
  %2997 = vmatmul.mubr.bf16.gmra.mrb[0].mxu0 %v2959
  %v2998 = vpop.f32.mrb[0].mxu0
  %v2999 = vadd.f32 0.0, %v2998
  %v3000 = vpop.f32.mrb[0].mxu0
  %v3001 = vpop.f32.mrb[0].mxu0
  %v3002 = vadd.f32 0.0, %v3001
  %v3003 = vpop.f32.mrb[0].mxu0
  %3004 = vdwg.mxu0
  %v3005 = vsel %vm2616, %v2999, -inf
  %3006 = vmax.xlane.f32.xlu0 %v3005
  %v3007 = vpop.xlane.xlu0 %3006
  %v3008 = vsel %vm2620, %v3002, -inf
  %3009 = vmax.xlane.f32.xlu0 %v3008
  %v3010 = vpop.xlane.xlu0 %3009
  %v3011 = vsub.f32 %v2999, %v3007
  %v3012 = vsub.f32 %v3002, %v3010
  %v3013 = vmul.f32 %v3011, 1.442695
  %v3014 = vpow.pop %v3013
  %v3015 = vmul.f32 %v3012, 1.442695
  %v3016 = vpow.pop %v3015
  %v3017 = vsel %vm2616, %v3014, 0.0
  %3018 = vadd.xlane.f32.xlu0 %v3017
  %v3019 = vpop.xlane.xlu0 %3018
  %v3020 = vsel %vm2620, %v3016, 0.0
  %3021 = vadd.xlane.f32.xlu0 %v3020
  %v3022 = vpop.xlane.xlu0 %3021
  %v3023 = vrcp.pop %v3019
  %v3024 = vrcp.pop %v3022
  %v3025 = vmul.f32 %v3019, %v3023
  %v3026 = vmul.f32 %v3022, %v3024
  %v3027 = vsub.f32 2.0, %v3025
  %v3028 = vsub.f32 2.0, %v3026
  %v3029 = vmul.f32 %v3023, %v3027
  %v3030 = vmul.f32 %v3024, %v3028
  %v3031 = vmul.f32 %v3014, %v3029
  %v3032 = vmul.f32 %v3016, %v3030
  %v3033 = vpack.c.bf16 %v3032, %v3031
  %3034 = vrot.lane.b32.xlu0 %v2565, 40
  %v3035 = vpop.permute.xlu0 %3034
  %v3037 = vsel %vm2616, %v3033, 0
  %v3040 = vsel %vm882, %v3035, 0
  %3042 = vmatprep.subr.bf16.mxu0 0
  %3043 = vmatpush1.bf16.msra.mxu0 %v3040
  %3044 = vmatprep.subr.bf16.mxu0 0
  %3045 = vmatpush1.bf16.msra.mxu0 0
  %3046 = vmatprep.subr.bf16.mxu0 0
  %3047 = vmatpush1.bf16.msra.mxu0 0
  %3048 = vmatprep.subr.bf16.mxu0 0
  %3049 = vmatpush1.bf16.msra.mxu0 0
  %3050 = vmatprep.subr.bf16.mxu0 0
  %3051 = vmatpush1.bf16.msra.mxu0 0
  %3052 = vmatprep.subr.bf16.mxu0 0
  %3053 = vmatpush1.bf16.msra.mxu0 0
  %3054 = vmatprep.subr.bf16.mxu0 0
  %3055 = vmatpush1.bf16.msra.mxu0 0
  %3056 = vmatprep.subr.bf16.mxu0 0
  %3057 = vmatpush1.bf16.msra.mxu0 0
  %3058 = vmatprep.subr.bf16.mxu0 0
  %3059 = vmatpush1.bf16.msra.mxu0 0
  %3060 = vmatprep.subr.bf16.mxu0 0
  %3061 = vmatpush1.bf16.msra.mxu0 0
  %3062 = vmatprep.subr.bf16.mxu0 0
  %3063 = vmatpush1.bf16.msra.mxu0 0
  %3064 = vmatprep.subr.bf16.mxu0 0
  %3065 = vmatpush1.bf16.msra.mxu0 0
  %3066 = vmatprep.subr.bf16.mxu0 0
  %3067 = vmatpush1.bf16.msra.mxu0 0
  %3068 = vmatprep.subr.bf16.mxu0 0
  %3069 = vmatpush1.bf16.msra.mxu0 0
  %3070 = vmatprep.subr.bf16.mxu0 0
  %3071 = vmatpush1.bf16.msra.mxu0 0
  %3072 = vmatprep.subr.bf16.mxu0 0
  %3073 = vmatpush1.bf16.msra.mxu0 0
  %3074 = vmatprep.mubr.bf16.mxu0 0
  %3075 = vmatmul.mubr.bf16.gmra.mrb[0].mxu0 %v3037
  %v3076 = vpop.f32.mrb[0].mxu0
  %v3077 = vadd.f32 0.0, %v3076
  %v3078 = vpop.f32.mrb[0].mxu0
  %v3079 = vpop.f32.mrb[0].mxu0
  %v3080 = vadd.f32 0.0, %v3079
  %v3081 = vpop.f32.mrb[0].mxu0
  %3082 = vdwg.mxu0
  %3085 = vrot.lane.b32.xlu0 %v2819, 8
  %v3086 = vpop.permute.xlu0 %3085
  %3087 = vrot.lane.b32.xlu0 %v2822, 8
  %v3088 = vpop.permute.xlu0 %3087
  %3093 = vrot.lane.b32.xlu0 %v2948, 16
  %v3094 = vpop.permute.xlu0 %3093
  %3095 = vrot.lane.b32.xlu0 %v2951, 16
  %v3096 = vpop.permute.xlu0 %3095
  %3101 = vrot.lane.b32.xlu0 %v3077, 24
  %v3102 = vpop.permute.xlu0 %3101
  %3103 = vrot.lane.b32.xlu0 %v3080, 24
  %v3104 = vpop.permute.xlu0 %3103
  %v3107 = vsel %vm599, %v2690, %v3086
  %v3108 = vsel %vm599, %v2693, %v3088
  %v3109 = vsel %vm89, %v3107, %v3094
  %v3110 = vsel %vm89, %v3108, %v3096
  %v3111 = vsel %vm1456, %v3109, %v3102
  %v3112 = vsel %vm1456, %v3110, %v3104
  %v3113 = vpack.c.bf16 %v3112, %v3111
  %3114 = vrot.lane.b32.xlu0 %v2517, 32
  %v3115 = vpop.permute.xlu0 %3114
  %3116 = vrot.lane.b32.xlu0 %v2518, 32
  %v3117 = vpop.permute.xlu0 %3116
  %v3121 = vsel %vm946, %v3113, 0
  %3123 = vmatprep.subr.bf16.mxu0 0
  %3124 = vmatpush1.bf16.msra.mxu0 %v3115
  %3125 = vmatprep.subr.bf16.mxu0 0
  %3126 = vmatpush1.bf16.msra.mxu0 %v3117
  %3127 = vmatprep.subr.bf16.mxu0 0
  %3128 = vmatpush1.bf16.msra.mxu0 0
  %3129 = vmatprep.subr.bf16.mxu0 0
  %3130 = vmatpush1.bf16.msra.mxu0 0
  %3131 = vmatprep.subr.bf16.mxu0 0
  %3132 = vmatpush1.bf16.msra.mxu0 0
  %3133 = vmatprep.subr.bf16.mxu0 0
  %3134 = vmatpush1.bf16.msra.mxu0 0
  %3135 = vmatprep.subr.bf16.mxu0 0
  %3136 = vmatpush1.bf16.msra.mxu0 0
  %3137 = vmatprep.subr.bf16.mxu0 0
  %3138 = vmatpush1.bf16.msra.mxu0 0
  %3139 = vmatprep.subr.bf16.mxu0 0
  %3140 = vmatpush1.bf16.msra.mxu0 0
  %3141 = vmatprep.subr.bf16.mxu0 0
  %3142 = vmatpush1.bf16.msra.mxu0 0
  %3143 = vmatprep.subr.bf16.mxu0 0
  %3144 = vmatpush1.bf16.msra.mxu0 0
  %3145 = vmatprep.subr.bf16.mxu0 0
  %3146 = vmatpush1.bf16.msra.mxu0 0
  %3147 = vmatprep.subr.bf16.mxu0 0
  %3148 = vmatpush1.bf16.msra.mxu0 0
  %3149 = vmatprep.subr.bf16.mxu0 0
  %3150 = vmatpush1.bf16.msra.mxu0 0
  %3151 = vmatprep.subr.bf16.mxu0 0
  %3152 = vmatpush1.bf16.msra.mxu0 0
  %3153 = vmatprep.subr.bf16.mxu0 0
  %3154 = vmatpush1.bf16.msra.mxu0 0
  %3155 = vmatprep.mubr.bf16.mxu0 0
  %3156 = vmatmul.mubr.bf16.gmra.mrb[0].mxu0 %v3121
  %v3157 = vpop.f32.mrb[0].mxu0
  %v3158 = vadd.f32 %v923, %v3157
  %v3159 = vpop.f32.mrb[0].mxu0
  %v3160 = vpop.f32.mrb[0].mxu0
  %v3161 = vadd.f32 %v926, %v3160
  %v3162 = vpop.f32.mrb[0].mxu0
  %3163 = vdwg.mxu0
  %v3164 = vsel %vm946, %v3158, 0.0
  %3165 = vadd.xlane.f32.xlu0 %v3164
  %v3166 = vpop.xlane.xlu0 %3165
  %vm3167 = vcmask 257024
  %v3168 = vsel %vm3167, %v3161, 0.0
  %3169 = vadd.xlane.f32.xlu0 %v3168
  %v3170 = vpop.xlane.xlu0 %3169
  %v3171 = vmul.f32 %v3166, %v1511
  %v3172 = vmul.f32 %v3170, %v1511
  %v3173 = vsub.f32 %v3158, %v3171
  %v3174 = vsub.f32 %v3161, %v3172
  %v3175 = vmul.f32 %v3173, %v3173
  %v3176 = vmul.f32 %v3174, %v3174
  %v3177 = vsel %vm946, %v3175, 0.0
  %3178 = vadd.xlane.f32.xlu0 %v3177
  %v3179 = vpop.xlane.xlu0 %3178
  %v3180 = vsel %vm3167, %v3176, 0.0
  %3181 = vadd.xlane.f32.xlu0 %v3180
  %v3182 = vpop.xlane.xlu0 %3181
  %v3183 = vmul.f32 %v3179, %v1511
  %v3184 = vmul.f32 %v3182, %v1511
  %v3185 = vadd.f32 %v3183, 1e-05
  %v3186 = vadd.f32 %v3184, 1e-05
  %v3187 = vrsqrt.pop %v3185
  %v3188 = vrsqrt.pop %v3186
  %v3189 = vmul.f32 %v3173, %v3187
  %v3190 = vmul.f32 %v3174, %v3188
  %v3191 = vld [vmem:[%s5 + $0x1f] sm:$0x1]
  %v3192 = vlaneseq
  %v3193 = vshrl.u32 %v3192, 7
  %v3194 = vsub.s32 0, %v3193
  %v3195 = vrot.slane %v3191, %v3194
  %v3196 = vmul.f32 %v3189, %v3195
  %v3197 = vmul.f32 %v3190, %v3195
  %v3198 = vld [vmem:[%s5 + $0x20] sm:$0x1]
  %v3199 = vlaneseq
  %v3200 = vshrl.u32 %v3199, 7
  %v3201 = vsub.s32 0, %v3200
  %v3202 = vrot.slane %v3198, %v3201
  %v3203 = vadd.f32 %v3196, %v3202
  %v3204 = vadd.f32 %v3197, %v3202
  %v3205 = vpack.c.bf16 %v3204, %v3203
  %v3206 = vld [vmem:[%s4 + $0x60] sm:$0xf]
  %v3207 = vld [vmem:[%s4 + $0x64] sm:$0xf]
  %v3208 = vld [vmem:[%s4 + $0x68] sm:$0xf]
  %v3209 = vld [vmem:[%s4 + $0x6c] sm:$0xf]
  %v3210 = vld [vmem:[%s5 + $0x1d] sm:$0x1]
  %v3211 = vlaneseq
  %v3212 = vshrl.u32 %v3211, 7
  %v3213 = vsub.s32 0, %v3212
  %v3214 = vrot.slane %v3210, %v3213
  %v3219 = vunpack.c.l.b16 %v3206
  %v3220 = vunpack.c.l.b16 %v3207
  %v3221 = vunpack.c.l.b16 %v3208
  %v3222 = vunpack.c.l.b16 %v3209
  %v3223 = vpack.c.b16 %v3220, %v3219
  %v3224 = vpack.c.b16 %v3222, %v3221
  %v3228 = vsel %vm946, %v3205, 0
  %3230 = vmatprep.subr.bf16.mxu0 0
  %3231 = vmatpush1.bf16.msra.mxu0 %v3223
  %3232 = vmatprep.subr.bf16.mxu0 0
  %3233 = vmatpush1.bf16.msra.mxu0 %v3224
  %3234 = vmatprep.subr.bf16.mxu0 0
  %3235 = vmatpush1.bf16.msra.mxu0 0
  %3236 = vmatprep.subr.bf16.mxu0 0
  %3237 = vmatpush1.bf16.msra.mxu0 0
  %3238 = vmatprep.subr.bf16.mxu0 0
  %3239 = vmatpush1.bf16.msra.mxu0 0
  %3240 = vmatprep.subr.bf16.mxu0 0
  %3241 = vmatpush1.bf16.msra.mxu0 0
  %3242 = vmatprep.subr.bf16.mxu0 0
  %3243 = vmatpush1.bf16.msra.mxu0 0
  %3244 = vmatprep.subr.bf16.mxu0 0
  %3245 = vmatpush1.bf16.msra.mxu0 0
  %3246 = vmatprep.subr.bf16.mxu0 0
  %3247 = vmatpush1.bf16.msra.mxu0 0
  %3248 = vmatprep.subr.bf16.mxu0 0
  %3249 = vmatpush1.bf16.msra.mxu0 0
  %3250 = vmatprep.subr.bf16.mxu0 0
  %3251 = vmatpush1.bf16.msra.mxu0 0
  %3252 = vmatprep.subr.bf16.mxu0 0
  %3253 = vmatpush1.bf16.msra.mxu0 0
  %3254 = vmatprep.subr.bf16.mxu0 0
  %3255 = vmatpush1.bf16.msra.mxu0 0
  %3256 = vmatprep.subr.bf16.mxu0 0
  %3257 = vmatpush1.bf16.msra.mxu0 0
  %3258 = vmatprep.subr.bf16.mxu0 0
  %3259 = vmatpush1.bf16.msra.mxu0 0
  %3260 = vmatprep.subr.bf16.mxu0 0
  %3261 = vmatpush1.bf16.msra.mxu0 0
  %3262 = vmatprep.mubr.bf16.mxu0 0
  %3263 = vmatmul.mubr.bf16.gmra.mrb[0].mxu0 %v3228
  %v3264 = vpop.f32.mrb[0].mxu0
  %v3265 = vadd.f32 %v3214, %v3264
  %v3266 = vpop.f32.mrb[0].mxu0
  %v3267 = vpop.f32.mrb[0].mxu0
  %v3268 = vadd.f32 %v3214, %v3267
  %v3269 = vpop.f32.mrb[0].mxu0
  %3270 = vdwg.mxu0
  %vm3271 = vcmp.gt.f32.partialorder %v3265, 0.0
  %vm3272 = vcmp.gt.f32.partialorder %v3268, 0.0
  %v3273 = vmul.f32 %v3265, 0.2
  %v3274 = vmul.f32 %v3268, 0.2
  %v3275 = vsel %vm3271, %v3265, %v3273
  %v3276 = vsel %vm3272, %v3268, %v3274
  %v3277 = vpack.c.bf16 %v3276, %v3275
  %v3278 = vld [vmem:[%s5 + $0x1e] sm:$0x1]
  %v3279 = vlaneseq
  %v3280 = vshrl.u32 %v3279, 7
  %v3281 = vsub.s32 0, %v3280
  %v3282 = vrot.slane %v3278, %v3281
  %3283 = vrot.lane.b32.xlu0 %v1656, 64
  %v3284 = vpop.permute.xlu0 %3283
  %3285 = vrot.lane.b32.xlu0 %v1657, 64
  %v3286 = vpop.permute.xlu0 %3285
  %3287 = vrot.lane.b32.xlu0 %v1658, 64
  %v3288 = vpop.permute.xlu0 %3287
  %3289 = vrot.lane.b32.xlu0 %v1659, 64
  %v3290 = vpop.permute.xlu0 %3289
  %3291 = vrot.lane.b32.xlu0 %v1660, 64
  %v3292 = vpop.permute.xlu0 %3291
  %3293 = vrot.lane.b32.xlu0 %v1661, 64
  %v3294 = vpop.permute.xlu0 %3293
  %3295 = vrot.lane.b32.xlu0 %v1662, 64
  %v3296 = vpop.permute.xlu0 %3295
  %3297 = vrot.lane.b32.xlu0 %v1663, 64
  %v3298 = vpop.permute.xlu0 %3297
  %3307 = vmatprep.subr.bf16.mxu0 0
  %3308 = vmatpush1.bf16.msra.mxu0 %v3284
  %3309 = vmatprep.subr.bf16.mxu0 0
  %3310 = vmatpush1.bf16.msra.mxu0 %v3286
  %3311 = vmatprep.subr.bf16.mxu0 0
  %3312 = vmatpush1.bf16.msra.mxu0 %v3288
  %3313 = vmatprep.subr.bf16.mxu0 0
  %3314 = vmatpush1.bf16.msra.mxu0 %v3290
  %3315 = vmatprep.subr.bf16.mxu0 0
  %3316 = vmatpush1.bf16.msra.mxu0 %v3292
  %3317 = vmatprep.subr.bf16.mxu0 0
  %3318 = vmatpush1.bf16.msra.mxu0 %v3294
  %3319 = vmatprep.subr.bf16.mxu0 0
  %3320 = vmatpush1.bf16.msra.mxu0 %v3296
  %3321 = vmatprep.subr.bf16.mxu0 0
  %3322 = vmatpush1.bf16.msra.mxu0 %v3298
  %3323 = vmatprep.subr.bf16.mxu0 0
  %3324 = vmatpush1.bf16.msra.mxu0 0
  %3325 = vmatprep.subr.bf16.mxu0 0
  %3326 = vmatpush1.bf16.msra.mxu0 0
  %3327 = vmatprep.subr.bf16.mxu0 0
  %3328 = vmatpush1.bf16.msra.mxu0 0
  %3329 = vmatprep.subr.bf16.mxu0 0
  %3330 = vmatpush1.bf16.msra.mxu0 0
  %3331 = vmatprep.subr.bf16.mxu0 0
  %3332 = vmatpush1.bf16.msra.mxu0 0
  %3333 = vmatprep.subr.bf16.mxu0 0
  %3334 = vmatpush1.bf16.msra.mxu0 0
  %3335 = vmatprep.subr.bf16.mxu0 0
  %3336 = vmatpush1.bf16.msra.mxu0 0
  %3337 = vmatprep.subr.bf16.mxu0 0
  %3338 = vmatpush1.bf16.msra.mxu0 0
  %3339 = vmatprep.mubr.bf16.mxu0 0
  %3340 = vmatmul.mubr.bf16.gmra.mrb[0].mxu0 %v3277
  %v3341 = vpop.f32.mrb[0].mxu0
  %v3342 = vadd.f32 %v3282, %v3341
  %v3343 = vpop.f32.mrb[0].mxu0
  %v3344 = vpop.f32.mrb[0].mxu0
  %v3345 = vadd.f32 %v3282, %v3344
  %v3346 = vpop.f32.mrb[0].mxu0
  %3347 = vdwg.mxu0
  %v3348 = vadd.f32 %v3203, %v3342
  %v3349 = vadd.f32 %v3204, %v3345
  %v3350 = vsel %vm946, %v3348, 0.0
  %3351 = vadd.xlane.f32.xlu0 %v3350
  %v3352 = vpop.xlane.xlu0 %3351
  %v3353 = vsel %vm3167, %v3349, 0.0
  %3354 = vadd.xlane.f32.xlu0 %v3353
  %v3355 = vpop.xlane.xlu0 %3354
  %v3356 = vmul.f32 %v3352, %v1511
  %v3357 = vmul.f32 %v3355, %v1511
  %v3358 = vsub.f32 %v3348, %v3356
  %v3359 = vsub.f32 %v3349, %v3357
  %v3360 = vmul.f32 %v3358, %v3358
  %v3361 = vmul.f32 %v3359, %v3359
  %v3362 = vsel %vm946, %v3360, 0.0
  %3363 = vadd.xlane.f32.xlu0 %v3362
  %v3364 = vpop.xlane.xlu0 %3363
  %v3365 = vsel %vm3167, %v3361, 0.0
  %3366 = vadd.xlane.f32.xlu0 %v3365
  %v3367 = vpop.xlane.xlu0 %3366
  %v3368 = vmul.f32 %v3364, %v1511
  %v3369 = vmul.f32 %v3367, %v1511
  %v3370 = vadd.f32 %v3368, 1e-05
  %v3371 = vadd.f32 %v3369, 1e-05
  %v3372 = vrsqrt.pop %v3370
  %v3373 = vrsqrt.pop %v3371
  %v3374 = vmul.f32 %v3358, %v3372
  %v3375 = vmul.f32 %v3359, %v3373
  %v3376 = vld [vmem:[%s5 + $0x21] sm:$0x1]
  %v3377 = vlaneseq
  %v3378 = vshrl.u32 %v3377, 7
  %v3379 = vsub.s32 0, %v3378
  %v3380 = vrot.slane %v3376, %v3379
  %v3381 = vmul.f32 %v3374, %v3380
  %v3382 = vmul.f32 %v3375, %v3380
  %v3383 = vld [vmem:[%s5 + $0x22] sm:$0x1]
  %v3384 = vlaneseq
  %v3385 = vshrl.u32 %v3384, 7
  %v3386 = vsub.s32 0, %v3385
  %v3387 = vrot.slane %v3383, %v3386
  %v3388 = vadd.f32 %v3381, %v3387
  %v3389 = vadd.f32 %v3382, %v3387
  %v3390 = vpack.c.bf16 %v3389, %v3388
  %v3391 = vld [vmem:[%s4 + $0x70] sm:$0xf]
  %v3392 = vld [vmem:[%s4 + $0x74] sm:$0xf]
  %v3393 = vld [vmem:[%s4 + $0x78] sm:$0xf]
  %v3394 = vld [vmem:[%s4 + $0x7c] sm:$0xf]
  %v3399 = vunpack.c.l.b16 %v3391
  %v3400 = vunpack.c.l.b16 %v3392
  %v3401 = vunpack.c.l.b16 %v3393
  %v3402 = vunpack.c.l.b16 %v3394
  %v3403 = vpack.c.b16 %v3400, %v3399
  %v3404 = vpack.c.b16 %v3402, %v3401
  %v3408 = vsel %vm946, %v3390, 0
  %3410 = vmatprep.subr.bf16.mxu0 0
  %3411 = vmatpush1.bf16.msra.mxu0 %v3403
  %3412 = vmatprep.subr.bf16.mxu0 0
  %3413 = vmatpush1.bf16.msra.mxu0 %v3404
  %3414 = vmatprep.subr.bf16.mxu0 0
  %3415 = vmatpush1.bf16.msra.mxu0 0
  %3416 = vmatprep.subr.bf16.mxu0 0
  %3417 = vmatpush1.bf16.msra.mxu0 0
  %3418 = vmatprep.subr.bf16.mxu0 0
  %3419 = vmatpush1.bf16.msra.mxu0 0
  %3420 = vmatprep.subr.bf16.mxu0 0
  %3421 = vmatpush1.bf16.msra.mxu0 0
  %3422 = vmatprep.subr.bf16.mxu0 0
  %3423 = vmatpush1.bf16.msra.mxu0 0
  %3424 = vmatprep.subr.bf16.mxu0 0
  %3425 = vmatpush1.bf16.msra.mxu0 0
  %3426 = vmatprep.subr.bf16.mxu0 0
  %3427 = vmatpush1.bf16.msra.mxu0 0
  %3428 = vmatprep.subr.bf16.mxu0 0
  %3429 = vmatpush1.bf16.msra.mxu0 0
  %3430 = vmatprep.subr.bf16.mxu0 0
  %3431 = vmatpush1.bf16.msra.mxu0 0
  %3432 = vmatprep.subr.bf16.mxu0 0
  %3433 = vmatpush1.bf16.msra.mxu0 0
  %3434 = vmatprep.subr.bf16.mxu0 0
  %3435 = vmatpush1.bf16.msra.mxu0 0
  %3436 = vmatprep.subr.bf16.mxu0 0
  %3437 = vmatpush1.bf16.msra.mxu0 0
  %3438 = vmatprep.subr.bf16.mxu0 0
  %3439 = vmatpush1.bf16.msra.mxu0 0
  %3440 = vmatprep.subr.bf16.mxu0 0
  %3441 = vmatpush1.bf16.msra.mxu0 0
  %3442 = vmatprep.mubr.bf16.mxu0 0
  %3443 = vmatmul.mubr.bf16.gmra.mrb[0].mxu0 %v3408
  %v3444 = vpop.f32.mrb[0].mxu0
  %v3445 = vadd.f32 0.0, %v3444
  %v3446 = vpop.f32.mrb[0].mxu0
  %v3447 = vpop.f32.mrb[0].mxu0
  %v3448 = vadd.f32 0.0, %v3447
  %v3449 = vpop.f32.mrb[0].mxu0
  %3450 = vdwg.mxu0
  %v3451 = vpack.c.bf16 %v3448, %v3445
  %3453 = vrot.lane.b32.xlu0 %v3451, 96
  %v3454 = vpop.permute.xlu0 %3453
  %v3456 = vsel %vm599, %v3451, 0
  %v3459 = vsel %vm599, %v3454, 0
  %3461 = vmatprep.subr.bf16.mxu0 0
  %3462 = vmatpush1.bf16.xpose.msra.mxu0 %v3459
  %3463 = vmatprep.subr.bf16.mxu0 0
  %3464 = vmatpush1.bf16.xpose.msra.mxu0 0
  %3465 = vmatprep.subr.bf16.mxu0 0
  %3466 = vmatpush1.bf16.xpose.msra.mxu0 0
  %3467 = vmatprep.subr.bf16.mxu0 0
  %3468 = vmatpush1.bf16.xpose.msra.mxu0 0
  %3469 = vmatprep.subr.bf16.mxu0 0
  %3470 = vmatpush1.bf16.xpose.msra.mxu0 0
  %3471 = vmatprep.subr.bf16.mxu0 0
  %3472 = vmatpush1.bf16.xpose.msra.mxu0 0
  %3473 = vmatprep.subr.bf16.mxu0 0
  %3474 = vmatpush1.bf16.xpose.msra.mxu0 0
  %3475 = vmatprep.subr.bf16.mxu0 0
  %3476 = vmatpush1.bf16.xpose.msra.mxu0 0
  %3477 = vmatprep.subr.bf16.mxu0 0
  %3478 = vmatpush1.bf16.xpose.msra.mxu0 0
  %3479 = vmatprep.subr.bf16.mxu0 0
  %3480 = vmatpush1.bf16.xpose.msra.mxu0 0
  %3481 = vmatprep.subr.bf16.mxu0 0
  %3482 = vmatpush1.bf16.xpose.msra.mxu0 0
  %3483 = vmatprep.subr.bf16.mxu0 0
  %3484 = vmatpush1.bf16.xpose.msra.mxu0 0
  %3485 = vmatprep.subr.bf16.mxu0 0
  %3486 = vmatpush1.bf16.xpose.msra.mxu0 0
  %3487 = vmatprep.subr.bf16.mxu0 0
  %3488 = vmatpush1.bf16.xpose.msra.mxu0 0
  %3489 = vmatprep.subr.bf16.mxu0 0
  %3490 = vmatpush1.bf16.xpose.msra.mxu0 0
  %3491 = vmatprep.subr.bf16.mxu0 0
  %3492 = vmatpush1.bf16.xpose.msra.mxu0 0
  %3493 = vmatprep.mubr.bf16.mxu0 0
  %3494 = vmatmul.mubr.bf16.gmra.mrb[0].mxu0 %v3456
  %v3495 = vpop.f32.mrb[0].mxu0
  %v3496 = vadd.f32 0.0, %v3495
  %v3497 = vpop.f32.mrb[0].mxu0
  %v3498 = vpop.f32.mrb[0].mxu0
  %v3499 = vadd.f32 0.0, %v3498
  %v3500 = vpop.f32.mrb[0].mxu0
  %3501 = vdwg.mxu0
  %v3502 = vsel %vm2616, %v3496, -inf
  %3503 = vmax.xlane.f32.xlu0 %v3502
  %v3504 = vpop.xlane.xlu0 %3503
  %v3505 = vsel %vm2620, %v3499, -inf
  %3506 = vmax.xlane.f32.xlu0 %v3505
  %v3507 = vpop.xlane.xlu0 %3506
  %v3508 = vsub.f32 %v3496, %v3504
  %v3509 = vsub.f32 %v3499, %v3507
  %v3510 = vmul.f32 %v3508, 1.442695
  %v3511 = vpow.pop %v3510
  %v3512 = vmul.f32 %v3509, 1.442695
  %v3513 = vpow.pop %v3512
  %v3514 = vsel %vm2616, %v3511, 0.0
  %3515 = vadd.xlane.f32.xlu0 %v3514
  %v3516 = vpop.xlane.xlu0 %3515
  %v3517 = vsel %vm2620, %v3513, 0.0
  %3518 = vadd.xlane.f32.xlu0 %v3517
  %v3519 = vpop.xlane.xlu0 %3518
  %v3520 = vrcp.pop %v3516
  %v3521 = vrcp.pop %v3519
  %v3522 = vmul.f32 %v3516, %v3520
  %v3523 = vmul.f32 %v3519, %v3521
  %v3524 = vsub.f32 2.0, %v3522
  %v3525 = vsub.f32 2.0, %v3523
  %v3526 = vmul.f32 %v3520, %v3524
  %v3527 = vmul.f32 %v3521, %v3525
  %v3528 = vmul.f32 %v3511, %v3526
  %v3529 = vmul.f32 %v3513, %v3527
  %v3530 = vpack.c.bf16 %v3529, %v3528
  %3531 = vrot.lane.b32.xlu0 %v3451, 64
  %v3532 = vpop.permute.xlu0 %3531
  %v3534 = vsel %vm2616, %v3530, 0
  %v3537 = vsel %vm882, %v3532, 0
  %3539 = vmatprep.subr.bf16.mxu0 0
  %3540 = vmatpush1.bf16.msra.mxu0 %v3537
  %3541 = vmatprep.subr.bf16.mxu0 0
  %3542 = vmatpush1.bf16.msra.mxu0 0
  %3543 = vmatprep.subr.bf16.mxu0 0
  %3544 = vmatpush1.bf16.msra.mxu0 0
  %3545 = vmatprep.subr.bf16.mxu0 0
  %3546 = vmatpush1.bf16.msra.mxu0 0
  %3547 = vmatprep.subr.bf16.mxu0 0
  %3548 = vmatpush1.bf16.msra.mxu0 0
  %3549 = vmatprep.subr.bf16.mxu0 0
  %3550 = vmatpush1.bf16.msra.mxu0 0
  %3551 = vmatprep.subr.bf16.mxu0 0
  %3552 = vmatpush1.bf16.msra.mxu0 0
  %3553 = vmatprep.subr.bf16.mxu0 0
  %3554 = vmatpush1.bf16.msra.mxu0 0
  %3555 = vmatprep.subr.bf16.mxu0 0
  %3556 = vmatpush1.bf16.msra.mxu0 0
  %3557 = vmatprep.subr.bf16.mxu0 0
  %3558 = vmatpush1.bf16.msra.mxu0 0
  %3559 = vmatprep.subr.bf16.mxu0 0
  %3560 = vmatpush1.bf16.msra.mxu0 0
  %3561 = vmatprep.subr.bf16.mxu0 0
  %3562 = vmatpush1.bf16.msra.mxu0 0
  %3563 = vmatprep.subr.bf16.mxu0 0
  %3564 = vmatpush1.bf16.msra.mxu0 0
  %3565 = vmatprep.subr.bf16.mxu0 0
  %3566 = vmatpush1.bf16.msra.mxu0 0
  %3567 = vmatprep.subr.bf16.mxu0 0
  %3568 = vmatpush1.bf16.msra.mxu0 0
  %3569 = vmatprep.subr.bf16.mxu0 0
  %3570 = vmatpush1.bf16.msra.mxu0 0
  %3571 = vmatprep.mubr.bf16.mxu0 0
  %3572 = vmatmul.mubr.bf16.gmra.mrb[0].mxu0 %v3534
  %v3573 = vpop.f32.mrb[0].mxu0
  %v3574 = vadd.f32 0.0, %v3573
  %v3575 = vpop.f32.mrb[0].mxu0
  %v3576 = vpop.f32.mrb[0].mxu0
  %v3577 = vadd.f32 0.0, %v3576
  %v3578 = vpop.f32.mrb[0].mxu0
  %3579 = vdwg.mxu0
  %3580 = vrot.lane.b32.xlu0 %v3451, 120
  %v3581 = vpop.permute.xlu0 %3580
  %3582 = vrot.lane.b32.xlu0 %v3451, 88
  %v3583 = vpop.permute.xlu0 %3582
  %v3585 = vsel %vm599, %v3581, 0
  %v3588 = vsel %vm599, %v3583, 0
  %3590 = vmatprep.subr.bf16.mxu0 0
  %3591 = vmatpush1.bf16.xpose.msra.mxu0 %v3588
  %3592 = vmatprep.subr.bf16.mxu0 0
  %3593 = vmatpush1.bf16.xpose.msra.mxu0 0
  %3594 = vmatprep.subr.bf16.mxu0 0
  %3595 = vmatpush1.bf16.xpose.msra.mxu0 0
  %3596 = vmatprep.subr.bf16.mxu0 0
  %3597 = vmatpush1.bf16.xpose.msra.mxu0 0
  %3598 = vmatprep.subr.bf16.mxu0 0
  %3599 = vmatpush1.bf16.xpose.msra.mxu0 0
  %3600 = vmatprep.subr.bf16.mxu0 0
  %3601 = vmatpush1.bf16.xpose.msra.mxu0 0
  %3602 = vmatprep.subr.bf16.mxu0 0
  %3603 = vmatpush1.bf16.xpose.msra.mxu0 0
  %3604 = vmatprep.subr.bf16.mxu0 0
  %3605 = vmatpush1.bf16.xpose.msra.mxu0 0
  %3606 = vmatprep.subr.bf16.mxu0 0
  %3607 = vmatpush1.bf16.xpose.msra.mxu0 0
  %3608 = vmatprep.subr.bf16.mxu0 0
  %3609 = vmatpush1.bf16.xpose.msra.mxu0 0
  %3610 = vmatprep.subr.bf16.mxu0 0
  %3611 = vmatpush1.bf16.xpose.msra.mxu0 0
  %3612 = vmatprep.subr.bf16.mxu0 0
  %3613 = vmatpush1.bf16.xpose.msra.mxu0 0
  %3614 = vmatprep.subr.bf16.mxu0 0
  %3615 = vmatpush1.bf16.xpose.msra.mxu0 0
  %3616 = vmatprep.subr.bf16.mxu0 0
  %3617 = vmatpush1.bf16.xpose.msra.mxu0 0
  %3618 = vmatprep.subr.bf16.mxu0 0
  %3619 = vmatpush1.bf16.xpose.msra.mxu0 0
  %3620 = vmatprep.subr.bf16.mxu0 0
  %3621 = vmatpush1.bf16.xpose.msra.mxu0 0
  %3622 = vmatprep.mubr.bf16.mxu0 0
  %3623 = vmatmul.mubr.bf16.gmra.mrb[0].mxu0 %v3585
  %v3624 = vpop.f32.mrb[0].mxu0
  %v3625 = vadd.f32 0.0, %v3624
  %v3626 = vpop.f32.mrb[0].mxu0
  %v3627 = vpop.f32.mrb[0].mxu0
  %v3628 = vadd.f32 0.0, %v3627
  %v3629 = vpop.f32.mrb[0].mxu0
  %3630 = vdwg.mxu0
  %v3631 = vsel %vm2616, %v3625, -inf
  %3632 = vmax.xlane.f32.xlu0 %v3631
  %v3633 = vpop.xlane.xlu0 %3632
  %v3634 = vsel %vm2620, %v3628, -inf
  %3635 = vmax.xlane.f32.xlu0 %v3634
  %v3636 = vpop.xlane.xlu0 %3635
  %v3637 = vsub.f32 %v3625, %v3633
  %v3638 = vsub.f32 %v3628, %v3636
  %v3639 = vmul.f32 %v3637, 1.442695
  %v3640 = vpow.pop %v3639
  %v3641 = vmul.f32 %v3638, 1.442695
  %v3642 = vpow.pop %v3641
  %v3643 = vsel %vm2616, %v3640, 0.0
  %3644 = vadd.xlane.f32.xlu0 %v3643
  %v3645 = vpop.xlane.xlu0 %3644
  %v3646 = vsel %vm2620, %v3642, 0.0
  %3647 = vadd.xlane.f32.xlu0 %v3646
  %v3648 = vpop.xlane.xlu0 %3647
  %v3649 = vrcp.pop %v3645
  %v3650 = vrcp.pop %v3648
  %v3651 = vmul.f32 %v3645, %v3649
  %v3652 = vmul.f32 %v3648, %v3650
  %v3653 = vsub.f32 2.0, %v3651
  %v3654 = vsub.f32 2.0, %v3652
  %v3655 = vmul.f32 %v3649, %v3653
  %v3656 = vmul.f32 %v3650, %v3654
  %v3657 = vmul.f32 %v3640, %v3655
  %v3658 = vmul.f32 %v3642, %v3656
  %v3659 = vpack.c.bf16 %v3658, %v3657
  %3660 = vrot.lane.b32.xlu0 %v3451, 56
  %v3661 = vpop.permute.xlu0 %3660
  %v3663 = vsel %vm2616, %v3659, 0
  %v3666 = vsel %vm882, %v3661, 0
  %3668 = vmatprep.subr.bf16.mxu0 0
  %3669 = vmatpush1.bf16.msra.mxu0 %v3666
  %3670 = vmatprep.subr.bf16.mxu0 0
  %3671 = vmatpush1.bf16.msra.mxu0 0
  %3672 = vmatprep.subr.bf16.mxu0 0
  %3673 = vmatpush1.bf16.msra.mxu0 0
  %3674 = vmatprep.subr.bf16.mxu0 0
  %3675 = vmatpush1.bf16.msra.mxu0 0
  %3676 = vmatprep.subr.bf16.mxu0 0
  %3677 = vmatpush1.bf16.msra.mxu0 0
  %3678 = vmatprep.subr.bf16.mxu0 0
  %3679 = vmatpush1.bf16.msra.mxu0 0
  %3680 = vmatprep.subr.bf16.mxu0 0
  %3681 = vmatpush1.bf16.msra.mxu0 0
  %3682 = vmatprep.subr.bf16.mxu0 0
  %3683 = vmatpush1.bf16.msra.mxu0 0
  %3684 = vmatprep.subr.bf16.mxu0 0
  %3685 = vmatpush1.bf16.msra.mxu0 0
  %3686 = vmatprep.subr.bf16.mxu0 0
  %3687 = vmatpush1.bf16.msra.mxu0 0
  %3688 = vmatprep.subr.bf16.mxu0 0
  %3689 = vmatpush1.bf16.msra.mxu0 0
  %3690 = vmatprep.subr.bf16.mxu0 0
  %3691 = vmatpush1.bf16.msra.mxu0 0
  %3692 = vmatprep.subr.bf16.mxu0 0
  %3693 = vmatpush1.bf16.msra.mxu0 0
  %3694 = vmatprep.subr.bf16.mxu0 0
  %3695 = vmatpush1.bf16.msra.mxu0 0
  %3696 = vmatprep.subr.bf16.mxu0 0
  %3697 = vmatpush1.bf16.msra.mxu0 0
  %3698 = vmatprep.subr.bf16.mxu0 0
  %3699 = vmatpush1.bf16.msra.mxu0 0
  %3700 = vmatprep.mubr.bf16.mxu0 0
  %3701 = vmatmul.mubr.bf16.gmra.mrb[0].mxu0 %v3663
  %v3702 = vpop.f32.mrb[0].mxu0
  %v3703 = vadd.f32 0.0, %v3702
  %v3704 = vpop.f32.mrb[0].mxu0
  %v3705 = vpop.f32.mrb[0].mxu0
  %v3706 = vadd.f32 0.0, %v3705
  %v3707 = vpop.f32.mrb[0].mxu0
  %3708 = vdwg.mxu0
  %3709 = vrot.lane.b32.xlu0 %v3451, 112
  %v3710 = vpop.permute.xlu0 %3709
  %3711 = vrot.lane.b32.xlu0 %v3451, 80
  %v3712 = vpop.permute.xlu0 %3711
  %v3714 = vsel %vm599, %v3710, 0
  %v3717 = vsel %vm599, %v3712, 0
  %3719 = vmatprep.subr.bf16.mxu0 0
  %3720 = vmatpush1.bf16.xpose.msra.mxu0 %v3717
  %3721 = vmatprep.subr.bf16.mxu0 0
  %3722 = vmatpush1.bf16.xpose.msra.mxu0 0
  %3723 = vmatprep.subr.bf16.mxu0 0
  %3724 = vmatpush1.bf16.xpose.msra.mxu0 0
  %3725 = vmatprep.subr.bf16.mxu0 0
  %3726 = vmatpush1.bf16.xpose.msra.mxu0 0
  %3727 = vmatprep.subr.bf16.mxu0 0
  %3728 = vmatpush1.bf16.xpose.msra.mxu0 0
  %3729 = vmatprep.subr.bf16.mxu0 0
  %3730 = vmatpush1.bf16.xpose.msra.mxu0 0
  %3731 = vmatprep.subr.bf16.mxu0 0
  %3732 = vmatpush1.bf16.xpose.msra.mxu0 0
  %3733 = vmatprep.subr.bf16.mxu0 0
  %3734 = vmatpush1.bf16.xpose.msra.mxu0 0
  %3735 = vmatprep.subr.bf16.mxu0 0
  %3736 = vmatpush1.bf16.xpose.msra.mxu0 0
  %3737 = vmatprep.subr.bf16.mxu0 0
  %3738 = vmatpush1.bf16.xpose.msra.mxu0 0
  %3739 = vmatprep.subr.bf16.mxu0 0
  %3740 = vmatpush1.bf16.xpose.msra.mxu0 0
  %3741 = vmatprep.subr.bf16.mxu0 0
  %3742 = vmatpush1.bf16.xpose.msra.mxu0 0
  %3743 = vmatprep.subr.bf16.mxu0 0
  %3744 = vmatpush1.bf16.xpose.msra.mxu0 0
  %3745 = vmatprep.subr.bf16.mxu0 0
  %3746 = vmatpush1.bf16.xpose.msra.mxu0 0
  %3747 = vmatprep.subr.bf16.mxu0 0
  %3748 = vmatpush1.bf16.xpose.msra.mxu0 0
  %3749 = vmatprep.subr.bf16.mxu0 0
  %3750 = vmatpush1.bf16.xpose.msra.mxu0 0
  %3751 = vmatprep.mubr.bf16.mxu0 0
  %3752 = vmatmul.mubr.bf16.gmra.mrb[0].mxu0 %v3714
  %v3753 = vpop.f32.mrb[0].mxu0
  %v3754 = vadd.f32 0.0, %v3753
  %v3755 = vpop.f32.mrb[0].mxu0
  %v3756 = vpop.f32.mrb[0].mxu0
  %v3757 = vadd.f32 0.0, %v3756
  %v3758 = vpop.f32.mrb[0].mxu0
  %3759 = vdwg.mxu0
  %v3760 = vsel %vm2616, %v3754, -inf
  %3761 = vmax.xlane.f32.xlu0 %v3760
  %v3762 = vpop.xlane.xlu0 %3761
  %v3763 = vsel %vm2620, %v3757, -inf
  %3764 = vmax.xlane.f32.xlu0 %v3763
  %v3765 = vpop.xlane.xlu0 %3764
  %v3766 = vsub.f32 %v3754, %v3762
  %v3767 = vsub.f32 %v3757, %v3765
  %v3768 = vmul.f32 %v3766, 1.442695
  %v3769 = vpow.pop %v3768
  %v3770 = vmul.f32 %v3767, 1.442695
  %v3771 = vpow.pop %v3770
  %v3772 = vsel %vm2616, %v3769, 0.0
  %3773 = vadd.xlane.f32.xlu0 %v3772
  %v3774 = vpop.xlane.xlu0 %3773
  %v3775 = vsel %vm2620, %v3771, 0.0
  %3776 = vadd.xlane.f32.xlu0 %v3775
  %v3777 = vpop.xlane.xlu0 %3776
  %v3778 = vrcp.pop %v3774
  %v3779 = vrcp.pop %v3777
  %v3780 = vmul.f32 %v3774, %v3778
  %v3781 = vmul.f32 %v3777, %v3779
  %v3782 = vsub.f32 2.0, %v3780
  %v3783 = vsub.f32 2.0, %v3781
  %v3784 = vmul.f32 %v3778, %v3782
  %v3785 = vmul.f32 %v3779, %v3783
  %v3786 = vmul.f32 %v3769, %v3784
  %v3787 = vmul.f32 %v3771, %v3785
  %v3788 = vpack.c.bf16 %v3787, %v3786
  %3789 = vrot.lane.b32.xlu0 %v3451, 48
  %v3790 = vpop.permute.xlu0 %3789
  %v3792 = vsel %vm2616, %v3788, 0
  %v3795 = vsel %vm882, %v3790, 0
  %3797 = vmatprep.subr.bf16.mxu0 0
  %3798 = vmatpush1.bf16.msra.mxu0 %v3795
  %3799 = vmatprep.subr.bf16.mxu0 0
  %3800 = vmatpush1.bf16.msra.mxu0 0
  %3801 = vmatprep.subr.bf16.mxu0 0
  %3802 = vmatpush1.bf16.msra.mxu0 0
  %3803 = vmatprep.subr.bf16.mxu0 0
  %3804 = vmatpush1.bf16.msra.mxu0 0
  %3805 = vmatprep.subr.bf16.mxu0 0
  %3806 = vmatpush1.bf16.msra.mxu0 0
  %3807 = vmatprep.subr.bf16.mxu0 0
  %3808 = vmatpush1.bf16.msra.mxu0 0
  %3809 = vmatprep.subr.bf16.mxu0 0
  %3810 = vmatpush1.bf16.msra.mxu0 0
  %3811 = vmatprep.subr.bf16.mxu0 0
  %3812 = vmatpush1.bf16.msra.mxu0 0
  %3813 = vmatprep.subr.bf16.mxu0 0
  %3814 = vmatpush1.bf16.msra.mxu0 0
  %3815 = vmatprep.subr.bf16.mxu0 0
  %3816 = vmatpush1.bf16.msra.mxu0 0
  %3817 = vmatprep.subr.bf16.mxu0 0
  %3818 = vmatpush1.bf16.msra.mxu0 0
  %3819 = vmatprep.subr.bf16.mxu0 0
  %3820 = vmatpush1.bf16.msra.mxu0 0
  %3821 = vmatprep.subr.bf16.mxu0 0
  %3822 = vmatpush1.bf16.msra.mxu0 0
  %3823 = vmatprep.subr.bf16.mxu0 0
  %3824 = vmatpush1.bf16.msra.mxu0 0
  %3825 = vmatprep.subr.bf16.mxu0 0
  %3826 = vmatpush1.bf16.msra.mxu0 0
  %3827 = vmatprep.subr.bf16.mxu0 0
  %3828 = vmatpush1.bf16.msra.mxu0 0
  %3829 = vmatprep.mubr.bf16.mxu0 0
  %3830 = vmatmul.mubr.bf16.gmra.mrb[0].mxu0 %v3792
  %v3831 = vpop.f32.mrb[0].mxu0
  %v3832 = vadd.f32 0.0, %v3831
  %v3833 = vpop.f32.mrb[0].mxu0
  %v3834 = vpop.f32.mrb[0].mxu0
  %v3835 = vadd.f32 0.0, %v3834
  %v3836 = vpop.f32.mrb[0].mxu0
  %3837 = vdwg.mxu0
  %3838 = vrot.lane.b32.xlu0 %v3451, 104
  %v3839 = vpop.permute.xlu0 %3838
  %3840 = vrot.lane.b32.xlu0 %v3451, 72
  %v3841 = vpop.permute.xlu0 %3840
  %v3843 = vsel %vm599, %v3839, 0
  %v3846 = vsel %vm599, %v3841, 0
  %3848 = vmatprep.subr.bf16.mxu0 0
  %3849 = vmatpush1.bf16.xpose.msra.mxu0 %v3846
  %3850 = vmatprep.subr.bf16.mxu0 0
  %3851 = vmatpush1.bf16.xpose.msra.mxu0 0
  %3852 = vmatprep.subr.bf16.mxu0 0
  %3853 = vmatpush1.bf16.xpose.msra.mxu0 0
  %3854 = vmatprep.subr.bf16.mxu0 0
  %3855 = vmatpush1.bf16.xpose.msra.mxu0 0
  %3856 = vmatprep.subr.bf16.mxu0 0
  %3857 = vmatpush1.bf16.xpose.msra.mxu0 0
  %3858 = vmatprep.subr.bf16.mxu0 0
  %3859 = vmatpush1.bf16.xpose.msra.mxu0 0
  %3860 = vmatprep.subr.bf16.mxu0 0
  %3861 = vmatpush1.bf16.xpose.msra.mxu0 0
  %3862 = vmatprep.subr.bf16.mxu0 0
  %3863 = vmatpush1.bf16.xpose.msra.mxu0 0
  %3864 = vmatprep.subr.bf16.mxu0 0
  %3865 = vmatpush1.bf16.xpose.msra.mxu0 0
  %3866 = vmatprep.subr.bf16.mxu0 0
  %3867 = vmatpush1.bf16.xpose.msra.mxu0 0
  %3868 = vmatprep.subr.bf16.mxu0 0
  %3869 = vmatpush1.bf16.xpose.msra.mxu0 0
  %3870 = vmatprep.subr.bf16.mxu0 0
  %3871 = vmatpush1.bf16.xpose.msra.mxu0 0
  %3872 = vmatprep.subr.bf16.mxu0 0
  %3873 = vmatpush1.bf16.xpose.msra.mxu0 0
  %3874 = vmatprep.subr.bf16.mxu0 0
  %3875 = vmatpush1.bf16.xpose.msra.mxu0 0
  %3876 = vmatprep.subr.bf16.mxu0 0
  %3877 = vmatpush1.bf16.xpose.msra.mxu0 0
  %3878 = vmatprep.subr.bf16.mxu0 0
  %3879 = vmatpush1.bf16.xpose.msra.mxu0 0
  %3880 = vmatprep.mubr.bf16.mxu0 0
  %3881 = vmatmul.mubr.bf16.gmra.mrb[0].mxu0 %v3843
  %v3882 = vpop.f32.mrb[0].mxu0
  %v3883 = vadd.f32 0.0, %v3882
  %v3884 = vpop.f32.mrb[0].mxu0
  %v3885 = vpop.f32.mrb[0].mxu0
  %v3886 = vadd.f32 0.0, %v3885
  %v3887 = vpop.f32.mrb[0].mxu0
  %3888 = vdwg.mxu0
  %v3889 = vsel %vm2616, %v3883, -inf
  %3890 = vmax.xlane.f32.xlu0 %v3889
  %v3891 = vpop.xlane.xlu0 %3890
  %v3892 = vsel %vm2620, %v3886, -inf
  %3893 = vmax.xlane.f32.xlu0 %v3892
  %v3894 = vpop.xlane.xlu0 %3893
  %v3895 = vsub.f32 %v3883, %v3891
  %v3896 = vsub.f32 %v3886, %v3894
  %v3897 = vmul.f32 %v3895, 1.442695
  %v3898 = vpow.pop %v3897
  %v3899 = vmul.f32 %v3896, 1.442695
  %v3900 = vpow.pop %v3899
  %v3901 = vsel %vm2616, %v3898, 0.0
  %3902 = vadd.xlane.f32.xlu0 %v3901
  %v3903 = vpop.xlane.xlu0 %3902
  %v3904 = vsel %vm2620, %v3900, 0.0
  %3905 = vadd.xlane.f32.xlu0 %v3904
  %v3906 = vpop.xlane.xlu0 %3905
  %v3907 = vrcp.pop %v3903
  %v3908 = vrcp.pop %v3906
  %v3909 = vmul.f32 %v3903, %v3907
  %v3910 = vmul.f32 %v3906, %v3908
  %v3911 = vsub.f32 2.0, %v3909
  %v3912 = vsub.f32 2.0, %v3910
  %v3913 = vmul.f32 %v3907, %v3911
  %v3914 = vmul.f32 %v3908, %v3912
  %v3915 = vmul.f32 %v3898, %v3913
  %v3916 = vmul.f32 %v3900, %v3914
  %v3917 = vpack.c.bf16 %v3916, %v3915
  %3918 = vrot.lane.b32.xlu0 %v3451, 40
  %v3919 = vpop.permute.xlu0 %3918
  %v3921 = vsel %vm2616, %v3917, 0
  %v3924 = vsel %vm882, %v3919, 0
  %3926 = vmatprep.subr.bf16.mxu0 0
  %3927 = vmatpush1.bf16.msra.mxu0 %v3924
  %3928 = vmatprep.subr.bf16.mxu0 0
  %3929 = vmatpush1.bf16.msra.mxu0 0
  %3930 = vmatprep.subr.bf16.mxu0 0
  %3931 = vmatpush1.bf16.msra.mxu0 0
  %3932 = vmatprep.subr.bf16.mxu0 0
  %3933 = vmatpush1.bf16.msra.mxu0 0
  %3934 = vmatprep.subr.bf16.mxu0 0
  %3935 = vmatpush1.bf16.msra.mxu0 0
  %3936 = vmatprep.subr.bf16.mxu0 0
  %3937 = vmatpush1.bf16.msra.mxu0 0
  %3938 = vmatprep.subr.bf16.mxu0 0
  %3939 = vmatpush1.bf16.msra.mxu0 0
  %3940 = vmatprep.subr.bf16.mxu0 0
  %3941 = vmatpush1.bf16.msra.mxu0 0
  %3942 = vmatprep.subr.bf16.mxu0 0
  %3943 = vmatpush1.bf16.msra.mxu0 0
  %3944 = vmatprep.subr.bf16.mxu0 0
  %3945 = vmatpush1.bf16.msra.mxu0 0
  %3946 = vmatprep.subr.bf16.mxu0 0
  %3947 = vmatpush1.bf16.msra.mxu0 0
  %3948 = vmatprep.subr.bf16.mxu0 0
  %3949 = vmatpush1.bf16.msra.mxu0 0
  %3950 = vmatprep.subr.bf16.mxu0 0
  %3951 = vmatpush1.bf16.msra.mxu0 0
  %3952 = vmatprep.subr.bf16.mxu0 0
  %3953 = vmatpush1.bf16.msra.mxu0 0
  %3954 = vmatprep.subr.bf16.mxu0 0
  %3955 = vmatpush1.bf16.msra.mxu0 0
  %3956 = vmatprep.subr.bf16.mxu0 0
  %3957 = vmatpush1.bf16.msra.mxu0 0
  %3958 = vmatprep.mubr.bf16.mxu0 0
  %3959 = vmatmul.mubr.bf16.gmra.mrb[0].mxu0 %v3921
  %v3960 = vpop.f32.mrb[0].mxu0
  %v3961 = vadd.f32 0.0, %v3960
  %v3962 = vpop.f32.mrb[0].mxu0
  %v3963 = vpop.f32.mrb[0].mxu0
  %v3964 = vadd.f32 0.0, %v3963
  %v3965 = vpop.f32.mrb[0].mxu0
  %3966 = vdwg.mxu0
  %3969 = vrot.lane.b32.xlu0 %v3703, 8
  %v3970 = vpop.permute.xlu0 %3969
  %3971 = vrot.lane.b32.xlu0 %v3706, 8
  %v3972 = vpop.permute.xlu0 %3971
  %3977 = vrot.lane.b32.xlu0 %v3832, 16
  %v3978 = vpop.permute.xlu0 %3977
  %3979 = vrot.lane.b32.xlu0 %v3835, 16
  %v3980 = vpop.permute.xlu0 %3979
  %3985 = vrot.lane.b32.xlu0 %v3961, 24
  %v3986 = vpop.permute.xlu0 %3985
  %3987 = vrot.lane.b32.xlu0 %v3964, 24
  %v3988 = vpop.permute.xlu0 %3987
  %v3991 = vsel %vm599, %v3574, %v3970
  %v3992 = vsel %vm599, %v3577, %v3972
  %v3993 = vsel %vm89, %v3991, %v3978
  %v3994 = vsel %vm89, %v3992, %v3980
  %v3995 = vsel %vm1456, %v3993, %v3986
  %v3996 = vsel %vm1456, %v3994, %v3988
  %v3997 = vpack.c.bf16 %v3996, %v3995
  %3998 = vrot.lane.b32.xlu0 %v3403, 32
  %v3999 = vpop.permute.xlu0 %3998
  %4000 = vrot.lane.b32.xlu0 %v3404, 32
  %v4001 = vpop.permute.xlu0 %4000
  %v4005 = vsel %vm946, %v3997, 0
  %4007 = vmatprep.subr.bf16.mxu0 0
  %4008 = vmatpush1.bf16.msra.mxu0 %v3999
  %4009 = vmatprep.subr.bf16.mxu0 0
  %4010 = vmatpush1.bf16.msra.mxu0 %v4001
  %4011 = vmatprep.subr.bf16.mxu0 0
  %4012 = vmatpush1.bf16.msra.mxu0 0
  %4013 = vmatprep.subr.bf16.mxu0 0
  %4014 = vmatpush1.bf16.msra.mxu0 0
  %4015 = vmatprep.subr.bf16.mxu0 0
  %4016 = vmatpush1.bf16.msra.mxu0 0
  %4017 = vmatprep.subr.bf16.mxu0 0
  %4018 = vmatpush1.bf16.msra.mxu0 0
  %4019 = vmatprep.subr.bf16.mxu0 0
  %4020 = vmatpush1.bf16.msra.mxu0 0
  %4021 = vmatprep.subr.bf16.mxu0 0
  %4022 = vmatpush1.bf16.msra.mxu0 0
  %4023 = vmatprep.subr.bf16.mxu0 0
  %4024 = vmatpush1.bf16.msra.mxu0 0
  %4025 = vmatprep.subr.bf16.mxu0 0
  %4026 = vmatpush1.bf16.msra.mxu0 0
  %4027 = vmatprep.subr.bf16.mxu0 0
  %4028 = vmatpush1.bf16.msra.mxu0 0
  %4029 = vmatprep.subr.bf16.mxu0 0
  %4030 = vmatpush1.bf16.msra.mxu0 0
  %4031 = vmatprep.subr.bf16.mxu0 0
  %4032 = vmatpush1.bf16.msra.mxu0 0
  %4033 = vmatprep.subr.bf16.mxu0 0
  %4034 = vmatpush1.bf16.msra.mxu0 0
  %4035 = vmatprep.subr.bf16.mxu0 0
  %4036 = vmatpush1.bf16.msra.mxu0 0
  %4037 = vmatprep.subr.bf16.mxu0 0
  %4038 = vmatpush1.bf16.msra.mxu0 0
  %4039 = vmatprep.mubr.bf16.mxu0 0
  %4040 = vmatmul.mubr.bf16.gmra.mrb[0].mxu0 %v4005
  %v4041 = vpop.f32.mrb[0].mxu0
  %v4042 = vadd.f32 %v3388, %v4041
  %v4043 = vpop.f32.mrb[0].mxu0
  %v4044 = vpop.f32.mrb[0].mxu0
  %v4045 = vadd.f32 %v3389, %v4044
  %v4046 = vpop.f32.mrb[0].mxu0
  %4047 = vdwg.mxu0
  %v4048 = vsel %vm946, %v4042, 0.0
  %4049 = vadd.xlane.f32.xlu0 %v4048
  %v4050 = vpop.xlane.xlu0 %4049
  %v4051 = vsel %vm3167, %v4045, 0.0
  %4052 = vadd.xlane.f32.xlu0 %v4051
  %v4053 = vpop.xlane.xlu0 %4052
  %v4054 = vmul.f32 %v4050, %v1511
  %v4055 = vmul.f32 %v4053, %v1511
  %v4056 = vsub.f32 %v4042, %v4054
  %v4057 = vsub.f32 %v4045, %v4055
  %v4058 = vmul.f32 %v4056, %v4056
  %v4059 = vmul.f32 %v4057, %v4057
  %v4060 = vsel %vm946, %v4058, 0.0
  %4061 = vadd.xlane.f32.xlu0 %v4060
  %v4062 = vpop.xlane.xlu0 %4061
  %v4063 = vsel %vm3167, %v4059, 0.0
  %4064 = vadd.xlane.f32.xlu0 %v4063
  %v4065 = vpop.xlane.xlu0 %4064
  %v4066 = vmul.f32 %v4062, %v1511
  %v4067 = vmul.f32 %v4065, %v1511
  %v4068 = vadd.f32 %v4066, 1e-05
  %v4069 = vadd.f32 %v4067, 1e-05
  %v4070 = vrsqrt.pop %v4068
  %v4071 = vrsqrt.pop %v4069
  %v4072 = vmul.f32 %v4056, %v4070
  %v4073 = vmul.f32 %v4057, %v4071
  %v4074 = vld [vmem:[%s5 + $0x25] sm:$0x1]
  %v4075 = vlaneseq
  %v4076 = vshrl.u32 %v4075, 7
  %v4077 = vsub.s32 0, %v4076
  %v4078 = vrot.slane %v4074, %v4077
  %v4079 = vmul.f32 %v4072, %v4078
  %v4080 = vmul.f32 %v4073, %v4078
  %v4081 = vld [vmem:[%s5 + $0x26] sm:$0x1]
  %v4082 = vlaneseq
  %v4083 = vshrl.u32 %v4082, 7
  %v4084 = vsub.s32 0, %v4083
  %v4085 = vrot.slane %v4081, %v4084
  %v4086 = vadd.f32 %v4079, %v4085
  %v4087 = vadd.f32 %v4080, %v4085
  %v4088 = vpack.c.bf16 %v4087, %v4086
  %v4089 = vld [vmem:[%s4 + $0x80] sm:$0xf]
  %v4090 = vld [vmem:[%s4 + $0x84] sm:$0xf]
  %v4091 = vld [vmem:[%s4 + $0x88] sm:$0xf]
  %v4092 = vld [vmem:[%s4 + $0x8c] sm:$0xf]
  %v4093 = vld [vmem:[%s5 + $0x23] sm:$0x1]
  %v4094 = vlaneseq
  %v4095 = vshrl.u32 %v4094, 7
  %v4096 = vsub.s32 0, %v4095
  %v4097 = vrot.slane %v4093, %v4096
  %v4102 = vunpack.c.l.b16 %v4089
  %v4103 = vunpack.c.l.b16 %v4090
  %v4104 = vunpack.c.l.b16 %v4091
  %v4105 = vunpack.c.l.b16 %v4092
  %v4106 = vpack.c.b16 %v4103, %v4102
  %v4107 = vpack.c.b16 %v4105, %v4104
  %v4111 = vsel %vm946, %v4088, 0
  %4113 = vmatprep.subr.bf16.mxu0 0
  %4114 = vmatpush1.bf16.msra.mxu0 %v4106
  %4115 = vmatprep.subr.bf16.mxu0 0
  %4116 = vmatpush1.bf16.msra.mxu0 %v4107
  %4117 = vmatprep.subr.bf16.mxu0 0
  %4118 = vmatpush1.bf16.msra.mxu0 0
  %4119 = vmatprep.subr.bf16.mxu0 0
  %4120 = vmatpush1.bf16.msra.mxu0 0
  %4121 = vmatprep.subr.bf16.mxu0 0
  %4122 = vmatpush1.bf16.msra.mxu0 0
  %4123 = vmatprep.subr.bf16.mxu0 0
  %4124 = vmatpush1.bf16.msra.mxu0 0
  %4125 = vmatprep.subr.bf16.mxu0 0
  %4126 = vmatpush1.bf16.msra.mxu0 0
  %4127 = vmatprep.subr.bf16.mxu0 0
  %4128 = vmatpush1.bf16.msra.mxu0 0
  %4129 = vmatprep.subr.bf16.mxu0 0
  %4130 = vmatpush1.bf16.msra.mxu0 0
  %4131 = vmatprep.subr.bf16.mxu0 0
  %4132 = vmatpush1.bf16.msra.mxu0 0
  %4133 = vmatprep.subr.bf16.mxu0 0
  %4134 = vmatpush1.bf16.msra.mxu0 0
  %4135 = vmatprep.subr.bf16.mxu0 0
  %4136 = vmatpush1.bf16.msra.mxu0 0
  %4137 = vmatprep.subr.bf16.mxu0 0
  %4138 = vmatpush1.bf16.msra.mxu0 0
  %4139 = vmatprep.subr.bf16.mxu0 0
  %4140 = vmatpush1.bf16.msra.mxu0 0
  %4141 = vmatprep.subr.bf16.mxu0 0
  %4142 = vmatpush1.bf16.msra.mxu0 0
  %4143 = vmatprep.subr.bf16.mxu0 0
  %4144 = vmatpush1.bf16.msra.mxu0 0
  %4145 = vmatprep.mubr.bf16.mxu0 0
  %4146 = vmatmul.mubr.bf16.gmra.mrb[0].mxu0 %v4111
  %v4147 = vpop.f32.mrb[0].mxu0
  %v4148 = vadd.f32 %v4097, %v4147
  %v4149 = vpop.f32.mrb[0].mxu0
  %v4150 = vpop.f32.mrb[0].mxu0
  %v4151 = vadd.f32 %v4097, %v4150
  %v4152 = vpop.f32.mrb[0].mxu0
  %4153 = vdwg.mxu0
  %vm4154 = vcmp.gt.f32.partialorder %v4148, 0.0
  %vm4155 = vcmp.gt.f32.partialorder %v4151, 0.0
  %v4156 = vmul.f32 %v4148, 0.2
  %v4157 = vmul.f32 %v4151, 0.2
  %v4158 = vsel %vm4154, %v4148, %v4156
  %v4159 = vsel %vm4155, %v4151, %v4157
  %v4160 = vpack.c.bf16 %v4159, %v4158
  %v4161 = vld [vmem:[%s5 + $0x24] sm:$0x1]
  %v4162 = vlaneseq
  %v4163 = vshrl.u32 %v4162, 7
  %v4164 = vsub.s32 0, %v4163
  %v4165 = vrot.slane %v4161, %v4164
  %4166 = vrot.lane.b32.xlu0 %v1656, 32
  %v4167 = vpop.permute.xlu0 %4166
  %4168 = vrot.lane.b32.xlu0 %v1657, 32
  %v4169 = vpop.permute.xlu0 %4168
  %4170 = vrot.lane.b32.xlu0 %v1658, 32
  %v4171 = vpop.permute.xlu0 %4170
  %4172 = vrot.lane.b32.xlu0 %v1659, 32
  %v4173 = vpop.permute.xlu0 %4172
  %4174 = vrot.lane.b32.xlu0 %v1660, 32
  %v4175 = vpop.permute.xlu0 %4174
  %4176 = vrot.lane.b32.xlu0 %v1661, 32
  %v4177 = vpop.permute.xlu0 %4176
  %4178 = vrot.lane.b32.xlu0 %v1662, 32
  %v4179 = vpop.permute.xlu0 %4178
  %4180 = vrot.lane.b32.xlu0 %v1663, 32
  %v4181 = vpop.permute.xlu0 %4180
  %4190 = vmatprep.subr.bf16.mxu0 0
  %4191 = vmatpush1.bf16.msra.mxu0 %v4167
  %4192 = vmatprep.subr.bf16.mxu0 0
  %4193 = vmatpush1.bf16.msra.mxu0 %v4169
  %4194 = vmatprep.subr.bf16.mxu0 0
  %4195 = vmatpush1.bf16.msra.mxu0 %v4171
  %4196 = vmatprep.subr.bf16.mxu0 0
  %4197 = vmatpush1.bf16.msra.mxu0 %v4173
  %4198 = vmatprep.subr.bf16.mxu0 0
  %4199 = vmatpush1.bf16.msra.mxu0 %v4175
  %4200 = vmatprep.subr.bf16.mxu0 0
  %4201 = vmatpush1.bf16.msra.mxu0 %v4177
  %4202 = vmatprep.subr.bf16.mxu0 0
  %4203 = vmatpush1.bf16.msra.mxu0 %v4179
  %4204 = vmatprep.subr.bf16.mxu0 0
  %4205 = vmatpush1.bf16.msra.mxu0 %v4181
  %4206 = vmatprep.subr.bf16.mxu0 0
  %4207 = vmatpush1.bf16.msra.mxu0 0
  %4208 = vmatprep.subr.bf16.mxu0 0
  %4209 = vmatpush1.bf16.msra.mxu0 0
  %4210 = vmatprep.subr.bf16.mxu0 0
  %4211 = vmatpush1.bf16.msra.mxu0 0
  %4212 = vmatprep.subr.bf16.mxu0 0
  %4213 = vmatpush1.bf16.msra.mxu0 0
  %4214 = vmatprep.subr.bf16.mxu0 0
  %4215 = vmatpush1.bf16.msra.mxu0 0
  %4216 = vmatprep.subr.bf16.mxu0 0
  %4217 = vmatpush1.bf16.msra.mxu0 0
  %4218 = vmatprep.subr.bf16.mxu0 0
  %4219 = vmatpush1.bf16.msra.mxu0 0
  %4220 = vmatprep.subr.bf16.mxu0 0
  %4221 = vmatpush1.bf16.msra.mxu0 0
  %4222 = vmatprep.mubr.bf16.mxu0 0
  %4223 = vmatmul.mubr.bf16.gmra.mrb[0].mxu0 %v4160
  %v4224 = vpop.f32.mrb[0].mxu0
  %v4225 = vadd.f32 %v4165, %v4224
  %v4226 = vpop.f32.mrb[0].mxu0
  %v4227 = vpop.f32.mrb[0].mxu0
  %v4228 = vadd.f32 %v4165, %v4227
  %v4229 = vpop.f32.mrb[0].mxu0
  %4230 = vdwg.mxu0
  %v4231 = vadd.f32 %v4086, %v4225
  %v4232 = vadd.f32 %v4087, %v4228
  %v4233 = vsel %vm946, %v4231, 0.0
  %4234 = vadd.xlane.f32.xlu0 %v4233
  %v4235 = vpop.xlane.xlu0 %4234
  %v4236 = vsel %vm3167, %v4232, 0.0
  %4237 = vadd.xlane.f32.xlu0 %v4236
  %v4238 = vpop.xlane.xlu0 %4237
  %v4239 = vmul.f32 %v4235, %v1511
  %v4240 = vmul.f32 %v4238, %v1511
  %v4241 = vsub.f32 %v4231, %v4239
  %v4242 = vsub.f32 %v4232, %v4240
  %v4243 = vmul.f32 %v4241, %v4241
  %v4244 = vmul.f32 %v4242, %v4242
  %v4245 = vsel %vm946, %v4243, 0.0
  %4246 = vadd.xlane.f32.xlu0 %v4245
  %v4247 = vpop.xlane.xlu0 %4246
  %v4248 = vsel %vm3167, %v4244, 0.0
  %4249 = vadd.xlane.f32.xlu0 %v4248
  %v4250 = vpop.xlane.xlu0 %4249
  %v4251 = vmul.f32 %v4247, %v1511
  %v4252 = vmul.f32 %v4250, %v1511
  %v4253 = vadd.f32 %v4251, 1e-05
  %v4254 = vadd.f32 %v4252, 1e-05
  %v4255 = vrsqrt.pop %v4253
  %v4256 = vrsqrt.pop %v4254
  %v4257 = vmul.f32 %v4241, %v4255
  %v4258 = vmul.f32 %v4242, %v4256
  %v4259 = vld [vmem:[%s5 + $0x27] sm:$0x1]
  %v4260 = vlaneseq
  %v4261 = vshrl.u32 %v4260, 7
  %v4262 = vsub.s32 0, %v4261
  %v4263 = vrot.slane %v4259, %v4262
  %v4264 = vmul.f32 %v4257, %v4263
  %v4265 = vmul.f32 %v4258, %v4263
  %v4266 = vld [vmem:[%s5 + $0x28] sm:$0x1]
  %v4267 = vlaneseq
  %v4268 = vshrl.u32 %v4267, 7
  %v4269 = vsub.s32 0, %v4268
  %v4270 = vrot.slane %v4266, %v4269
  %v4271 = vadd.f32 %v4264, %v4270
  %v4272 = vadd.f32 %v4265, %v4270
  %4273 = vst.msk [vmem:[%s7] sm:$0xff] %vm946, %v2503
  %4274 = vst.msk [vmem:[%s7 + $0x8] sm:$0xff] %vm946, %v4271
  %4275 = vst.msk [vmem:[%s7 + $0x10] sm:$0xf] %vm3167, %v4272
  // Predicated region
  $region26: #{forward.1} parent=0 // pred_check
    _
  $region27: #{forward.1} parent=0 // pred_check_branch
    %4277 = sbr.rel (0) target = $region29
  $region28: #{forward.1} parent=0 // pred_region
    _
  $region29: #{forward.1} parent=0 // pred_fallthru
    _
  // Predicated region
  $region30: #{forward.1} parent=0 // pred_check
    _
  $region31: #{forward.1} parent=0 // pred_check_branch
    %4279 = sbr.rel (0) target = $region33
  $region32: #{forward.1} parent=0 // pred_region
    _
  $region33: #{forward.1} parent=0 // pred_fallthru
    _
  // Predicated region
  $region34: #{forward.1} parent=0 // pred_check
    _
  $region35: #{forward.1} parent=0 // pred_check_branch
    %4281 = sbr.rel (0) target = $region37
  $region36: #{forward.1} parent=0 // pred_region
    _
  $region37: #{forward.1} parent=0 // pred_fallthru
    _
  // Predicated region
  $region38: #{forward.1} parent=0 // pred_check
    _
  $region39: #{forward.1} parent=0 // pred_check_branch
    %4283 = sbr.rel (0) target = $region41
  $region40: #{forward.1} parent=0 // pred_region
    _
  $region41: #{forward.1} parent=0 // pred_fallthru
    _

</llo_original>
